<compile_context>
chip_gen: v6e
topology: v6e:2x2x1
jax: 0.10.0
libtpu: 0.0.40
codegen_flags: <defaults>
</compile_context>

<pallas_src>
import functools

import jax
import jax.numpy as jnp
from jax.experimental import pallas as pl
from jax.experimental.pallas import tpu as pltpu


_LANE = 128
_COMPILER_PARAMS = pltpu.CompilerParams(
    dimension_semantics=("parallel",),      # row tiles are independent
    vmem_limit_bytes=32 * 1024 * 1024,      # v7x-safe (64 MiB/TC), plenty for v5e/v6e
)


def _round_up(x, m):
    return (x + m - 1) // m * m


# ----------------------------------------------------------------------------
# Pallas kernels
# ----------------------------------------------------------------------------
def _matmul_stats_kernel(p_ref, w_ref, b_ref, y_ref, stats_ref, *, tm, m_true, n_t):
    """im2col patches @ weight + bias (strided conv1 path); writes bf16 raw
    activations and per-tile per-channel partial (sum, sum-of-squares)."""
    i = pl.program_id(0)
    y = jnp.dot(p_ref[...], w_ref[...], preferred_element_type=jnp.float32)
    y = y + b_ref[...]
    y_ref[...] = y.astype(y_ref.dtype)

    def _write_stats(yv):
        s = jnp.sum(yv, axis=0, keepdims=True)
        ss = jnp.sum(yv * yv, axis=0, keepdims=True)
        stats_ref[...] = jnp.concatenate([s, ss], axis=0)[None]

    @pl.when(i < n_t - 1)            # interior tiles: no padded rows -> no masking work
    def _():
        _write_stats(y)

    @pl.when(i == n_t - 1)           # last tile: mask M-padding rows out of the stats
    def _():
        row = i * tm + jax.lax.broadcasted_iota(jnp.int32, (tm, 1), 0)
        _write_stats(jnp.where(row < m_true, y, 0.0))


def _halo_conv_stats_kernel(za_ref, zb_ref, mask_ref, w_ref, b_ref, y_ref,
                            stats_ref, *, tm, wp):
    """3x3 stride-1 pad-1 conv as implicit GEMM over flattened rows.

    za/zb are consecutive row blocks of the spatially-padded flattened input;
    tap (i, j) is a static row shift of i*wp + j into that window.  Output row
    r is the conv result with r interpreted as the 3x3 window's top-left
    corner; rows whose corner falls in the spatial padding are garbage and are
    excluded from the statistics via mask_ref (and sliced away by the caller).
    """
    cp = y_ref.shape[-1]
    # Upcast to f32 before the unaligned row slices (f32 sublane shifts are the
    # safe/cheap relayout); slices are re-cast to bf16 right before the MXU dot,
    # which exactly round-trips the original bf16 values.
    z = jnp.concatenate([za_ref[...].astype(jnp.float32),
                         zb_ref[...].astype(jnp.float32)], axis=0)    # (2*tm, Ck)
    acc = jnp.zeros((tm, cp), jnp.float32)
    for t in range(9):                                                 # 9 taps, unrolled
        off = (t // 3) * wp + (t % 3)
        zt = z[off:off + tm, :].astype(jnp.bfloat16)
        acc = acc + jnp.dot(zt, w_ref[t], preferred_element_type=jnp.float32)
    y = acc + b_ref[...]
    y_ref[...] = y.astype(y_ref.dtype)

    m = mask_ref[...]                                                  # (tm, 1) validity
    ym = y * m
    s = jnp.sum(ym, axis=0, keepdims=True)
    ss = jnp.sum(ym * y, axis=0, keepdims=True)
    stats_ref[...] = jnp.concatenate([s, ss], axis=0)[None]


def _bn_ds_residual_relu_kernel(y_ref, sc_ref, sh_ref, r_ref, wd_ref, bd_ref, o_ref):
    """BN2 apply + fused 1x1/stride-2 downsample matmul residual + add + ReLU."""
    y = y_ref[...].astype(jnp.float32) * sc_ref[...] + sh_ref[...]
    res = jnp.dot(r_ref[...], wd_ref[...], preferred_element_type=jnp.float32)
    res = res + bd_ref[...]
    o_ref[...] = jnp.maximum(y + res, 0.0).astype(o_ref.dtype)


def _bn_add_relu_kernel(y_ref, sc_ref, sh_ref, r_ref, o_ref):
    """BN2 apply + identity residual add (f32, no matmul) + ReLU."""
    y = y_ref[...].astype(jnp.float32) * sc_ref[...] + sh_ref[...]
    o_ref[...] = jnp.maximum(y + r_ref[...].astype(jnp.float32), 0.0).astype(o_ref.dtype)


# ----------------------------------------------------------------------------
# pallas_call wrappers
# ----------------------------------------------------------------------------
def _conv3x3_im2col_stats(x_bf16, w_oihw, bias, stride, cp, tile_m):
    """Strided 3x3 conv via bf16 JAX im2col + Pallas matmul/stats kernel.

    Only used for the stride-2 conv1 (its output spatial is 4x smaller, so the
    patch matrix is ~2.25x of the *input* bytes, not 9x of the activations)."""
    N, H, W, C = x_bf16.shape
    xp = jnp.pad(x_bf16, ((0, 0), (1, 1), (1, 1), (0, 0)))
    Ho = (H + 2 - 3) // stride + 1
    Wo = (W + 2 - 3) // stride + 1
    cols = []
    for i in range(3):
        for j in range(3):
            cols.append(xp[:, i:i + (Ho - 1) * stride + 1:stride,
                           j:j + (Wo - 1) * stride + 1:stride, :])
    patches = jnp.concatenate(cols, axis=-1).reshape(N * Ho * Wo, 9 * C)

    m, k = patches.shape
    kp = _round_up(k, _LANE)
    tm = min(tile_m, _round_up(m, 8))
    mp = _round_up(m, tm)
    n_t = mp // tm
    p = jnp.pad(patches, ((0, mp - m), (0, kp - k)))                  # stays bf16
    w = jnp.transpose(w_oihw, (2, 3, 1, 0)).reshape(k, -1)            # (kh,kw,cin) K-order
    wq = jnp.pad(w, ((0, kp - k), (0, cp - w.shape[1]))).astype(jnp.bfloat16)
    bq = jnp.pad(bias, (0, cp - bias.shape[0])).astype(jnp.float32)[None, :]

    y, stats = pl.pallas_call(
        functools.partial(_matmul_stats_kernel, tm=tm, m_true=m, n_t=n_t),
        grid=(n_t,),
        in_specs=[
            pl.BlockSpec((tm, kp), lambda i: (i, 0)),
            pl.BlockSpec((kp, cp), lambda i: (0, 0)),
            pl.BlockSpec((1, cp), lambda i: (0, 0)),
        ],
        out_specs=(
            pl.BlockSpec((tm, cp), lambda i: (i, 0)),
            pl.BlockSpec((1, 2, cp), lambda i: (i, 0, 0)),
        ),
        out_shape=(
            jax.ShapeDtypeStruct((mp, cp), jnp.bfloat16),
            jax.ShapeDtypeStruct((n_t, 2, cp), jnp.float32),
        ),
        compiler_params=_COMPILER_PARAMS,
    )(p, wq, bq)
    return y, jnp.sum(stats[:, 0, :], axis=0), jnp.sum(stats[:, 1, :], axis=0), m, Ho, Wo


def _conv3x3_halo_stats(z_bf16, w_oihw, bias, cp, tile_m):
    """3x3 stride-1 pad-1 conv via in-kernel implicit GEMM over flattened rows."""
    N, Hi, Wi, Ck = z_bf16.shape
    Hp, Wp = Hi + 2, Wi + 2
    mrows = N * Hp * Wp

    tm = min(tile_m, _round_up(mrows, 8))
    tm = max(tm, _round_up(2 * Wp + 2, 8))       # all 9 tap shifts fit in (main, halo)
    n_t = pl.cdiv(mrows, tm)
    rows_pad = (n_t + 1) * tm                    # one extra block feeds the halo spec

    zf = jnp.pad(z_bf16, ((0, 0), (1, 1), (1, 1), (0, 0))).reshape(mrows, Ck)
    zf = jnp.pad(zf, ((0, rows_pad - mrows), (0, 0)))

    # Validity mask: rows whose 3x3 top-left corner is a real output position.
    valid2d = (jnp.arange(Hp)[:, None] < Hi) & (jnp.arange(Wp)[None, :] < Wi)
    mask = jnp.broadcast_to(valid2d[None], (N, Hp, Wp)).reshape(mrows, 1)
    mask = jnp.pad(mask.astype(jnp.float32), ((0, rows_pad - mrows), (0, 0)))

    cin, cout = w_oihw.shape[1], w_oihw.shape[0]
    w9 = jnp.transpose(w_oihw, (2, 3, 1, 0))                           # (3,3,cin,cout)
    w9 = jnp.pad(w9, ((0, 0), (0, 0), (0, Ck - cin), (0, cp - cout)))
    w9 = w9.reshape(9, Ck, cp).astype(jnp.bfloat16)
    bq = jnp.pad(bias, (0, cp - cout)).astype(jnp.float32)[None, :]

    y, stats = pl.pallas_call(
        functools.partial(_halo_conv_stats_kernel, tm=tm, wp=Wp),
        grid=(n_t,),
        in_specs=[
            pl.BlockSpec((tm, Ck), lambda i: (i, 0)),          # main row block
            pl.BlockSpec((tm, Ck), lambda i: (i + 1, 0)),      # halo row block
            pl.BlockSpec((tm, 1), lambda i: (i, 0)),           # validity mask
            pl.BlockSpec((9, Ck, cp), lambda i: (0, 0, 0)),    # per-tap weights
            pl.BlockSpec((1, cp), lambda i: (0, 0)),           # bias
        ],
        out_specs=(
            pl.BlockSpec((tm, cp), lambda i: (i, 0)),
            pl.BlockSpec((1, 2, cp), lambda i: (i, 0, 0)),
        ),
        out_shape=(
            jax.ShapeDtypeStruct((n_t * tm, cp), jnp.bfloat16),
            jax.ShapeDtypeStruct((n_t, 2, cp), jnp.float32),
        ),
        compiler_params=_COMPILER_PARAMS,
    )(zf, zf, mask, w9, bq)
    geo = dict(Hp=Hp, Wp=Wp, Ho=Hi, Wo=Wi, tm=tm, n_t=n_t, rows=n_t * tm)
    return y, jnp.sum(stats[:, 0, :], axis=0), jnp.sum(stats[:, 1, :], axis=0), geo


def _bn_scale_shift(s, ss, count, gamma_p, beta_p, eps):
    # TODO(synk): E[x^2]-E[x]^2 in f32 is cancellation-prone when |mean| >> std;
    #             switch to a shifted accumulation if that regime matters.
    mean = s / count
    var = jnp.maximum(ss / count - mean * mean, 0.0)   # biased variance (training BN)
    rstd = jax.lax.rsqrt(var + eps)
    scale = gamma_p * rstd
    shift = beta_p - mean * scale
    return scale, shift


def _final_downsample(y2, scale, shift, r_flat, wd_p, bd_p, tm, cp):
    rows = y2.shape[0]
    crp = r_flat.shape[1]
    return pl.pallas_call(
        _bn_ds_residual_relu_kernel,
        grid=(rows // tm,),
        in_specs=[
            pl.BlockSpec((tm, cp), lambda i: (i, 0)),
            pl.BlockSpec((1, cp), lambda i: (0, 0)),
            pl.BlockSpec((1, cp), lambda i: (0, 0)),
            pl.BlockSpec((tm, crp), lambda i: (i, 0)),
            pl.BlockSpec((crp, cp), lambda i: (0, 0)),
            pl.BlockSpec((1, cp), lambda i: (0, 0)),
        ],
        out_specs=pl.BlockSpec((tm, cp), lambda i: (i, 0)),
        out_shape=jax.ShapeDtypeStruct((rows, cp), jnp.bfloat16),
        compiler_params=_COMPILER_PARAMS,
    )(y2, scale[None, :], shift[None, :], r_flat, wd_p, bd_p)


def _final_identity(y2, scale, shift, r_flat, tm, cp):
    rows = y2.shape[0]
    return pl.pallas_call(
        _bn_add_relu_kernel,
        grid=(rows // tm,),
        in_specs=[
            pl.BlockSpec((tm, cp), lambda i: (i, 0)),
            pl.BlockSpec((1, cp), lambda i: (0, 0)),
            pl.BlockSpec((1, cp), lambda i: (0, 0)),
            pl.BlockSpec((tm, cp), lambda i: (i, 0)),
        ],
        out_specs=pl.BlockSpec((tm, cp), lambda i: (i, 0)),
        out_shape=jax.ShapeDtypeStruct((rows, cp), jnp.bfloat16),
        compiler_params=_COMPILER_PARAMS,
    )(y2, scale[None, :], shift[None, :], r_flat)


# ----------------------------------------------------------------------------
# ResBlock forward (Pallas)
# ----------------------------------------------------------------------------
def res_block_forward(x_nchw, params, *, stride, eps=1e-5, tile_m=1024):
    N, Cin, H, W = x_nchw.shape
    Cout = params["conv1_w"].shape[0]
    Cp = _round_up(Cout, _LANE)

    x = jnp.transpose(x_nchw, (0, 2, 3, 1)).astype(jnp.float32)      # NHWC, f32
    x_bf = x.astype(jnp.bfloat16)            # bf16 before any patching / residual slice

    # --- conv1 (+ BN1 batch statistics) ---
    if stride == 1:
        y1, s1, ss1, geo1 = _conv3x3_halo_stats(
            x_bf, params["conv1_w"], params["conv1_b"], Cp, tile_m)
        H1, W1 = geo1["Ho"], geo1["Wo"]
        M1 = N * H1 * W1
        y1_img = (y1[: N * geo1["Hp"] * geo1["Wp"]]
                  .reshape(N, geo1["Hp"], geo1["Wp"], Cp)[:, :H1, :W1, :])
    else:
        y1, s1, ss1, M1, H1, W1 = _conv3x3_im2col_stats(
            x_bf, params["conv1_w"], params["conv1_b"], stride, Cp, tile_m)
        y1_img = y1[:M1].reshape(N, H1, W1, Cp)

    gamma1 = jnp.pad(params["bn1_gamma"].astype(jnp.float32), (0, Cp - Cout))
    beta1 = jnp.pad(params["bn1_beta"].astype(jnp.float32), (0, Cp - Cout))
    scale1, shift1 = _bn_scale_shift(s1, ss1, M1, gamma1, beta1, eps)

    # --- BN1 apply + ReLU: folded by XLA into the relayout that feeds conv2 ---
    z = jnp.maximum(y1_img.astype(jnp.float32) * scale1 + shift1, 0.0)
    z = z.astype(jnp.bfloat16)

    # --- conv2 (implicit GEMM) + BN2 batch statistics ---
    y2, s2, ss2, geo2 = _conv3x3_halo_stats(
        z, params["conv2_w"], params["conv2_b"], Cp, tile_m)
    M2 = N * H1 * W1
    gamma2 = jnp.pad(params["bn2_gamma"].astype(jnp.float32), (0, Cp - Cout))
    beta2 = jnp.pad(params["bn2_beta"].astype(jnp.float32), (0, Cp - Cout))
    scale2, shift2 = _bn_scale_shift(s2, ss2, M2, gamma2, beta2, eps)

    Hp2, Wp2, rows2, tm2 = geo2["Hp"], geo2["Wp"], geo2["rows"], geo2["tm"]
    grid_rows = N * Hp2 * Wp2

    # --- BN2 apply + residual + ReLU (single fused Pallas kernel) ---
    if W1 != W:
        # Downsample residual: 1x1/stride-2 conv fused into the epilogue kernel.
        xd = x_bf[:, ::2, ::2, :]                                    # (N, H1, W1, Cin)
        r = jnp.pad(xd, ((0, 0), (0, Hp2 - H1), (0, Wp2 - W1), (0, 0)))
        r_flat = jnp.pad(r.reshape(grid_rows, Cin), ((0, rows2 - grid_rows), (0, 0)))
        wd = jnp.transpose(params["ds_w"], (2, 3, 1, 0)).reshape(Cin, Cout)
        wd_p = jnp.pad(wd, ((0, 0), (0, Cp - Cout))).astype(jnp.bfloat16)
        bd_p = jnp.pad(params["ds_b"], (0, Cp - Cout)).astype(jnp.float32)[None, :]
        out_flat = _final_downsample(y2, scale2, shift2, r_flat, wd_p, bd_p, tm2, Cp)
    else:
        # Identity-residual fast path: f32 add, no matmul / weight DMA.
        assert Cin == Cout, "identity residual requires in_channels == out_channels"
        r = jnp.pad(x, ((0, 0), (0, Hp2 - H1), (0, Wp2 - W1), (0, Cp - Cin)))
        r_flat = jnp.pad(r.reshape(grid_rows, Cp), ((0, rows2 - grid_rows), (0, 0)))
        out_flat = _final_identity(y2, scale2, shift2, r_flat, tm2, Cp)

    out = out_flat[:grid_rows].reshape(N, Hp2, Wp2, Cp)[:, :H1, :W1, :Cout]
    return jnp.transpose(out, (0, 3, 1, 2)).astype(jnp.float32)       # back to NCHW


# ----------------------------------------------------------------------------
# Pure-JAX reference (f32) for correctness check
# ----------------------------------------------------------------------------
def _ref_conv(x_nhwc, w_oihw, b, stride, pad):
    w_hwio = jnp.transpose(w_oihw, (2, 3, 1, 0))
    y = jax.lax.conv_general_dilated(
        x_nhwc, w_hwio, window_strides=(stride, stride),
        padding=[(pad, pad), (pad, pad)],
        dimension_numbers=("NHWC", "HWIO", "NHWC"),
    )
    return y + b[None, None, None, :]


def _ref_bn(y, gamma, beta, eps=1e-5):
    mean = jnp.mean(y, axis=(0, 1, 2), keepdims=True)
    var = jnp.mean((y - mean) ** 2, axis=(0, 1, 2), keepdims=True)
    return gamma * (y - mean) * jax.lax.rsqrt(var + eps) + beta


def res_block_reference(x_nchw, params, *, stride, eps=1e-5):
    x = jnp.transpose(x_nchw, (0, 2, 3, 1)).astype(jnp.float32)
    y = _ref_conv(x, params["conv1_w"], params["conv1_b"], stride, 1)
    y = jnp.maximum(_ref_bn(y, params["bn1_gamma"], params["bn1_beta"], eps), 0.0)
    y = _ref_conv(y, params["conv2_w"], params["conv2_b"], 1, 1)
    y = _ref_bn(y, params["bn2_gamma"], params["bn2_beta"], eps)
    if x.shape[2] != y.shape[2]:
        r = _ref_conv(x, params["ds_w"], params["ds_b"], 2, 0)
    else:
        r = x
    out = jnp.maximum(y + r, 0.0)
    return jnp.transpose(out, (0, 3, 1, 2))


# ----------------------------------------------------------------------------
# Main
# ----------------------------------------------------------------------------
if __name__ == "__main__":
    key = jax.random.PRNGKey(0)
    N, Cin, H, W = 2, 4, 16, 16
    Cout = 8
    stride = 2  # exercises the downsample residual path (spatial size changes)

    ks = jax.random.split(key, 10)
    params = {
        "conv1_w": 0.1 * jax.random.normal(ks[0], (Cout, Cin, 3, 3), jnp.float32),
        "conv1_b": 0.1 * jax.random.normal(ks[1], (Cout,), jnp.float32),
        "bn1_gamma": 1.0 + 0.1 * jax.random.normal(ks[2], (Cout,), jnp.float32),
        "bn1_beta": 0.1 * jax.random.normal(ks[3], (Cout,), jnp.float32),
        "conv2_w": 0.1 * jax.random.normal(ks[4], (Cout, Cout, 3, 3), jnp.float32),
        "conv2_b": 0.1 * jax.random.normal(ks[5], (Cout,), jnp.float32),
        "bn2_gamma": 1.0 + 0.1 * jax.random.normal(ks[6], (Cout,), jnp.float32),
        "bn2_beta": 0.1 * jax.random.normal(ks[7], (Cout,), jnp.float32),
        "ds_w": 0.1 * jax.random.normal(ks[8], (Cout, Cin, 1, 1), jnp.float32),
        "ds_b": 0.1 * jax.random.normal(ks[9], (Cout,), jnp.float32),
    }

    x = jax.random.normal(jax.random.PRNGKey(1), (N, Cin, H, W), jnp.float32)

    fwd = jax.jit(functools.partial(res_block_forward, stride=stride))
    out = jax.block_until_ready(fwd(x, params))
    ref = jax.block_until_ready(res_block_reference(x, params, stride=stride))

    assert out.shape == (N, Cout, H // stride, W // stride), out.shape
    err = float(jnp.max(jnp.abs(out - ref)))
    # bf16 MXU inputs, bf16 activations/output (f32 accumulation & BN math)
    # => relaxed tolerance vs the all-f32 reference.
    assert err < 6e-2, err
    print("KERNEL_OK")
</pallas_src>

<mosaic_0001>
module attributes {stable_mosaic.version = 11 : i64} {
  func.func @_matmul_stats_kernel(%arg0: i32, %arg1: memref<128x128xbf16, #tpu.memory_space<vmem>>, %arg2: memref<128x128xbf16, #tpu.memory_space<vmem>>, %arg3: memref<1x128xf32, #tpu.memory_space<vmem>>, %arg4: memref<128x128xbf16, #tpu.memory_space<vmem>>, %arg5: memref<1x2x128xf32, #tpu.memory_space<vmem>>) attributes {dimension_semantics = [#tpu.dimension_semantics<parallel>], iteration_bounds = array<i64: 1>, scalar_prefetch = 0 : i64, scratch_operands = 0 : i64, tpu.core_type = #tpu.core_type<tc>, window_params = [{transform_indices = @transform_0, window_bounds = array<i64: 128, 128>}, {pipeline_mode = #tpu.pipeline_mode<synchronous>, transform_indices = @transform_1, window_bounds = array<i64: 128, 128>}, {pipeline_mode = #tpu.pipeline_mode<synchronous>, transform_indices = @transform_2, window_bounds = array<i64: 1, 128>}, {transform_indices = @transform_3, window_bounds = array<i64: 128, 128>}, {transform_indices = @transform_4, window_bounds = array<i64: 1, 2, 128>}]} {
    %c0 = arith.constant 0 : index
    %c0_0 = arith.constant 0 : index
    %0 = vector.load %arg1[%c0, %c0_0] : memref<128x128xbf16, #tpu.memory_space<vmem>>, vector<128x128xbf16>
    %c0_1 = arith.constant 0 : index
    %c0_2 = arith.constant 0 : index
    %1 = vector.load %arg2[%c0_1, %c0_2] : memref<128x128xbf16, #tpu.memory_space<vmem>>, vector<128x128xbf16>
    %cst = arith.constant dense<0.000000e+00> : vector<128x128xf32>
    %2 = tpu.matmul %0, %1, %cst {dimension_numbers = #tpu.dot_dimension_numbers<[1], [0], [0], [1], [0, 0, 1, 1], [], []>} : vector<128x128xbf16>, vector<128x128xbf16>, vector<128x128xf32> -> vector<128x128xf32>
    %c0_3 = arith.constant 0 : index
    %c0_4 = arith.constant 0 : index
    %3 = vector.load %arg3[%c0_3, %c0_4] : memref<1x128xf32, #tpu.memory_space<vmem>>, vector<1x128xf32>
    %4 = vector.broadcast %3 : vector<1x128xf32> to vector<128x128xf32>
    %5 = arith.addf %2, %4 : vector<128x128xf32>
    %6 = arith.truncf %5 : vector<128x128xf32> to vector<128x128xbf16>
    %c0_5 = arith.constant 0 : index
    %c0_6 = arith.constant 0 : index
    %7 = vector.load %arg4[%c0_5, %c0_6] : memref<128x128xbf16, #tpu.memory_space<vmem>>, vector<128x128xbf16>
    tpu.vector_store %arg4[%c0_5, %c0_6], %6 {strides = array<i32>} : memref<128x128xbf16, #tpu.memory_space<vmem>>, vector<128x128xbf16>,
    %c0_i32 = arith.constant 0 : i32
    %8 = arith.cmpi slt, %arg0, %c0_i32 : i32
    %9 = arith.extui %8 : i1 to i32
    %c0_i32_7 = arith.constant 0 : i32
    %10 = arith.cmpi ne, %9, %c0_i32_7 : i32
    scf.if %10 {
      %cst_10 = arith.constant dense<0.000000e+00> : vector<128xf32>
      %14 = vector.multi_reduction <add>, %5, %cst_10 [0] : vector<128x128xf32> to vector<128xf32>
      %15 = vector.shape_cast %14 : vector<128xf32> to vector<1x128xf32>
      %16 = arith.mulf %5, %5 : vector<128x128xf32>
      %cst_11 = arith.constant dense<0.000000e+00> : vector<128xf32>
      %17 = vector.multi_reduction <add>, %16, %cst_11 [0] : vector<128x128xf32> to vector<128xf32>
      %18 = vector.shape_cast %17 : vector<128xf32> to vector<1x128xf32>
      %19 = tpu.concatenate %15, %18 in 0 : vector<1x128xf32>, vector<1x128xf32> -> vector<2x128xf32>
      %20 = vector.shape_cast %19 : vector<2x128xf32> to vector<1x2x128xf32>
      %c0_12 = arith.constant 0 : index
      %c0_13 = arith.constant 0 : index
      %c0_14 = arith.constant 0 : index
      %21 = vector.load %arg5[%c0_12, %c0_13, %c0_14] : memref<1x2x128xf32, #tpu.memory_space<vmem>>, vector<1x2x128xf32>
      tpu.vector_store %arg5[%c0_12, %c0_13, %c0_14], %20 {strides = array<i32>} : memref<1x2x128xf32, #tpu.memory_space<vmem>>, vector<1x2x128xf32>,
    } else {
    }
    %c0_i32_8 = arith.constant 0 : i32
    %11 = arith.cmpi eq, %arg0, %c0_i32_8 : i32
    %12 = arith.extui %11 : i1 to i32
    %c0_i32_9 = arith.constant 0 : i32
    %13 = arith.cmpi ne, %12, %c0_i32_9 : i32
    scf.if %13 {
      %c128_i32 = arith.constant 128 : i32
      %14 = arith.muli %arg0, %c128_i32 : i32
      %15 = tpu.iota {dimensions = array<i32: 0>} : vector<128x1xi32>
      %16 = vector.broadcast %14 : i32 to vector<128x1xi32>
      %17 = arith.addi %16, %15 : vector<128x1xi32>
      %c128_i32_10 = arith.constant 128 : i32
      %18 = vector.broadcast %c128_i32_10 : i32 to vector<128x1xi32>
      %19 = arith.cmpi slt, %17, %18 : vector<128x1xi32>
      %cst_11 = arith.constant 0.000000e+00 : f32
      %20 = vector.shape_cast %19 : vector<128x1xi1> to vector<128x1xi1>
      %21 = vector.broadcast %20 : vector<128x1xi1> to vector<128x128xi1>
      %22 = vector.broadcast %cst_11 : f32 to vector<128x128xf32>
      %23 = arith.select %21, %5, %22 : vector<128x128xi1>, vector<128x128xf32>
      %cst_12 = arith.constant dense<0.000000e+00> : vector<128xf32>
      %24 = vector.multi_reduction <add>, %23, %cst_12 [0] : vector<128x128xf32> to vector<128xf32>
      %25 = vector.shape_cast %24 : vector<128xf32> to vector<1x128xf32>
      %26 = arith.mulf %23, %23 : vector<128x128xf32>
      %cst_13 = arith.constant dense<0.000000e+00> : vector<128xf32>
      %27 = vector.multi_reduction <add>, %26, %cst_13 [0] : vector<128x128xf32> to vector<128xf32>
      %28 = vector.shape_cast %27 : vector<128xf32> to vector<1x128xf32>
      %29 = tpu.concatenate %25, %28 in 0 : vector<1x128xf32>, vector<1x128xf32> -> vector<2x128xf32>
      %30 = vector.shape_cast %29 : vector<2x128xf32> to vector<1x2x128xf32>
      %c0_14 = arith.constant 0 : index
      %c0_15 = arith.constant 0 : index
      %c0_16 = arith.constant 0 : index
      %31 = vector.load %arg5[%c0_14, %c0_15, %c0_16] : memref<1x2x128xf32, #tpu.memory_space<vmem>>, vector<1x2x128xf32>
      tpu.vector_store %arg5[%c0_14, %c0_15, %c0_16], %30 {strides = array<i32>} : memref<1x2x128xf32, #tpu.memory_space<vmem>>, vector<1x2x128xf32>,
    } else {
    }
    return
  }
  func.func @transform_0(%arg0: i32) -> (i32, i32) {
    %c0_i32 = arith.constant 0 : i32
    %c0_i32_0 = arith.constant 0 : i32
    return %arg0, %c0_i32 : i32, i32
  }
  func.func @transform_1(%arg0: i32) -> (i32, i32) {
    %c0_i32 = arith.constant 0 : i32
    %c0_i32_0 = arith.constant 0 : i32
    %c0_i32_1 = arith.constant 0 : i32
    return %c0_i32, %c0_i32_0 : i32, i32
  }
  func.func @transform_2(%arg0: i32) -> (i32, i32) {
    %c0_i32 = arith.constant 0 : i32
    %c0_i32_0 = arith.constant 0 : i32
    %c0_i32_1 = arith.constant 0 : i32
    return %c0_i32, %c0_i32_0 : i32, i32
  }
  func.func @transform_3(%arg0: i32) -> (i32, i32) {
    %c0_i32 = arith.constant 0 : i32
    %c0_i32_0 = arith.constant 0 : i32
    return %arg0, %c0_i32 : i32, i32
  }
  func.func @transform_4(%arg0: i32) -> (i32, i32, i32) {
    %c0_i32 = arith.constant 0 : i32
    %c0_i32_0 = arith.constant 0 : i32
    %c0_i32_1 = arith.constant 0 : i32
    return %arg0, %c0_i32, %c0_i32_0 : i32, i32, i32
  }
}

module attributes {stable_mosaic.version = 11 : i64} {
  func.func @_halo_conv_stats_kernel(%arg0: i32, %arg1: memref<200x128xbf16, #tpu.memory_space<vmem>>, %arg2: memref<200x128xbf16, #tpu.memory_space<vmem>>, %arg3: memref<200x1xf32, #tpu.memory_space<vmem>>, %arg4: memref<9x128x128xbf16, #tpu.memory_space<vmem>>, %arg5: memref<1x128xf32, #tpu.memory_space<vmem>>, %arg6: memref<200x128xbf16, #tpu.memory_space<vmem>>, %arg7: memref<1x2x128xf32, #tpu.memory_space<vmem>>) attributes {dimension_semantics = [#tpu.dimension_semantics<parallel>], iteration_bounds = array<i64: 1>, scalar_prefetch = 0 : i64, scratch_operands = 0 : i64, tpu.core_type = #tpu.core_type<tc>, window_params = [{transform_indices = @transform_0, window_bounds = array<i64: 200, 128>}, {transform_indices = @transform_1, window_bounds = array<i64: 200, 128>}, {transform_indices = @transform_2, window_bounds = array<i64: 200, 1>}, {pipeline_mode = #tpu.pipeline_mode<synchronous>, transform_indices = @transform_3, window_bounds = array<i64: 9, 128, 128>}, {pipeline_mode = #tpu.pipeline_mode<synchronous>, transform_indices = @transform_4, window_bounds = array<i64: 1, 128>}, {transform_indices = @transform_5, window_bounds = array<i64: 200, 128>}, {transform_indices = @transform_6, window_bounds = array<i64: 1, 2, 128>}]} {
    %c0 = arith.constant 0 : index
    %c0_0 = arith.constant 0 : index
    %0 = vector.load %arg1[%c0, %c0_0] : memref<200x128xbf16, #tpu.memory_space<vmem>>, vector<200x128xbf16>
    %1 = arith.extf %0 : vector<200x128xbf16> to vector<200x128xf32>
    %c0_1 = arith.constant 0 : index
    %c0_2 = arith.constant 0 : index
    %2 = vector.load %arg2[%c0_1, %c0_2] : memref<200x128xbf16, #tpu.memory_space<vmem>>, vector<200x128xbf16>
    %3 = arith.extf %2 : vector<200x128xbf16> to vector<200x128xf32>
    %4 = tpu.concatenate %1, %3 in 0 : vector<200x128xf32>, vector<200x128xf32> -> vector<400x128xf32>
    %cst = arith.constant 0.000000e+00 : f32
    %5 = vector.broadcast %cst : f32 to vector<200x128xf32>
    %6 = vector.extract_strided_slice %4 {offsets = [0, 0], sizes = [200, 128], strides = [1, 1]} : vector<400x128xf32> to vector<200x128xf32>
    %7 = arith.truncf %6 : vector<200x128xf32> to vector<200x128xbf16>
    %c0_3 = arith.constant 0 : index
    %c0_4 = arith.constant 0 : index
    %c0_5 = arith.constant 0 : index
    %8 = vector.load %arg4[%c0_3, %c0_4, %c0_5] : memref<9x128x128xbf16, #tpu.memory_space<vmem>>, vector<1x128x128xbf16>
    %9 = vector.shape_cast %8 : vector<1x128x128xbf16> to vector<128x128xbf16>
    %cst_6 = arith.constant dense<0.000000e+00> : vector<200x128xf32>
    %10 = tpu.matmul %7, %9, %cst_6 {dimension_numbers = #tpu.dot_dimension_numbers<[1], [0], [0], [1], [0, 0, 1, 1], [], []>} : vector<200x128xbf16>, vector<128x128xbf16>, vector<200x128xf32> -> vector<200x128xf32>
    %11 = arith.addf %5, %10 : vector<200x128xf32>
    %12 = vector.extract_strided_slice %4 {offsets = [1, 0], sizes = [200, 128], strides = [1, 1]} : vector<400x128xf32> to vector<200x128xf32>
    %13 = arith.truncf %12 : vector<200x128xf32> to vector<200x128xbf16>
    %c1 = arith.constant 1 : index
    %c0_7 = arith.constant 0 : index
    %c0_8 = arith.constant 0 : index
    %14 = vector.load %arg4[%c1, %c0_7, %c0_8] : memref<9x128x128xbf16, #tpu.memory_space<vmem>>, vector<1x128x128xbf16>
    %15 = vector.shape_cast %14 : vector<1x128x128xbf16> to vector<128x128xbf16>
    %cst_9 = arith.constant dense<0.000000e+00> : vector<200x128xf32>
    %16 = tpu.matmul %13, %15, %cst_9 {dimension_numbers = #tpu.dot_dimension_numbers<[1], [0], [0], [1], [0, 0, 1, 1], [], []>} : vector<200x128xbf16>, vector<128x128xbf16>, vector<200x128xf32> -> vector<200x128xf32>
    %17 = arith.addf %11, %16 : vector<200x128xf32>
    %18 = vector.extract_strided_slice %4 {offsets = [2, 0], sizes = [200, 128], strides = [1, 1]} : vector<400x128xf32> to vector<200x128xf32>
    %19 = arith.truncf %18 : vector<200x128xf32> to vector<200x128xbf16>
    %c2 = arith.constant 2 : index
    %c0_10 = arith.constant 0 : index
    %c0_11 = arith.constant 0 : index
    %20 = vector.load %arg4[%c2, %c0_10, %c0_11] : memref<9x128x128xbf16, #tpu.memory_space<vmem>>, vector<1x128x128xbf16>
    %21 = vector.shape_cast %20 : vector<1x128x128xbf16> to vector<128x128xbf16>
    %cst_12 = arith.constant dense<0.000000e+00> : vector<200x128xf32>
    %22 = tpu.matmul %19, %21, %cst_12 {dimension_numbers = #tpu.dot_dimension_numbers<[1], [0], [0], [1], [0, 0, 1, 1], [], []>} : vector<200x128xbf16>, vector<128x128xbf16>, vector<200x128xf32> -> vector<200x128xf32>
    %23 = arith.addf %17, %22 : vector<200x128xf32>
    %24 = vector.extract_strided_slice %4 {offsets = [10, 0], sizes = [200, 128], strides = [1, 1]} : vector<400x128xf32> to vector<200x128xf32>
    %25 = arith.truncf %24 : vector<200x128xf32> to vector<200x128xbf16>
    %c3 = arith.constant 3 : index
    %c0_13 = arith.constant 0 : index
    %c0_14 = arith.constant 0 : index
    %26 = vector.load %arg4[%c3, %c0_13, %c0_14] : memref<9x128x128xbf16, #tpu.memory_space<vmem>>, vector<1x128x128xbf16>
    %27 = vector.shape_cast %26 : vector<1x128x128xbf16> to vector<128x128xbf16>
    %cst_15 = arith.constant dense<0.000000e+00> : vector<200x128xf32>
    %28 = tpu.matmul %25, %27, %cst_15 {dimension_numbers = #tpu.dot_dimension_numbers<[1], [0], [0], [1], [0, 0, 1, 1], [], []>} : vector<200x128xbf16>, vector<128x128xbf16>, vector<200x128xf32> -> vector<200x128xf32>
    %29 = arith.addf %23, %28 : vector<200x128xf32>
    %30 = vector.extract_strided_slice %4 {offsets = [11, 0], sizes = [200, 128], strides = [1, 1]} : vector<400x128xf32> to vector<200x128xf32>
    %31 = arith.truncf %30 : vector<200x128xf32> to vector<200x128xbf16>
    %c4 = arith.constant 4 : index
    %c0_16 = arith.constant 0 : index
    %c0_17 = arith.constant 0 : index
    %32 = vector.load %arg4[%c4, %c0_16, %c0_17] : memref<9x128x128xbf16, #tpu.memory_space<vmem>>, vector<1x128x128xbf16>
    %33 = vector.shape_cast %32 : vector<1x128x128xbf16> to vector<128x128xbf16>
    %cst_18 = arith.constant dense<0.000000e+00> : vector<200x128xf32>
    %34 = tpu.matmul %31, %33, %cst_18 {dimension_numbers = #tpu.dot_dimension_numbers<[1], [0], [0], [1], [0, 0, 1, 1], [], []>} : vector<200x128xbf16>, vector<128x128xbf16>, vector<200x128xf32> -> vector<200x128xf32>
    %35 = arith.addf %29, %34 : vector<200x128xf32>
    %36 = vector.extract_strided_slice %4 {offsets = [12, 0], sizes = [200, 128], strides = [1, 1]} : vector<400x128xf32> to vector<200x128xf32>
    %37 = arith.truncf %36 : vector<200x128xf32> to vector<200x128xbf16>
    %c5 = arith.constant 5 : index
    %c0_19 = arith.constant 0 : index
    %c0_20 = arith.constant 0 : index
    %38 = vector.load %arg4[%c5, %c0_19, %c0_20] : memref<9x128x128xbf16, #tpu.memory_space<vmem>>, vector<1x128x128xbf16>
    %39 = vector.shape_cast %38 : vector<1x128x128xbf16> to vector<128x128xbf16>
    %cst_21 = arith.constant dense<0.000000e+00> : vector<200x128xf32>
    %40 = tpu.matmul %37, %39, %cst_21 {dimension_numbers = #tpu.dot_dimension_numbers<[1], [0], [0], [1], [0, 0, 1, 1], [], []>} : vector<200x128xbf16>, vector<128x128xbf16>, vector<200x128xf32> -> vector<200x128xf32>
    %41 = arith.addf %35, %40 : vector<200x128xf32>
    %42 = vector.extract_strided_slice %4 {offsets = [20, 0], sizes = [200, 128], strides = [1, 1]} : vector<400x128xf32> to vector<200x128xf32>
    %43 = arith.truncf %42 : vector<200x128xf32> to vector<200x128xbf16>
    %c6 = arith.constant 6 : index
    %c0_22 = arith.constant 0 : index
    %c0_23 = arith.constant 0 : index
    %44 = vector.load %arg4[%c6, %c0_22, %c0_23] : memref<9x128x128xbf16, #tpu.memory_space<vmem>>, vector<1x128x128xbf16>
    %45 = vector.shape_cast %44 : vector<1x128x128xbf16> to vector<128x128xbf16>
    %cst_24 = arith.constant dense<0.000000e+00> : vector<200x128xf32>
    %46 = tpu.matmul %43, %45, %cst_24 {dimension_numbers = #tpu.dot_dimension_numbers<[1], [0], [0], [1], [0, 0, 1, 1], [], []>} : vector<200x128xbf16>, vector<128x128xbf16>, vector<200x128xf32> -> vector<200x128xf32>
    %47 = arith.addf %41, %46 : vector<200x128xf32>
    %48 = vector.extract_strided_slice %4 {offsets = [21, 0], sizes = [200, 128], strides = [1, 1]} : vector<400x128xf32> to vector<200x128xf32>
    %49 = arith.truncf %48 : vector<200x128xf32> to vector<200x128xbf16>
    %c7 = arith.constant 7 : index
    %c0_25 = arith.constant 0 : index
    %c0_26 = arith.constant 0 : index
    %50 = vector.load %arg4[%c7, %c0_25, %c0_26] : memref<9x128x128xbf16, #tpu.memory_space<vmem>>, vector<1x128x128xbf16>
    %51 = vector.shape_cast %50 : vector<1x128x128xbf16> to vector<128x128xbf16>
    %cst_27 = arith.constant dense<0.000000e+00> : vector<200x128xf32>
    %52 = tpu.matmul %49, %51, %cst_27 {dimension_numbers = #tpu.dot_dimension_numbers<[1], [0], [0], [1], [0, 0, 1, 1], [], []>} : vector<200x128xbf16>, vector<128x128xbf16>, vector<200x128xf32> -> vector<200x128xf32>
    %53 = arith.addf %47, %52 : vector<200x128xf32>
    %54 = vector.extract_strided_slice %4 {offsets = [22, 0], sizes = [200, 128], strides = [1, 1]} : vector<400x128xf32> to vector<200x128xf32>
    %55 = arith.truncf %54 : vector<200x128xf32> to vector<200x128xbf16>
    %c8 = arith.constant 8 : index
    %c0_28 = arith.constant 0 : index
    %c0_29 = arith.constant 0 : index
    %56 = vector.load %arg4[%c8, %c0_28, %c0_29] : memref<9x128x128xbf16, #tpu.memory_space<vmem>>, vector<1x128x128xbf16>
    %57 = vector.shape_cast %56 : vector<1x128x128xbf16> to vector<128x128xbf16>
    %cst_30 = arith.constant dense<0.000000e+00> : vector<200x128xf32>
    %58 = tpu.matmul %55, %57, %cst_30 {dimension_numbers = #tpu.dot_dimension_numbers<[1], [0], [0], [1], [0, 0, 1, 1], [], []>} : vector<200x128xbf16>, vector<128x128xbf16>, vector<200x128xf32> -> vector<200x128xf32>
    %59 = arith.addf %53, %58 : vector<200x128xf32>
    %c0_31 = arith.constant 0 : index
    %c0_32 = arith.constant 0 : index
    %60 = vector.load %arg5[%c0_31, %c0_32] : memref<1x128xf32, #tpu.memory_space<vmem>>, vector<1x128xf32>
    %61 = vector.broadcast %60 : vector<1x128xf32> to vector<200x128xf32>
    %62 = arith.addf %59, %61 : vector<200x128xf32>
    %63 = arith.truncf %62 : vector<200x128xf32> to vector<200x128xbf16>
    %c0_33 = arith.constant 0 : index
    %c0_34 = arith.constant 0 : index
    %64 = vector.load %arg6[%c0_33, %c0_34] : memref<200x128xbf16, #tpu.memory_space<vmem>>, vector<200x128xbf16>
    tpu.vector_store %arg6[%c0_33, %c0_34], %63 {strides = array<i32>} : memref<200x128xbf16, #tpu.memory_space<vmem>>, vector<200x128xbf16>,
    %c0_35 = arith.constant 0 : index
    %c0_36 = arith.constant 0 : index
    %65 = vector.load %arg3[%c0_35, %c0_36] : memref<200x1xf32, #tpu.memory_space<vmem>>, vector<200x1xf32>
    %66 = vector.broadcast %65 : vector<200x1xf32> to vector<200x128xf32>
    %67 = arith.mulf %62, %66 : vector<200x128xf32>
    %cst_37 = arith.constant dense<0.000000e+00> : vector<128xf32>
    %68 = vector.multi_reduction <add>, %67, %cst_37 [0] : vector<200x128xf32> to vector<128xf32>
    %69 = vector.shape_cast %68 : vector<128xf32> to vector<1x128xf32>
    %70 = arith.mulf %67, %62 : vector<200x128xf32>
    %cst_38 = arith.constant dense<0.000000e+00> : vector<128xf32>
    %71 = vector.multi_reduction <add>, %70, %cst_38 [0] : vector<200x128xf32> to vector<128xf32>
    %72 = vector.shape_cast %71 : vector<128xf32> to vector<1x128xf32>
    %73 = tpu.concatenate %69, %72 in 0 : vector<1x128xf32>, vector<1x128xf32> -> vector<2x128xf32>
    %74 = vector.shape_cast %73 : vector<2x128xf32> to vector<1x2x128xf32>
    %c0_39 = arith.constant 0 : index
    %c0_40 = arith.constant 0 : index
    %c0_41 = arith.constant 0 : index
    %75 = vector.load %arg7[%c0_39, %c0_40, %c0_41] : memref<1x2x128xf32, #tpu.memory_space<vmem>>, vector<1x2x128xf32>
    tpu.vector_store %arg7[%c0_39, %c0_40, %c0_41], %74 {strides = array<i32>} : memref<1x2x128xf32, #tpu.memory_space<vmem>>, vector<1x2x128xf32>,
    return
  }
  func.func @transform_0(%arg0: i32) -> (i32, i32) {
    %c0_i32 = arith.constant 0 : i32
    %c0_i32_0 = arith.constant 0 : i32
    return %arg0, %c0_i32 : i32, i32
  }
  func.func @transform_1(%arg0: i32) -> (i32, i32) {
    %c1_i32 = arith.constant 1 : i32
    %0 = arith.addi %arg0, %c1_i32 : i32
    %c0_i32 = arith.constant 0 : i32
    %c0_i32_0 = arith.constant 0 : i32
    return %0, %c0_i32 : i32, i32
  }
  func.func @transform_2(%arg0: i32) -> (i32, i32) {
    %c0_i32 = arith.constant 0 : i32
    %c0_i32_0 = arith.constant 0 : i32
    return %arg0, %c0_i32 : i32, i32
  }
  func.func @transform_3(%arg0: i32) -> (i32, i32, i32) {
    %c0_i32 = arith.constant 0 : i32
    %c0_i32_0 = arith.constant 0 : i32
    %c0_i32_1 = arith.constant 0 : i32
    %c0_i32_2 = arith.constant 0 : i32
    return %c0_i32, %c0_i32_0, %c0_i32_1 : i32, i32, i32
  }
  func.func @transform_4(%arg0: i32) -> (i32, i32) {
    %c0_i32 = arith.constant 0 : i32
    %c0_i32_0 = arith.constant 0 : i32
    %c0_i32_1 = arith.constant 0 : i32
    return %c0_i32, %c0_i32_0 : i32, i32
  }
  func.func @transform_5(%arg0: i32) -> (i32, i32) {
    %c0_i32 = arith.constant 0 : i32
    %c0_i32_0 = arith.constant 0 : i32
    return %arg0, %c0_i32 : i32, i32
  }
  func.func @transform_6(%arg0: i32) -> (i32, i32, i32) {
    %c0_i32 = arith.constant 0 : i32
    %c0_i32_0 = arith.constant 0 : i32
    %c0_i32_1 = arith.constant 0 : i32
    return %arg0, %c0_i32, %c0_i32_0 : i32, i32, i32
  }
}

module attributes {stable_mosaic.version = 11 : i64} {
  func.func @_bn_ds_residual_relu_kernel(%arg0: i32, %arg1: memref<200x128xbf16, #tpu.memory_space<vmem>>, %arg2: memref<1x128xf32, #tpu.memory_space<vmem>>, %arg3: memref<1x128xf32, #tpu.memory_space<vmem>>, %arg4: memref<200x4xbf16, #tpu.memory_space<vmem>>, %arg5: memref<4x128xbf16, #tpu.memory_space<vmem>>, %arg6: memref<1x128xf32, #tpu.memory_space<vmem>>, %arg7: memref<200x128xbf16, #tpu.memory_space<vmem>>) attributes {dimension_semantics = [#tpu.dimension_semantics<parallel>], iteration_bounds = array<i64: 1>, scalar_prefetch = 0 : i64, scratch_operands = 0 : i64, tpu.core_type = #tpu.core_type<tc>, window_params = [{transform_indices = @transform_0, window_bounds = array<i64: 200, 128>}, {pipeline_mode = #tpu.pipeline_mode<synchronous>, transform_indices = @transform_1, window_bounds = array<i64: 1, 128>}, {pipeline_mode = #tpu.pipeline_mode<synchronous>, transform_indices = @transform_2, window_bounds = array<i64: 1, 128>}, {transform_indices = @transform_3, window_bounds = array<i64: 200, 4>}, {pipeline_mode = #tpu.pipeline_mode<synchronous>, transform_indices = @transform_4, window_bounds = array<i64: 4, 128>}, {pipeline_mode = #tpu.pipeline_mode<synchronous>, transform_indices = @transform_5, window_bounds = array<i64: 1, 128>}, {transform_indices = @transform_6, window_bounds = array<i64: 200, 128>}]} {
    %c0 = arith.constant 0 : index
    %c0_0 = arith.constant 0 : index
    %0 = vector.load %arg1[%c0, %c0_0] : memref<200x128xbf16, #tpu.memory_space<vmem>>, vector<200x128xbf16>
    %1 = arith.extf %0 : vector<200x128xbf16> to vector<200x128xf32>
    %c0_1 = arith.constant 0 : index
    %c0_2 = arith.constant 0 : index
    %2 = vector.load %arg2[%c0_1, %c0_2] : memref<1x128xf32, #tpu.memory_space<vmem>>, vector<1x128xf32>
    %3 = vector.broadcast %2 : vector<1x128xf32> to vector<200x128xf32>
    %4 = arith.mulf %1, %3 : vector<200x128xf32>
    %c0_3 = arith.constant 0 : index
    %c0_4 = arith.constant 0 : index
    %5 = vector.load %arg3[%c0_3, %c0_4] : memref<1x128xf32, #tpu.memory_space<vmem>>, vector<1x128xf32>
    %6 = vector.broadcast %5 : vector<1x128xf32> to vector<200x128xf32>
    %7 = arith.addf %4, %6 : vector<200x128xf32>
    %c0_5 = arith.constant 0 : index
    %c0_6 = arith.constant 0 : index
    %8 = vector.load %arg4[%c0_5, %c0_6] : memref<200x4xbf16, #tpu.memory_space<vmem>>, vector<200x4xbf16>
    %c0_7 = arith.constant 0 : index
    %c0_8 = arith.constant 0 : index
    %9 = vector.load %arg5[%c0_7, %c0_8] : memref<4x128xbf16, #tpu.memory_space<vmem>>, vector<4x128xbf16>
    %cst = arith.constant dense<0.000000e+00> : vector<200x128xf32>
    %10 = tpu.matmul %8, %9, %cst {dimension_numbers = #tpu.dot_dimension_numbers<[1], [0], [0], [1], [0, 0, 1, 1], [], []>} : vector<200x4xbf16>, vector<4x128xbf16>, vector<200x128xf32> -> vector<200x128xf32>
    %c0_9 = arith.constant 0 : index
    %c0_10 = arith.constant 0 : index
    %11 = vector.load %arg6[%c0_9, %c0_10] : memref<1x128xf32, #tpu.memory_space<vmem>>, vector<1x128xf32>
    %12 = vector.broadcast %11 : vector<1x128xf32> to vector<200x128xf32>
    %13 = arith.addf %10, %12 : vector<200x128xf32>
    %14 = arith.addf %7, %13 : vector<200x128xf32>
    %cst_11 = arith.constant 0.000000e+00 : f32
    %15 = vector.broadcast %cst_11 : f32 to vector<200x128xf32>
    %16 = arith.maximumf %14, %15 : vector<200x128xf32>
    %17 = arith.truncf %16 : vector<200x128xf32> to vector<200x128xbf16>
    %c0_12 = arith.constant 0 : index
    %c0_13 = arith.constant 0 : index
    %18 = vector.load %arg7[%c0_12, %c0_13] : memref<200x128xbf16, #tpu.memory_space<vmem>>, vector<200x128xbf16>
    tpu.vector_store %arg7[%c0_12, %c0_13], %17 {strides = array<i32>} : memref<200x128xbf16, #tpu.memory_space<vmem>>, vector<200x128xbf16>,
    return
  }
  func.func @transform_0(%arg0: i32) -> (i32, i32) {
    %c0_i32 = arith.constant 0 : i32
    %c0_i32_0 = arith.constant 0 : i32
    return %arg0, %c0_i32 : i32, i32
  }
  func.func @transform_1(%arg0: i32) -> (i32, i32) {
    %c0_i32 = arith.constant 0 : i32
    %c0_i32_0 = arith.constant 0 : i32
    %c0_i32_1 = arith.constant 0 : i32
    return %c0_i32, %c0_i32_0 : i32, i32
  }
  func.func @transform_2(%arg0: i32) -> (i32, i32) {
    %c0_i32 = arith.constant 0 : i32
    %c0_i32_0 = arith.constant 0 : i32
    %c0_i32_1 = arith.constant 0 : i32
    return %c0_i32, %c0_i32_0 : i32, i32
  }
  func.func @transform_3(%arg0: i32) -> (i32, i32) {
    %c0_i32 = arith.constant 0 : i32
    %c0_i32_0 = arith.constant 0 : i32
    return %arg0, %c0_i32 : i32, i32
  }
  func.func @transform_4(%arg0: i32) -> (i32, i32) {
    %c0_i32 = arith.constant 0 : i32
    %c0_i32_0 = arith.constant 0 : i32
    %c0_i32_1 = arith.constant 0 : i32
    return %c0_i32, %c0_i32_0 : i32, i32
  }
  func.func @transform_5(%arg0: i32) -> (i32, i32) {
    %c0_i32 = arith.constant 0 : i32
    %c0_i32_0 = arith.constant 0 : i32
    %c0_i32_1 = arith.constant 0 : i32
    return %c0_i32, %c0_i32_0 : i32, i32
  }
  func.func @transform_6(%arg0: i32) -> (i32, i32) {
    %c0_i32 = arith.constant 0 : i32
    %c0_i32_0 = arith.constant 0 : i32
    return %arg0, %c0_i32 : i32, i32
  }
}

</mosaic_0001>

<llo_original>
// kernel: res_block_forward.3
$region0: #{res_block_forward.3}
  #allocation0 [shape = 'u32[]', space=smem, size = 0x4, offset = 0x4, fixed_abs, tag = 'smem constant byte address 0x4 - core index']
  #allocation1 [shape = 'u32[144,128]{1,0:T(1,128)}', space=vmem, size = 0x12000, scoped, tag = 'internal scratch']
  %s0 = inlined_call_operand.vmem [shape: bf16[128,128], index: 0, kind: input, shape index: {}]
  %s1 = inlined_call_operand.vmem [shape: bf16[128,128], index: 1, kind: input, shape index: {}]
  %s2 = inlined_call_operand.vmem [shape: f32[1,128], index: 2, kind: input, shape index: {}]
  %s3 = inlined_call_operand.vmem [shape: bf16[128,128], index: 3, kind: output, shape index: {0}]
  %s4 = inlined_call_operand.vmem [shape: f32[1,2,128], index: 4, kind: output, shape index: {1}]
  %5 = xla_tuple %s3, %s4
  %s6 = sld [smem:[#allocation0]]
  $region38: #{res_block_forward.3} parent=0
    _
  %s8 = ssub.s32 1, %s6
  %s9 = scalar_select 0, %s8, %s6
  // Predicated region
  $region2: #{res_block_forward.3} parent=0 // pred_check
    _
  $region3: #{res_block_forward.3} parent=0 // pred_check_branch
    %11 = sbr.rel (0) target = $region5
  $region4: #{res_block_forward.3} parent=0 // pred_region
    _
  $region5: #{res_block_forward.3} parent=0 // pred_fallthru
    _
  // Predicated region
  $region6: #{res_block_forward.3} parent=0 // pred_check
    _
  $region7: #{res_block_forward.3} parent=0 // pred_check_branch
    %13 = sbr.rel (0) target = $region9
  $region8: #{res_block_forward.3} parent=0 // pred_region
    _
  $region9: #{res_block_forward.3} parent=0 // pred_fallthru
    _
  // Predicated region
  $region10: #{res_block_forward.3} parent=0 // pred_check
    _
  $region11: #{res_block_forward.3} parent=0 // pred_check_branch
    %15 = sbr.rel (0) target = $region13
  $region12: #{res_block_forward.3} parent=0 // pred_region
    _
  $region13: #{res_block_forward.3} parent=0 // pred_fallthru
    _
  %v17 = vld [vmem:[%s0] sm:$0xf]
  %v18 = vld [vmem:[%s0 + $0x4] sm:$0xf]
  %v19 = vld [vmem:[%s0 + $0x8] sm:$0xf]
  %v20 = vld [vmem:[%s0 + $0xc] sm:$0xf]
  %v21 = vld [vmem:[%s0 + $0x10] sm:$0xf]
  %v22 = vld [vmem:[%s0 + $0x14] sm:$0xf]
  %v23 = vld [vmem:[%s0 + $0x18] sm:$0xf]
  %v24 = vld [vmem:[%s0 + $0x1c] sm:$0xf]
  %v25 = vld [vmem:[%s0 + $0x20] sm:$0xf]
  %v26 = vld [vmem:[%s0 + $0x24] sm:$0xf]
  %v27 = vld [vmem:[%s0 + $0x28] sm:$0xf]
  %v28 = vld [vmem:[%s0 + $0x2c] sm:$0xf]
  %v29 = vld [vmem:[%s0 + $0x30] sm:$0xf]
  %v30 = vld [vmem:[%s0 + $0x34] sm:$0xf]
  %v31 = vld [vmem:[%s0 + $0x38] sm:$0xf]
  %v32 = vld [vmem:[%s0 + $0x3c] sm:$0xf]
  %v33 = vld [vmem:[%s1] sm:$0xf]
  %v34 = vld [vmem:[%s1 + $0x4] sm:$0xf]
  %v35 = vld [vmem:[%s1 + $0x8] sm:$0xf]
  %v36 = vld [vmem:[%s1 + $0xc] sm:$0xf]
  %v37 = vld [vmem:[%s1 + $0x10] sm:$0xf]
  %v38 = vld [vmem:[%s1 + $0x14] sm:$0xf]
  %v39 = vld [vmem:[%s1 + $0x18] sm:$0xf]
  %v40 = vld [vmem:[%s1 + $0x1c] sm:$0xf]
  %v41 = vld [vmem:[%s1 + $0x20] sm:$0xf]
  %v42 = vld [vmem:[%s1 + $0x24] sm:$0xf]
  %v43 = vld [vmem:[%s1 + $0x28] sm:$0xf]
  %v44 = vld [vmem:[%s1 + $0x2c] sm:$0xf]
  %v45 = vld [vmem:[%s1 + $0x30] sm:$0xf]
  %v46 = vld [vmem:[%s1 + $0x34] sm:$0xf]
  %v47 = vld [vmem:[%s1 + $0x38] sm:$0xf]
  %v48 = vld [vmem:[%s1 + $0x3c] sm:$0xf]
  %v49 = vld [vmem:[%s2] sm:$0x1]
  %v51 = vlaneseq
  %v52 = vshrl.u32 %v51, 7
  %v53 = vsub.s32 0, %v52
  %v54 = vrot.slane %v49, %v53
  %v72 = vunpack.c.l.b16 %v17
  %v73 = vunpack.c.l.b16 %v18
  %v74 = vunpack.c.l.b16 %v19
  %v75 = vunpack.c.l.b16 %v20
  %v76 = vunpack.c.l.b16 %v21
  %v77 = vunpack.c.l.b16 %v22
  %v78 = vunpack.c.l.b16 %v23
  %v79 = vunpack.c.l.b16 %v24
  %v80 = vunpack.c.l.b16 %v25
  %v81 = vunpack.c.l.b16 %v26
  %v82 = vunpack.c.l.b16 %v27
  %v83 = vunpack.c.l.b16 %v28
  %v84 = vunpack.c.l.b16 %v29
  %v85 = vunpack.c.l.b16 %v30
  %v86 = vunpack.c.l.b16 %v31
  %v87 = vunpack.c.l.b16 %v32
  %v88 = vpack.c.b16 %v73, %v72
  %v89 = vpack.c.b16 %v75, %v74
  %v90 = vpack.c.b16 %v77, %v76
  %v91 = vpack.c.b16 %v79, %v78
  %v92 = vpack.c.b16 %v81, %v80
  %v93 = vpack.c.b16 %v83, %v82
  %v94 = vpack.c.b16 %v85, %v84
  %v95 = vpack.c.b16 %v87, %v86
  %v120 = vunpack.c.l.b16 %v33
  %v121 = vunpack.c.l.b16 %v34
  %v122 = vunpack.c.l.b16 %v35
  %v123 = vunpack.c.l.b16 %v36
  %v124 = vunpack.c.l.b16 %v37
  %v125 = vunpack.c.l.b16 %v38
  %v126 = vunpack.c.l.b16 %v39
  %v127 = vunpack.c.l.b16 %v40
  %v128 = vunpack.c.l.b16 %v41
  %v129 = vunpack.c.l.b16 %v42
  %v130 = vunpack.c.l.b16 %v43
  %v131 = vunpack.c.l.b16 %v44
  %v132 = vunpack.c.l.b16 %v45
  %v133 = vunpack.c.l.b16 %v46
  %v134 = vunpack.c.l.b16 %v47
  %v135 = vunpack.c.l.b16 %v48
  %v136 = vpack.c.b16 %v121, %v120
  %v137 = vpack.c.b16 %v123, %v122
  %v138 = vpack.c.b16 %v125, %v124
  %v139 = vpack.c.b16 %v127, %v126
  %v140 = vpack.c.b16 %v129, %v128
  %v141 = vpack.c.b16 %v131, %v130
  %v142 = vpack.c.b16 %v133, %v132
  %v143 = vpack.c.b16 %v135, %v134
  %152 = vmatprep.subr.bf16.mxu0 0
  %153 = vmatpush1.bf16.msra.mxu0 %v143
  %154 = vmatprep.subr.bf16.mxu0 0
  %155 = vmatpush1.bf16.msra.mxu0 %v142
  %156 = vmatprep.subr.bf16.mxu0 0
  %157 = vmatpush1.bf16.msra.mxu0 %v141
  %158 = vmatprep.subr.bf16.mxu0 0
  %159 = vmatpush1.bf16.msra.mxu0 %v140
  %160 = vmatprep.subr.bf16.mxu0 0
  %161 = vmatpush1.bf16.msra.mxu0 %v139
  %162 = vmatprep.subr.bf16.mxu0 0
  %163 = vmatpush1.bf16.msra.mxu0 %v138
  %164 = vmatprep.subr.bf16.mxu0 0
  %165 = vmatpush1.bf16.msra.mxu0 %v137
  %166 = vmatprep.subr.bf16.mxu0 0
  %167 = vmatpush1.bf16.msra.mxu0 %v136
  %168 = vmatprep.subr.bf16.mxu0 0
  %169 = vmatpush2.bf16.msra.mxu0 0
  %170 = vmatprep.subr.bf16.mxu0 0
  %171 = vmatpush2.bf16.msra.mxu0 0
  %172 = vmatprep.subr.bf16.mxu0 0
  %173 = vmatpush2.bf16.msra.mxu0 0
  %174 = vmatprep.subr.bf16.mxu0 0
  %175 = vmatpush2.bf16.msra.mxu0 0
  %176 = vmatprep.subr.bf16.mxu0 0
  %177 = vmatpush2.bf16.msra.mxu0 0
  %178 = vmatprep.subr.bf16.mxu0 0
  %179 = vmatpush2.bf16.msra.mxu0 0
  %180 = vmatprep.subr.bf16.mxu0 0
  %181 = vmatpush2.bf16.msra.mxu0 0
  %182 = vmatprep.subr.bf16.mxu0 0
  %183 = vmatpush2.bf16.msra.mxu0 0
  %184 = vmatprep.mubr.bf16.mxu0 0
  %185 = vmatmul.mubr.bf16.gmra.mxu0 %v88
  %v186 = vpop.f32.mrf.mxu0
  %v187 = vadd.f32 %v54, %v186
  %v188 = vpop.f32.mrf.mxu0
  %v189 = vpop.f32.mrf.mxu0
  %v190 = vadd.f32 %v54, %v189
  %v191 = vpop.f32.mrf.mxu0
  %192 = vmatprep.mubr.bf16.mxu0 0
  %193 = vmatmul.mubr.bf16.gmra.mxu0 %v89
  %v194 = vpop.f32.mrf.mxu0
  %v195 = vadd.f32 %v54, %v194
  %v196 = vpop.f32.mrf.mxu0
  %v197 = vpop.f32.mrf.mxu0
  %v198 = vadd.f32 %v54, %v197
  %v199 = vpop.f32.mrf.mxu0
  %200 = vmatprep.mubr.bf16.mxu0 0
  %201 = vmatmul.mubr.bf16.gmra.mxu0 %v90
  %v202 = vpop.f32.mrf.mxu0
  %v203 = vadd.f32 %v54, %v202
  %v204 = vpop.f32.mrf.mxu0
  %v205 = vpop.f32.mrf.mxu0
  %v206 = vadd.f32 %v54, %v205
  %v207 = vpop.f32.mrf.mxu0
  %208 = vmatprep.mubr.bf16.mxu0 0
  %209 = vmatmul.mubr.bf16.gmra.mxu0 %v91
  %v210 = vpop.f32.mrf.mxu0
  %v211 = vadd.f32 %v54, %v210
  %v212 = vpop.f32.mrf.mxu0
  %v213 = vpop.f32.mrf.mxu0
  %v214 = vadd.f32 %v54, %v213
  %v215 = vpop.f32.mrf.mxu0
  %216 = vmatprep.mubr.bf16.mxu0 0
  %217 = vmatmul.mubr.bf16.gmra.mxu0 %v92
  %v218 = vpop.f32.mrf.mxu0
  %v219 = vadd.f32 %v54, %v218
  %v220 = vpop.f32.mrf.mxu0
  %v221 = vpop.f32.mrf.mxu0
  %v222 = vadd.f32 %v54, %v221
  %v223 = vpop.f32.mrf.mxu0
  %224 = vmatprep.mubr.bf16.mxu0 0
  %225 = vmatmul.mubr.bf16.gmra.mxu0 %v93
  %v226 = vpop.f32.mrf.mxu0
  %v227 = vadd.f32 %v54, %v226
  %v228 = vpop.f32.mrf.mxu0
  %v229 = vpop.f32.mrf.mxu0
  %v230 = vadd.f32 %v54, %v229
  %v231 = vpop.f32.mrf.mxu0
  %232 = vmatprep.mubr.bf16.mxu0 0
  %233 = vmatmul.mubr.bf16.gmra.mxu0 %v94
  %v234 = vpop.f32.mrf.mxu0
  %v235 = vadd.f32 %v54, %v234
  %v236 = vpop.f32.mrf.mxu0
  %v237 = vpop.f32.mrf.mxu0
  %v238 = vadd.f32 %v54, %v237
  %v239 = vpop.f32.mrf.mxu0
  %240 = vmatprep.mubr.bf16.mxu0 0
  %241 = vmatmul.mubr.bf16.gmra.mxu0 %v95
  %v242 = vpop.f32.mrf.mxu0
  %v243 = vadd.f32 %v54, %v242
  %v244 = vpop.f32.mrf.mxu0
  %v245 = vpop.f32.mrf.mxu0
  %v246 = vadd.f32 %v54, %v245
  %v247 = vpop.f32.mrf.mxu0
  %248 = vdwg.mxu0
  %v249 = vpack.c.bf16 %v190, %v187
  %v250 = vpack.c.bf16 %v198, %v195
  %v251 = vpack.c.bf16 %v206, %v203
  %v252 = vpack.c.bf16 %v214, %v211
  %v253 = vpack.c.bf16 %v222, %v219
  %v254 = vpack.c.bf16 %v230, %v227
  %v255 = vpack.c.bf16 %v238, %v235
  %v256 = vpack.c.bf16 %v246, %v243
  %v265 = vunpack.c.l.b16 %v249
  %v266 = vunpack.c.h.b16 %v249
  %v267 = vunpack.c.l.b16 %v250
  %v268 = vunpack.c.h.b16 %v250
  %v269 = vunpack.c.l.b16 %v251
  %v270 = vunpack.c.h.b16 %v251
  %v271 = vunpack.c.l.b16 %v252
  %v272 = vunpack.c.h.b16 %v252
  %v273 = vunpack.c.l.b16 %v253
  %v274 = vunpack.c.h.b16 %v253
  %v275 = vunpack.c.l.b16 %v254
  %v276 = vunpack.c.h.b16 %v254
  %v277 = vunpack.c.l.b16 %v255
  %v278 = vunpack.c.h.b16 %v255
  %v279 = vunpack.c.l.b16 %v256
  %v280 = vunpack.c.h.b16 %v256
  %v281 = vpack.c.b16 %v265, %v265
  %v282 = vpack.c.b16 %v266, %v266
  %v283 = vpack.c.b16 %v267, %v267
  %v284 = vpack.c.b16 %v268, %v268
  %v285 = vpack.c.b16 %v269, %v269
  %v286 = vpack.c.b16 %v270, %v270
  %v287 = vpack.c.b16 %v271, %v271
  %v288 = vpack.c.b16 %v272, %v272
  %v289 = vpack.c.b16 %v273, %v273
  %v290 = vpack.c.b16 %v274, %v274
  %v291 = vpack.c.b16 %v275, %v275
  %v292 = vpack.c.b16 %v276, %v276
  %v293 = vpack.c.b16 %v277, %v277
  %v294 = vpack.c.b16 %v278, %v278
  %v295 = vpack.c.b16 %v279, %v279
  %v296 = vpack.c.b16 %v280, %v280
  %313 = vst [vmem:[%s3] sm:$0xf] %v281
  %314 = vst [vmem:[%s3 + $0x4] sm:$0xf] %v282
  %315 = vst [vmem:[%s3 + $0x8] sm:$0xf] %v283
  %316 = vst [vmem:[%s3 + $0xc] sm:$0xf] %v284
  %317 = vst [vmem:[%s3 + $0x10] sm:$0xf] %v285
  %318 = vst [vmem:[%s3 + $0x14] sm:$0xf] %v286
  %319 = vst [vmem:[%s3 + $0x18] sm:$0xf] %v287
  %320 = vst [vmem:[%s3 + $0x1c] sm:$0xf] %v288
  %321 = vst [vmem:[%s3 + $0x20] sm:$0xf] %v289
  %322 = vst [vmem:[%s3 + $0x24] sm:$0xf] %v290
  %323 = vst [vmem:[%s3 + $0x28] sm:$0xf] %v291
  %324 = vst [vmem:[%s3 + $0x2c] sm:$0xf] %v292
  %325 = vst [vmem:[%s3 + $0x30] sm:$0xf] %v293
  %326 = vst [vmem:[%s3 + $0x34] sm:$0xf] %v294
  %327 = vst [vmem:[%s3 + $0x38] sm:$0xf] %v295
  %328 = vst [vmem:[%s3 + $0x3c] sm:$0xf] %v296
  %p329 = scmp.lt.s32.totalorder 0, 0
  // Predicated region
  $region14: #{res_block_forward.3} parent=0 // pred_check
    %p330 = pneg %p329
  $region15: #{res_block_forward.3} parent=0 // pred_check_branch
    %332 = sbr.rel (%p330) target = $region17
  $region16: #{res_block_forward.3} parent=0 // pred_region
    %v333 = vadd.f32 %v187, %v190
    %v334 = vadd.f32 %v333, %v195
    %v335 = vadd.f32 %v334, %v198
    %v336 = vadd.f32 %v335, %v203
    %v337 = vadd.f32 %v336, %v206
    %v338 = vadd.f32 %v337, %v211
    %v339 = vadd.f32 %v338, %v214
    %v340 = vadd.f32 %v339, %v219
    %v341 = vadd.f32 %v340, %v222
    %v342 = vadd.f32 %v341, %v227
    %v343 = vadd.f32 %v342, %v230
    %v344 = vadd.f32 %v343, %v235
    %v345 = vadd.f32 %v344, %v238
    %v346 = vadd.f32 %v345, %v243
    %v347 = vadd.f32 %v346, %v246
    %v348 = vrot.slane %v347, 4
    %v349 = vadd.f32 %v347, %v348
    %v350 = vrot.slane %v349, 2
    %v351 = vadd.f32 %v349, %v350
    %v352 = vrot.slane %v351, 1
    %v353 = vadd.f32 %v351, %v352
    %v354 = vmul.f32 %v187, %v187
    %v355 = vmul.f32 %v190, %v190
    %v356 = vmul.f32 %v195, %v195
    %v357 = vmul.f32 %v198, %v198
    %v358 = vmul.f32 %v203, %v203
    %v359 = vmul.f32 %v206, %v206
    %v360 = vmul.f32 %v211, %v211
    %v361 = vmul.f32 %v214, %v214
    %v362 = vmul.f32 %v219, %v219
    %v363 = vmul.f32 %v222, %v222
    %v364 = vmul.f32 %v227, %v227
    %v365 = vmul.f32 %v230, %v230
    %v366 = vmul.f32 %v235, %v235
    %v367 = vmul.f32 %v238, %v238
    %v368 = vmul.f32 %v243, %v243
    %v369 = vmul.f32 %v246, %v246
    %v370 = vadd.f32 %v354, %v355
    %v371 = vadd.f32 %v370, %v356
    %v372 = vadd.f32 %v371, %v357
    %v373 = vadd.f32 %v372, %v358
    %v374 = vadd.f32 %v373, %v359
    %v375 = vadd.f32 %v374, %v360
    %v376 = vadd.f32 %v375, %v361
    %v377 = vadd.f32 %v376, %v362
    %v378 = vadd.f32 %v377, %v363
    %v379 = vadd.f32 %v378, %v364
    %v380 = vadd.f32 %v379, %v365
    %v381 = vadd.f32 %v380, %v366
    %v382 = vadd.f32 %v381, %v367
    %v383 = vadd.f32 %v382, %v368
    %v384 = vadd.f32 %v383, %v369
    %v385 = vrot.slane %v384, 4
    %v386 = vadd.f32 %v384, %v385
    %v387 = vrot.slane %v386, 2
    %v388 = vadd.f32 %v386, %v387
    %v389 = vrot.slane %v388, 1
    %v390 = vadd.f32 %v388, %v389
    %vm391 = vcmask 1040384
    %v392 = vsel %vm391, %v353, %v390
    %393 = vst [vmem:[%s4] sm:$0x3] %v392
  $region17: #{res_block_forward.3} parent=0 // pred_fallthru
    _
  %p394 = scmp.eq.s32.totalorder 0, 0
  // Predicated region
  $region18: #{res_block_forward.3} parent=0 // pred_check
    %p395 = pneg %p394
  $region19: #{res_block_forward.3} parent=0 // pred_check_branch
    %397 = sbr.rel (%p395) target = $region21
  $region20: #{res_block_forward.3} parent=0 // pred_region
    %s398 = smul.u32 0, 128
    %v399 = vlaneseq
    %v400 = vshrl.u32 %v399, 7
    %v401 = vadd.s32 %v400, 8
    %v402 = vadd.s32 %v400, 16
    %v403 = vadd.s32 %v400, 24
    %v404 = vadd.s32 %v400, 32
    %v405 = vadd.s32 %v400, 40
    %v406 = vadd.s32 %v400, 48
    %v407 = vadd.s32 %v400, 56
    %v408 = vadd.s32 %v400, 64
    %v409 = vadd.s32 %v400, 72
    %v410 = vadd.s32 %v400, 80
    %v411 = vadd.s32 %v400, 88
    %v412 = vadd.s32 %v400, 96
    %v413 = vadd.s32 %v400, 104
    %v414 = vadd.s32 %v400, 112
    %v415 = vadd.s32 %v400, 120
    %v416 = vstv %s398
    %v417 = vadd.s32 %v416, %v400
    %v418 = vadd.s32 %v416, %v401
    %v419 = vadd.s32 %v416, %v402
    %v420 = vadd.s32 %v416, %v403
    %v421 = vadd.s32 %v416, %v404
    %v422 = vadd.s32 %v416, %v405
    %v423 = vadd.s32 %v416, %v406
    %v424 = vadd.s32 %v416, %v407
    %v425 = vadd.s32 %v416, %v408
    %v426 = vadd.s32 %v416, %v409
    %v427 = vadd.s32 %v416, %v410
    %v428 = vadd.s32 %v416, %v411
    %v429 = vadd.s32 %v416, %v412
    %v430 = vadd.s32 %v416, %v413
    %v431 = vadd.s32 %v416, %v414
    %v432 = vadd.s32 %v416, %v415
    %vm433 = vcmp.lt.s32.totalorder %v417, 128
    %vm434 = vcmp.lt.s32.totalorder %v418, 128
    %vm435 = vcmp.lt.s32.totalorder %v419, 128
    %vm436 = vcmp.lt.s32.totalorder %v420, 128
    %vm437 = vcmp.lt.s32.totalorder %v421, 128
    %vm438 = vcmp.lt.s32.totalorder %v422, 128
    %vm439 = vcmp.lt.s32.totalorder %v423, 128
    %vm440 = vcmp.lt.s32.totalorder %v424, 128
    %vm441 = vcmp.lt.s32.totalorder %v425, 128
    %vm442 = vcmp.lt.s32.totalorder %v426, 128
    %vm443 = vcmp.lt.s32.totalorder %v427, 128
    %vm444 = vcmp.lt.s32.totalorder %v428, 128
    %vm445 = vcmp.lt.s32.totalorder %v429, 128
    %vm446 = vcmp.lt.s32.totalorder %v430, 128
    %vm447 = vcmp.lt.s32.totalorder %v431, 128
    %vm448 = vcmp.lt.s32.totalorder %v432, 128
    %v449 = vsel %vm433, 1, 0
    %v450 = vsel %vm434, 1, 0
    %v451 = vsel %vm435, 1, 0
    %v452 = vsel %vm436, 1, 0
    %v453 = vsel %vm437, 1, 0
    %v454 = vsel %vm438, 1, 0
    %v455 = vsel %vm439, 1, 0
    %v456 = vsel %vm440, 1, 0
    %v457 = vsel %vm441, 1, 0
    %v458 = vsel %vm442, 1, 0
    %v459 = vsel %vm443, 1, 0
    %v460 = vsel %vm444, 1, 0
    %v461 = vsel %vm445, 1, 0
    %v462 = vsel %vm446, 1, 0
    %v463 = vsel %vm447, 1, 0
    %v464 = vsel %vm448, 1, 0
    %vm465 = vcmp.eq.s32.totalorder %v449, 1
    %vm466 = vcmp.eq.s32.totalorder %v450, 1
    %vm467 = vcmp.eq.s32.totalorder %v451, 1
    %vm468 = vcmp.eq.s32.totalorder %v452, 1
    %vm469 = vcmp.eq.s32.totalorder %v453, 1
    %vm470 = vcmp.eq.s32.totalorder %v454, 1
    %vm471 = vcmp.eq.s32.totalorder %v455, 1
    %vm472 = vcmp.eq.s32.totalorder %v456, 1
    %vm473 = vcmp.eq.s32.totalorder %v457, 1
    %vm474 = vcmp.eq.s32.totalorder %v458, 1
    %vm475 = vcmp.eq.s32.totalorder %v459, 1
    %vm476 = vcmp.eq.s32.totalorder %v460, 1
    %vm477 = vcmp.eq.s32.totalorder %v461, 1
    %vm478 = vcmp.eq.s32.totalorder %v462, 1
    %vm479 = vcmp.eq.s32.totalorder %v463, 1
    %vm480 = vcmp.eq.s32.totalorder %v464, 1
    %v481 = vsel %vm465, %v187, 0.0
    %v482 = vsel %vm466, %v190, 0.0
    %v483 = vsel %vm467, %v195, 0.0
    %v484 = vsel %vm468, %v198, 0.0
    %v485 = vsel %vm469, %v203, 0.0
    %v486 = vsel %vm470, %v206, 0.0
    %v487 = vsel %vm471, %v211, 0.0
    %v488 = vsel %vm472, %v214, 0.0
    %v489 = vsel %vm473, %v219, 0.0
    %v490 = vsel %vm474, %v222, 0.0
    %v491 = vsel %vm475, %v227, 0.0
    %v492 = vsel %vm476, %v230, 0.0
    %v493 = vsel %vm477, %v235, 0.0
    %v494 = vsel %vm478, %v238, 0.0
    %v495 = vsel %vm479, %v243, 0.0
    %v496 = vsel %vm480, %v246, 0.0
    %v497 = vadd.f32 %v481, %v482
    %v498 = vadd.f32 %v497, %v483
    %v499 = vadd.f32 %v498, %v484
    %v500 = vadd.f32 %v499, %v485
    %v501 = vadd.f32 %v500, %v486
    %v502 = vadd.f32 %v501, %v487
    %v503 = vadd.f32 %v502, %v488
    %v504 = vadd.f32 %v503, %v489
    %v505 = vadd.f32 %v504, %v490
    %v506 = vadd.f32 %v505, %v491
    %v507 = vadd.f32 %v506, %v492
    %v508 = vadd.f32 %v507, %v493
    %v509 = vadd.f32 %v508, %v494
    %v510 = vadd.f32 %v509, %v495
    %v511 = vadd.f32 %v510, %v496
    %v512 = vrot.slane %v511, 4
    %v513 = vadd.f32 %v511, %v512
    %v514 = vrot.slane %v513, 2
    %v515 = vadd.f32 %v513, %v514
    %v516 = vrot.slane %v515, 1
    %v517 = vadd.f32 %v515, %v516
    %v518 = vmul.f32 %v481, %v481
    %v519 = vmul.f32 %v482, %v482
    %v520 = vmul.f32 %v483, %v483
    %v521 = vmul.f32 %v484, %v484
    %v522 = vmul.f32 %v485, %v485
    %v523 = vmul.f32 %v486, %v486
    %v524 = vmul.f32 %v487, %v487
    %v525 = vmul.f32 %v488, %v488
    %v526 = vmul.f32 %v489, %v489
    %v527 = vmul.f32 %v490, %v490
    %v528 = vmul.f32 %v491, %v491
    %v529 = vmul.f32 %v492, %v492
    %v530 = vmul.f32 %v493, %v493
    %v531 = vmul.f32 %v494, %v494
    %v532 = vmul.f32 %v495, %v495
    %v533 = vmul.f32 %v496, %v496
    %v534 = vadd.f32 %v518, %v519
    %v535 = vadd.f32 %v534, %v520
    %v536 = vadd.f32 %v535, %v521
    %v537 = vadd.f32 %v536, %v522
    %v538 = vadd.f32 %v537, %v523
    %v539 = vadd.f32 %v538, %v524
    %v540 = vadd.f32 %v539, %v525
    %v541 = vadd.f32 %v540, %v526
    %v542 = vadd.f32 %v541, %v527
    %v543 = vadd.f32 %v542, %v528
    %v544 = vadd.f32 %v543, %v529
    %v545 = vadd.f32 %v544, %v530
    %v546 = vadd.f32 %v545, %v531
    %v547 = vadd.f32 %v546, %v532
    %v548 = vadd.f32 %v547, %v533
    %v549 = vrot.slane %v548, 4
    %v550 = vadd.f32 %v548, %v549
    %v551 = vrot.slane %v550, 2
    %v552 = vadd.f32 %v550, %v551
    %v553 = vrot.slane %v552, 1
    %v554 = vadd.f32 %v552, %v553
    %vm555 = vcmask 1040384
    %v556 = vsel %vm555, %v517, %v554
    %557 = vst [vmem:[%s4] sm:$0x3] %v556
  $region21: #{res_block_forward.3} parent=0 // pred_fallthru
    _
  // Predicated region
  $region22: #{res_block_forward.3} parent=0 // pred_check
    _
  $region23: #{res_block_forward.3} parent=0 // pred_check_branch
    %559 = sbr.rel (0) target = $region25
  $region24: #{res_block_forward.3} parent=0 // pred_region
    _
  $region25: #{res_block_forward.3} parent=0 // pred_fallthru
    _
  // Predicated region
  $region26: #{res_block_forward.3} parent=0 // pred_check
    _
  $region27: #{res_block_forward.3} parent=0 // pred_check_branch
    %561 = sbr.rel (0) target = $region29
  $region28: #{res_block_forward.3} parent=0 // pred_region
    _
  $region29: #{res_block_forward.3} parent=0 // pred_fallthru
    _
  // Predicated region
  $region30: #{res_block_forward.3} parent=0 // pred_check
    _
  $region31: #{res_block_forward.3} parent=0 // pred_check_branch
    %563 = sbr.rel (0) target = $region33
  $region32: #{res_block_forward.3} parent=0 // pred_region
    _
  $region33: #{res_block_forward.3} parent=0 // pred_fallthru
    _
  // Predicated region
  $region34: #{res_block_forward.3} parent=0 // pred_check
    _
  $region35: #{res_block_forward.3} parent=0 // pred_check_branch
    %565 = sbr.rel (0) target = $region37
  $region36: #{res_block_forward.3} parent=0 // pred_region
    _
  $region37: #{res_block_forward.3} parent=0 // pred_fallthru
    _

// kernel: res_block_forward.5
$region0: #{res_block_forward.5}
  #allocation0 [shape = 'u32[]', space=smem, size = 0x4, offset = 0x4, fixed_abs, tag = 'smem constant byte address 0x4 - core index']
  #allocation1 [shape = 'u32[144,128]{1,0:T(1,128)}', space=vmem, size = 0x12000, scoped, tag = 'internal scratch']
  %s0 = inlined_call_operand.vmem [shape: bf16[200,128], index: 0, kind: input, shape index: {}]
  %s1 = inlined_call_operand.vmem [shape: f32[1,128], index: 1, kind: input, shape index: {}]
  %s2 = inlined_call_operand.vmem [shape: f32[1,128], index: 2, kind: input, shape index: {}]
  %s3 = inlined_call_operand.vmem [shape: bf16[200,4], index: 3, kind: input, shape index: {}]
  %s4 = inlined_call_operand.vmem [shape: bf16[4,128], index: 4, kind: input, shape index: {}]
  %s5 = inlined_call_operand.vmem [shape: f32[1,128], index: 5, kind: input, shape index: {}]
  %s6 = inlined_call_operand.vmem [shape: bf16[200,128], index: 6, kind: output, shape index: {}]
  %s7 = sld [smem:[#allocation0]]
  $region34: #{res_block_forward.5} parent=0
    _
  %s9 = ssub.s32 1, %s7
  %s10 = scalar_select 0, %s9, %s7
  // Predicated region
  $region2: #{res_block_forward.5} parent=0 // pred_check
    _
  $region3: #{res_block_forward.5} parent=0 // pred_check_branch
    %12 = sbr.rel (0) target = $region5
  $region4: #{res_block_forward.5} parent=0 // pred_region
    _
  $region5: #{res_block_forward.5} parent=0 // pred_fallthru
    _
  // Predicated region
  $region6: #{res_block_forward.5} parent=0 // pred_check
    _
  $region7: #{res_block_forward.5} parent=0 // pred_check_branch
    %14 = sbr.rel (0) target = $region9
  $region8: #{res_block_forward.5} parent=0 // pred_region
    _
  $region9: #{res_block_forward.5} parent=0 // pred_fallthru
    _
  // Predicated region
  $region10: #{res_block_forward.5} parent=0 // pred_check
    _
  $region11: #{res_block_forward.5} parent=0 // pred_check_branch
    %16 = sbr.rel (0) target = $region13
  $region12: #{res_block_forward.5} parent=0 // pred_region
    _
  $region13: #{res_block_forward.5} parent=0 // pred_fallthru
    _
  // Predicated region
  $region14: #{res_block_forward.5} parent=0 // pred_check
    _
  $region15: #{res_block_forward.5} parent=0 // pred_check_branch
    %18 = sbr.rel (0) target = $region17
  $region16: #{res_block_forward.5} parent=0 // pred_region
    _
  $region17: #{res_block_forward.5} parent=0 // pred_fallthru
    _
  // Predicated region
  $region18: #{res_block_forward.5} parent=0 // pred_check
    _
  $region19: #{res_block_forward.5} parent=0 // pred_check_branch
    %20 = sbr.rel (0) target = $region21
  $region20: #{res_block_forward.5} parent=0 // pred_region
    _
  $region21: #{res_block_forward.5} parent=0 // pred_fallthru
    _
  // Predicated region
  $region22: #{res_block_forward.5} parent=0 // pred_check
    _
  $region23: #{res_block_forward.5} parent=0 // pred_check_branch
    %22 = sbr.rel (0) target = $region25
  $region24: #{res_block_forward.5} parent=0 // pred_region
    _
  $region25: #{res_block_forward.5} parent=0 // pred_fallthru
    _
  %v24 = vld [vmem:[%s0] sm:$0xf]
  %v25 = vld [vmem:[%s0 + $0x4] sm:$0xf]
  %v26 = vld [vmem:[%s0 + $0x8] sm:$0xf]
  %v27 = vld [vmem:[%s0 + $0xc] sm:$0xf]
  %v28 = vld [vmem:[%s0 + $0x10] sm:$0xf]
  %v29 = vld [vmem:[%s0 + $0x14] sm:$0xf]
  %v30 = vld [vmem:[%s0 + $0x18] sm:$0xf]
  %v31 = vld [vmem:[%s0 + $0x1c] sm:$0xf]
  %v32 = vld [vmem:[%s0 + $0x20] sm:$0xf]
  %v33 = vld [vmem:[%s0 + $0x24] sm:$0xf]
  %v34 = vld [vmem:[%s0 + $0x28] sm:$0xf]
  %v35 = vld [vmem:[%s0 + $0x2c] sm:$0xf]
  %v36 = vld [vmem:[%s0 + $0x30] sm:$0xf]
  %v37 = vld [vmem:[%s0 + $0x34] sm:$0xf]
  %v38 = vld [vmem:[%s0 + $0x38] sm:$0xf]
  %v39 = vld [vmem:[%s0 + $0x3c] sm:$0xf]
  %v40 = vld [vmem:[%s0 + $0x40] sm:$0xf]
  %v41 = vld [vmem:[%s0 + $0x44] sm:$0xf]
  %v42 = vld [vmem:[%s0 + $0x48] sm:$0xf]
  %v43 = vld [vmem:[%s0 + $0x4c] sm:$0xf]
  %v44 = vld [vmem:[%s0 + $0x50] sm:$0xf]
  %v45 = vld [vmem:[%s0 + $0x54] sm:$0xf]
  %v46 = vld [vmem:[%s0 + $0x58] sm:$0xf]
  %v47 = vld [vmem:[%s0 + $0x5c] sm:$0xf]
  %v48 = vld [vmem:[%s0 + $0x60] sm:$0xf]
  %v49 = vunpack.c.l.bf16 %v24
  %v50 = vunpack.c.l.bf16 %v25
  %v51 = vunpack.c.l.bf16 %v26
  %v52 = vunpack.c.l.bf16 %v27
  %v53 = vunpack.c.l.bf16 %v28
  %v54 = vunpack.c.l.bf16 %v29
  %v55 = vunpack.c.l.bf16 %v30
  %v56 = vunpack.c.l.bf16 %v31
  %v57 = vunpack.c.l.bf16 %v32
  %v58 = vunpack.c.l.bf16 %v33
  %v59 = vunpack.c.l.bf16 %v34
  %v60 = vunpack.c.l.bf16 %v35
  %v61 = vunpack.c.l.bf16 %v36
  %v62 = vunpack.c.l.bf16 %v37
  %v63 = vunpack.c.l.bf16 %v38
  %v64 = vunpack.c.l.bf16 %v39
  %v65 = vunpack.c.l.bf16 %v40
  %v66 = vunpack.c.l.bf16 %v41
  %v67 = vunpack.c.l.bf16 %v42
  %v68 = vunpack.c.l.bf16 %v43
  %v69 = vunpack.c.l.bf16 %v44
  %v70 = vunpack.c.l.bf16 %v45
  %v71 = vunpack.c.l.bf16 %v46
  %v72 = vunpack.c.l.bf16 %v47
  %v73 = vunpack.c.l.bf16 %v48
  %v74 = vld [vmem:[%s1] sm:$0x1]
  %v76 = vlaneseq
  %v77 = vshrl.u32 %v76, 7
  %v78 = vsub.s32 0, %v77
  %v79 = vrot.slane %v74, %v78
  %v81 = vmul.f32 %v49, %v79
  %v82 = vmul.f32 %v50, %v79
  %v83 = vmul.f32 %v51, %v79
  %v84 = vmul.f32 %v52, %v79
  %v85 = vmul.f32 %v53, %v79
  %v86 = vmul.f32 %v54, %v79
  %v87 = vmul.f32 %v55, %v79
  %v88 = vmul.f32 %v56, %v79
  %v89 = vmul.f32 %v57, %v79
  %v90 = vmul.f32 %v58, %v79
  %v91 = vmul.f32 %v59, %v79
  %v92 = vmul.f32 %v60, %v79
  %v93 = vmul.f32 %v61, %v79
  %v94 = vmul.f32 %v62, %v79
  %v95 = vmul.f32 %v63, %v79
  %v96 = vmul.f32 %v64, %v79
  %v97 = vmul.f32 %v65, %v79
  %v98 = vmul.f32 %v66, %v79
  %v99 = vmul.f32 %v67, %v79
  %v100 = vmul.f32 %v68, %v79
  %v101 = vmul.f32 %v69, %v79
  %v102 = vmul.f32 %v70, %v79
  %v103 = vmul.f32 %v71, %v79
  %v104 = vmul.f32 %v72, %v79
  %v105 = vmul.f32 %v73, %v79
  %v106 = vld [vmem:[%s2] sm:$0x1]
  %v108 = vlaneseq
  %v109 = vshrl.u32 %v108, 7
  %v110 = vsub.s32 0, %v109
  %v111 = vrot.slane %v106, %v110
  %v113 = vadd.f32 %v81, %v111
  %v114 = vadd.f32 %v82, %v111
  %v115 = vadd.f32 %v83, %v111
  %v116 = vadd.f32 %v84, %v111
  %v117 = vadd.f32 %v85, %v111
  %v118 = vadd.f32 %v86, %v111
  %v119 = vadd.f32 %v87, %v111
  %v120 = vadd.f32 %v88, %v111
  %v121 = vadd.f32 %v89, %v111
  %v122 = vadd.f32 %v90, %v111
  %v123 = vadd.f32 %v91, %v111
  %v124 = vadd.f32 %v92, %v111
  %v125 = vadd.f32 %v93, %v111
  %v126 = vadd.f32 %v94, %v111
  %v127 = vadd.f32 %v95, %v111
  %v128 = vadd.f32 %v96, %v111
  %v129 = vadd.f32 %v97, %v111
  %v130 = vadd.f32 %v98, %v111
  %v131 = vadd.f32 %v99, %v111
  %v132 = vadd.f32 %v100, %v111
  %v133 = vadd.f32 %v101, %v111
  %v134 = vadd.f32 %v102, %v111
  %v135 = vadd.f32 %v103, %v111
  %v136 = vadd.f32 %v104, %v111
  %v137 = vadd.f32 %v105, %v111
  %v138 = vld [vmem:[%s3] sm:$0xf]
  %v139 = vld [vmem:[%s3 + $0x4] sm:$0xf]
  %v140 = vld [vmem:[%s3 + $0x8] sm:$0xf]
  %v141 = vld [vmem:[%s3 + $0xc] sm:$0xf]
  %v142 = vld [vmem:[%s3 + $0x10] sm:$0xf]
  %v143 = vld [vmem:[%s3 + $0x14] sm:$0xf]
  %v144 = vld [vmem:[%s3 + $0x18] sm:$0xf]
  %v145 = vld [vmem:[%s3 + $0x1c] sm:$0xf]
  %v146 = vld [vmem:[%s3 + $0x20] sm:$0xf]
  %v147 = vld [vmem:[%s3 + $0x24] sm:$0xf]
  %v148 = vld [vmem:[%s3 + $0x28] sm:$0xf]
  %v149 = vld [vmem:[%s3 + $0x2c] sm:$0xf]
  %v150 = vld [vmem:[%s3 + $0x30] sm:$0xf]
  %v151 = vld [vmem:[%s3 + $0x34] sm:$0xf]
  %v152 = vld [vmem:[%s3 + $0x38] sm:$0xf]
  %v153 = vld [vmem:[%s3 + $0x3c] sm:$0xf]
  %v154 = vld [vmem:[%s3 + $0x40] sm:$0xf]
  %v155 = vld [vmem:[%s3 + $0x44] sm:$0xf]
  %v156 = vld [vmem:[%s3 + $0x48] sm:$0xf]
  %v157 = vld [vmem:[%s3 + $0x4c] sm:$0xf]
  %v158 = vld [vmem:[%s3 + $0x50] sm:$0xf]
  %v159 = vld [vmem:[%s3 + $0x54] sm:$0xf]
  %v160 = vld [vmem:[%s3 + $0x58] sm:$0xf]
  %v161 = vld [vmem:[%s3 + $0x5c] sm:$0xf]
  %v162 = vld [vmem:[%s3 + $0x60] sm:$0xf]
  %v163 = vld [vmem:[%s4] sm:$0x3]
  %v164 = vld [vmem:[%s5] sm:$0x1]
  %v166 = vlaneseq
  %v167 = vshrl.u32 %v166, 7
  %v168 = vsub.s32 0, %v167
  %v169 = vrot.slane %v164, %v168
  %v196 = vunpack.c.l.b16 %v138
  %v197 = vunpack.c.l.b16 %v139
  %v198 = vunpack.c.l.b16 %v140
  %v199 = vunpack.c.l.b16 %v141
  %v200 = vunpack.c.l.b16 %v142
  %v201 = vunpack.c.l.b16 %v143
  %v202 = vunpack.c.l.b16 %v144
  %v203 = vunpack.c.l.b16 %v145
  %v204 = vunpack.c.l.b16 %v146
  %v205 = vunpack.c.l.b16 %v147
  %v206 = vunpack.c.l.b16 %v148
  %v207 = vunpack.c.l.b16 %v149
  %v208 = vunpack.c.l.b16 %v150
  %v209 = vunpack.c.l.b16 %v151
  %v210 = vunpack.c.l.b16 %v152
  %v211 = vunpack.c.l.b16 %v153
  %v212 = vunpack.c.l.b16 %v154
  %v213 = vunpack.c.l.b16 %v155
  %v214 = vunpack.c.l.b16 %v156
  %v215 = vunpack.c.l.b16 %v157
  %v216 = vunpack.c.l.b16 %v158
  %v217 = vunpack.c.l.b16 %v159
  %v218 = vunpack.c.l.b16 %v160
  %v219 = vunpack.c.l.b16 %v161
  %v220 = vunpack.c.l.b16 %v162
  %v221 = vpack.c.b16 %v197, %v196
  %v222 = vpack.c.b16 %v199, %v198
  %v223 = vpack.c.b16 %v201, %v200
  %v224 = vpack.c.b16 %v203, %v202
  %v225 = vpack.c.b16 %v205, %v204
  %v226 = vpack.c.b16 %v207, %v206
  %v227 = vpack.c.b16 %v209, %v208
  %v228 = vpack.c.b16 %v211, %v210
  %v229 = vpack.c.b16 %v213, %v212
  %v230 = vpack.c.b16 %v215, %v214
  %v231 = vpack.c.b16 %v217, %v216
  %v232 = vpack.c.b16 %v219, %v218
  %v233 = vpack.c.b16 %v220, %v220
  %vm234 = vcmask 31744
  %v236 = vsel %vm234, %v221, 0
  %v239 = vsel %vm234, %v222, 0
  %v242 = vsel %vm234, %v223, 0
  %v245 = vsel %vm234, %v224, 0
  %v248 = vsel %vm234, %v225, 0
  %v251 = vsel %vm234, %v226, 0
  %v254 = vsel %vm234, %v227, 0
  %v257 = vsel %vm234, %v228, 0
  %v260 = vsel %vm234, %v229, 0
  %v263 = vsel %vm234, %v230, 0
  %v266 = vsel %vm234, %v231, 0
  %v269 = vsel %vm234, %v232, 0
  %v272 = vsel %vm234, %v233, 0
  %vm274 = vcmask 1041408
  %v276 = vsel %vm274, %v163, 0
  %278 = vmatprep.subr.bf16.mxu0 0
  %279 = vmatpush1.bf16.msra.mxu0 0
  %280 = vmatprep.subr.bf16.mxu0 0
  %281 = vmatpush1.bf16.msra.mxu0 0
  %282 = vmatprep.subr.bf16.mxu0 0
  %283 = vmatpush1.bf16.msra.mxu0 0
  %284 = vmatprep.subr.bf16.mxu0 0
  %285 = vmatpush1.bf16.msra.mxu0 0
  %286 = vmatprep.subr.bf16.mxu0 0
  %287 = vmatpush1.bf16.msra.mxu0 0
  %288 = vmatprep.subr.bf16.mxu0 0
  %289 = vmatpush1.bf16.msra.mxu0 0
  %290 = vmatprep.subr.bf16.mxu0 0
  %291 = vmatpush1.bf16.msra.mxu0 0
  %292 = vmatprep.subr.bf16.mxu0 0
  %293 = vmatpush1.bf16.msra.mxu0 %v276
  %294 = vmatprep.subr.bf16.mxu0 0
  %295 = vmatpush2.bf16.msra.mxu0 0
  %296 = vmatprep.subr.bf16.mxu0 0
  %297 = vmatpush2.bf16.msra.mxu0 0
  %298 = vmatprep.subr.bf16.mxu0 0
  %299 = vmatpush2.bf16.msra.mxu0 0
  %300 = vmatprep.subr.bf16.mxu0 0
  %301 = vmatpush2.bf16.msra.mxu0 0
  %302 = vmatprep.subr.bf16.mxu0 0
  %303 = vmatpush2.bf16.msra.mxu0 0
  %304 = vmatprep.subr.bf16.mxu0 0
  %305 = vmatpush2.bf16.msra.mxu0 0
  %306 = vmatprep.subr.bf16.mxu0 0
  %307 = vmatpush2.bf16.msra.mxu0 0
  %308 = vmatprep.subr.bf16.mxu0 0
  %309 = vmatpush2.bf16.msra.mxu0 0
  %310 = vmatprep.mubr.bf16.mxu0 0
  %311 = vmatmul.mubr.bf16.gmra.mxu0 %v236
  %v312 = vpop.f32.mrf.mxu0
  %v313 = vadd.f32 %v169, %v312
  %v314 = vpop.f32.mrf.mxu0
  %v315 = vpop.f32.mrf.mxu0
  %v316 = vadd.f32 %v169, %v315
  %v317 = vpop.f32.mrf.mxu0
  %318 = vmatprep.mubr.bf16.mxu0 0
  %319 = vmatmul.mubr.bf16.gmra.mxu0 %v239
  %v320 = vpop.f32.mrf.mxu0
  %v321 = vadd.f32 %v169, %v320
  %v322 = vpop.f32.mrf.mxu0
  %v323 = vpop.f32.mrf.mxu0
  %v324 = vadd.f32 %v169, %v323
  %v325 = vpop.f32.mrf.mxu0
  %326 = vmatprep.mubr.bf16.mxu0 0
  %327 = vmatmul.mubr.bf16.gmra.mxu0 %v242
  %v328 = vpop.f32.mrf.mxu0
  %v329 = vadd.f32 %v169, %v328
  %v330 = vpop.f32.mrf.mxu0
  %v331 = vpop.f32.mrf.mxu0
  %v332 = vadd.f32 %v169, %v331
  %v333 = vpop.f32.mrf.mxu0
  %334 = vmatprep.mubr.bf16.mxu0 0
  %335 = vmatmul.mubr.bf16.gmra.mxu0 %v245
  %v336 = vpop.f32.mrf.mxu0
  %v337 = vadd.f32 %v169, %v336
  %v338 = vpop.f32.mrf.mxu0
  %v339 = vpop.f32.mrf.mxu0
  %v340 = vadd.f32 %v169, %v339
  %v341 = vpop.f32.mrf.mxu0
  %342 = vmatprep.mubr.bf16.mxu0 0
  %343 = vmatmul.mubr.bf16.gmra.mxu0 %v248
  %v344 = vpop.f32.mrf.mxu0
  %v345 = vadd.f32 %v169, %v344
  %v346 = vpop.f32.mrf.mxu0
  %v347 = vpop.f32.mrf.mxu0
  %v348 = vadd.f32 %v169, %v347
  %v349 = vpop.f32.mrf.mxu0
  %350 = vmatprep.mubr.bf16.mxu0 0
  %351 = vmatmul.mubr.bf16.gmra.mxu0 %v251
  %v352 = vpop.f32.mrf.mxu0
  %v353 = vadd.f32 %v169, %v352
  %v354 = vpop.f32.mrf.mxu0
  %v355 = vpop.f32.mrf.mxu0
  %v356 = vadd.f32 %v169, %v355
  %v357 = vpop.f32.mrf.mxu0
  %358 = vmatprep.mubr.bf16.mxu0 0
  %359 = vmatmul.mubr.bf16.gmra.mxu0 %v254
  %v360 = vpop.f32.mrf.mxu0
  %v361 = vadd.f32 %v169, %v360
  %v362 = vpop.f32.mrf.mxu0
  %v363 = vpop.f32.mrf.mxu0
  %v364 = vadd.f32 %v169, %v363
  %v365 = vpop.f32.mrf.mxu0
  %366 = vmatprep.mubr.bf16.mxu0 0
  %367 = vmatmul.mubr.bf16.gmra.mxu0 %v257
  %v368 = vpop.f32.mrf.mxu0
  %v369 = vadd.f32 %v169, %v368
  %v370 = vpop.f32.mrf.mxu0
  %v371 = vpop.f32.mrf.mxu0
  %v372 = vadd.f32 %v169, %v371
  %v373 = vpop.f32.mrf.mxu0
  %374 = vmatprep.mubr.bf16.mxu0 0
  %375 = vmatmul.mubr.bf16.gmra.mxu0 %v260
  %v376 = vpop.f32.mrf.mxu0
  %v377 = vadd.f32 %v169, %v376
  %v378 = vpop.f32.mrf.mxu0
  %v379 = vpop.f32.mrf.mxu0
  %v380 = vadd.f32 %v169, %v379
  %v381 = vpop.f32.mrf.mxu0
  %382 = vmatprep.mubr.bf16.mxu0 0
  %383 = vmatmul.mubr.bf16.gmra.mxu0 %v263
  %v384 = vpop.f32.mrf.mxu0
  %v385 = vadd.f32 %v169, %v384
  %v386 = vpop.f32.mrf.mxu0
  %v387 = vpop.f32.mrf.mxu0
  %v388 = vadd.f32 %v169, %v387
  %v389 = vpop.f32.mrf.mxu0
  %390 = vmatprep.mubr.bf16.mxu0 0
  %391 = vmatmul.mubr.bf16.gmra.mxu0 %v266
  %v392 = vpop.f32.mrf.mxu0
  %v393 = vadd.f32 %v169, %v392
  %v394 = vpop.f32.mrf.mxu0
  %v395 = vpop.f32.mrf.mxu0
  %v396 = vadd.f32 %v169, %v395
  %v397 = vpop.f32.mrf.mxu0
  %398 = vmatprep.mubr.bf16.mxu0 0
  %399 = vmatmul.mubr.bf16.gmra.mxu0 %v269
  %v400 = vpop.f32.mrf.mxu0
  %v401 = vadd.f32 %v169, %v400
  %v402 = vpop.f32.mrf.mxu0
  %v403 = vpop.f32.mrf.mxu0
  %v404 = vadd.f32 %v169, %v403
  %v405 = vpop.f32.mrf.mxu0
  %406 = vmatprep.mubr.bf16.mxu0 0
  %407 = vmatmul.mubr.bf16.gmra.mxu0 %v272
  %v408 = vpop.f32.mrf.mxu0
  %v409 = vadd.f32 %v169, %v408
  %v410 = vpop.f32.mrf.mxu0
  %v411 = vpop.f32.mrf.mxu0
  %v412 = vpop.f32.mrf.mxu0
  %413 = vdwg.mxu0
  %v414 = vadd.f32 %v113, %v313
  %v415 = vadd.f32 %v114, %v316
  %v416 = vadd.f32 %v115, %v321
  %v417 = vadd.f32 %v116, %v324
  %v418 = vadd.f32 %v117, %v329
  %v419 = vadd.f32 %v118, %v332
  %v420 = vadd.f32 %v119, %v337
  %v421 = vadd.f32 %v120, %v340
  %v422 = vadd.f32 %v121, %v345
  %v423 = vadd.f32 %v122, %v348
  %v424 = vadd.f32 %v123, %v353
  %v425 = vadd.f32 %v124, %v356
  %v426 = vadd.f32 %v125, %v361
  %v427 = vadd.f32 %v126, %v364
  %v428 = vadd.f32 %v127, %v369
  %v429 = vadd.f32 %v128, %v372
  %v430 = vadd.f32 %v129, %v377
  %v431 = vadd.f32 %v130, %v380
  %v432 = vadd.f32 %v131, %v385
  %v433 = vadd.f32 %v132, %v388
  %v434 = vadd.f32 %v133, %v393
  %v435 = vadd.f32 %v134, %v396
  %v436 = vadd.f32 %v135, %v401
  %v437 = vadd.f32 %v136, %v404
  %v438 = vadd.f32 %v137, %v409
  %v439 = vmax.f32 %v414, 0.0
  %v440 = vmax.f32 %v415, 0.0
  %v441 = vmax.f32 %v416, 0.0
  %v442 = vmax.f32 %v417, 0.0
  %v443 = vmax.f32 %v418, 0.0
  %v444 = vmax.f32 %v419, 0.0
  %v445 = vmax.f32 %v420, 0.0
  %v446 = vmax.f32 %v421, 0.0
  %v447 = vmax.f32 %v422, 0.0
  %v448 = vmax.f32 %v423, 0.0
  %v449 = vmax.f32 %v424, 0.0
  %v450 = vmax.f32 %v425, 0.0
  %v451 = vmax.f32 %v426, 0.0
  %v452 = vmax.f32 %v427, 0.0
  %v453 = vmax.f32 %v428, 0.0
  %v454 = vmax.f32 %v429, 0.0
  %v455 = vmax.f32 %v430, 0.0
  %v456 = vmax.f32 %v431, 0.0
  %v457 = vmax.f32 %v432, 0.0
  %v458 = vmax.f32 %v433, 0.0
  %v459 = vmax.f32 %v434, 0.0
  %v460 = vmax.f32 %v435, 0.0
  %v461 = vmax.f32 %v436, 0.0
  %v462 = vmax.f32 %v437, 0.0
  %v463 = vmax.f32 %v438, 0.0
  %v464 = vpack.c.bf16 %v440, %v439
  %v465 = vpack.c.bf16 %v442, %v441
  %v466 = vpack.c.bf16 %v444, %v443
  %v467 = vpack.c.bf16 %v446, %v445
  %v468 = vpack.c.bf16 %v448, %v447
  %v469 = vpack.c.bf16 %v450, %v449
  %v470 = vpack.c.bf16 %v452, %v451
  %v471 = vpack.c.bf16 %v454, %v453
  %v472 = vpack.c.bf16 %v456, %v455
  %v473 = vpack.c.bf16 %v458, %v457
  %v474 = vpack.c.bf16 %v460, %v459
  %v475 = vpack.c.bf16 %v462, %v461
  %v476 = vpack.c.bf16 %v463, %v463
  %v490 = vunpack.c.l.b16 %v464
  %v491 = vunpack.c.h.b16 %v464
  %v492 = vunpack.c.l.b16 %v465
  %v493 = vunpack.c.h.b16 %v465
  %v494 = vunpack.c.l.b16 %v466
  %v495 = vunpack.c.h.b16 %v466
  %v496 = vunpack.c.l.b16 %v467
  %v497 = vunpack.c.h.b16 %v467
  %v498 = vunpack.c.l.b16 %v468
  %v499 = vunpack.c.h.b16 %v468
  %v500 = vunpack.c.l.b16 %v469
  %v501 = vunpack.c.h.b16 %v469
  %v502 = vunpack.c.l.b16 %v470
  %v503 = vunpack.c.h.b16 %v470
  %v504 = vunpack.c.l.b16 %v471
  %v505 = vunpack.c.h.b16 %v471
  %v506 = vunpack.c.l.b16 %v472
  %v507 = vunpack.c.h.b16 %v472
  %v508 = vunpack.c.l.b16 %v473
  %v509 = vunpack.c.h.b16 %v473
  %v510 = vunpack.c.l.b16 %v474
  %v511 = vunpack.c.h.b16 %v474
  %v512 = vunpack.c.l.b16 %v475
  %v513 = vunpack.c.h.b16 %v475
  %v514 = vunpack.c.l.b16 %v476
  %v515 = vpack.c.b16 %v490, %v490
  %v516 = vpack.c.b16 %v491, %v491
  %v517 = vpack.c.b16 %v492, %v492
  %v518 = vpack.c.b16 %v493, %v493
  %v519 = vpack.c.b16 %v494, %v494
  %v520 = vpack.c.b16 %v495, %v495
  %v521 = vpack.c.b16 %v496, %v496
  %v522 = vpack.c.b16 %v497, %v497
  %v523 = vpack.c.b16 %v498, %v498
  %v524 = vpack.c.b16 %v499, %v499
  %v525 = vpack.c.b16 %v500, %v500
  %v526 = vpack.c.b16 %v501, %v501
  %v527 = vpack.c.b16 %v502, %v502
  %v528 = vpack.c.b16 %v503, %v503
  %v529 = vpack.c.b16 %v504, %v504
  %v530 = vpack.c.b16 %v505, %v505
  %v531 = vpack.c.b16 %v506, %v506
  %v532 = vpack.c.b16 %v507, %v507
  %v533 = vpack.c.b16 %v508, %v508
  %v534 = vpack.c.b16 %v509, %v509
  %v535 = vpack.c.b16 %v510, %v510
  %v536 = vpack.c.b16 %v511, %v511
  %v537 = vpack.c.b16 %v512, %v512
  %v538 = vpack.c.b16 %v513, %v513
  %v539 = vpack.c.b16 %v514, %v514
  %565 = vst [vmem:[%s6] sm:$0xf] %v515
  %566 = vst [vmem:[%s6 + $0x4] sm:$0xf] %v516
  %567 = vst [vmem:[%s6 + $0x8] sm:$0xf] %v517
  %568 = vst [vmem:[%s6 + $0xc] sm:$0xf] %v518
  %569 = vst [vmem:[%s6 + $0x10] sm:$0xf] %v519
  %570 = vst [vmem:[%s6 + $0x14] sm:$0xf] %v520
  %571 = vst [vmem:[%s6 + $0x18] sm:$0xf] %v521
  %572 = vst [vmem:[%s6 + $0x1c] sm:$0xf] %v522
  %573 = vst [vmem:[%s6 + $0x20] sm:$0xf] %v523
  %574 = vst [vmem:[%s6 + $0x24] sm:$0xf] %v524
  %575 = vst [vmem:[%s6 + $0x28] sm:$0xf] %v525
  %576 = vst [vmem:[%s6 + $0x2c] sm:$0xf] %v526
  %577 = vst [vmem:[%s6 + $0x30] sm:$0xf] %v527
  %578 = vst [vmem:[%s6 + $0x34] sm:$0xf] %v528
  %579 = vst [vmem:[%s6 + $0x38] sm:$0xf] %v529
  %580 = vst [vmem:[%s6 + $0x3c] sm:$0xf] %v530
  %581 = vst [vmem:[%s6 + $0x40] sm:$0xf] %v531
  %582 = vst [vmem:[%s6 + $0x44] sm:$0xf] %v532
  %583 = vst [vmem:[%s6 + $0x48] sm:$0xf] %v533
  %584 = vst [vmem:[%s6 + $0x4c] sm:$0xf] %v534
  %585 = vst [vmem:[%s6 + $0x50] sm:$0xf] %v535
  %586 = vst [vmem:[%s6 + $0x54] sm:$0xf] %v536
  %587 = vst [vmem:[%s6 + $0x58] sm:$0xf] %v537
  %588 = vst [vmem:[%s6 + $0x5c] sm:$0xf] %v538
  %589 = vst [vmem:[%s6 + $0x60] sm:$0xf] %v539
  // Predicated region
  $region26: #{res_block_forward.5} parent=0 // pred_check
    _
  $region27: #{res_block_forward.5} parent=0 // pred_check_branch
    %591 = sbr.rel (0) target = $region29
  $region28: #{res_block_forward.5} parent=0 // pred_region
    _
  $region29: #{res_block_forward.5} parent=0 // pred_fallthru
    _
  // Predicated region
  $region30: #{res_block_forward.5} parent=0 // pred_check
    _
  $region31: #{res_block_forward.5} parent=0 // pred_check_branch
    %593 = sbr.rel (0) target = $region33
  $region32: #{res_block_forward.5} parent=0 // pred_region
    _
  $region33: #{res_block_forward.5} parent=0 // pred_fallthru
    _

// kernel: res_block_forward.4
$region0: #{res_block_forward.4}
  #allocation0 [shape = 'u32[]', space=smem, size = 0x4, offset = 0x4, fixed_abs, tag = 'smem constant byte address 0x4 - core index']
  #allocation1 [shape = 'u32[144,128]{1,0:T(1,128)}', space=vmem, size = 0x12000, scoped, tag = 'internal scratch']
  %s0 = inlined_call_operand.vmem [shape: bf16[400,128], index: 0, kind: input, shape index: {}, may-alias: {0,1}]
  %s1 = inlined_call_operand.vmem [shape: bf16[400,128], index: 1, kind: input, shape index: {}, may-alias: {0,1}]
  %s2 = inlined_call_operand.vmem [shape: f32[400,1], index: 2, kind: input, shape index: {}]
  %s3 = inlined_call_operand.vmem [shape: bf16[9,128,128], index: 3, kind: input, shape index: {}]
  %s4 = inlined_call_operand.vmem [shape: f32[1,128], index: 4, kind: input, shape index: {}]
  %s5 = inlined_call_operand.vmem [shape: bf16[200,128], index: 5, kind: output, shape index: {0}]
  %s6 = inlined_call_operand.vmem [shape: f32[1,2,128], index: 6, kind: output, shape index: {1}]
  %7 = xla_tuple %s5, %s6
  %s8 = sld [smem:[#allocation0]]
  $region38: #{res_block_forward.4} parent=0
    _
  %s10 = ssub.s32 1, %s8
  %s11 = scalar_select 0, %s10, %s8
  // Predicated region
  $region2: #{res_block_forward.4} parent=0 // pred_check
    _
  $region3: #{res_block_forward.4} parent=0 // pred_check_branch
    %13 = sbr.rel (0) target = $region5
  $region4: #{res_block_forward.4} parent=0 // pred_region
    _
  $region5: #{res_block_forward.4} parent=0 // pred_fallthru
    _
  // Predicated region
  $region6: #{res_block_forward.4} parent=0 // pred_check
    _
  $region7: #{res_block_forward.4} parent=0 // pred_check_branch
    %15 = sbr.rel (0) target = $region9
  $region8: #{res_block_forward.4} parent=0 // pred_region
    %s16 = sadd.s32 0, 1
    %s17 = smul.u32 25, %s16
    %p18 = scmp.lt.s32.totalorder %s17, 49
    %s19 = scalar_select %p18, %s17, 49
    %s20 = smul.addr %s19, 4
    %s21 = scalar_lea.vmem %s1, %s20
    %s22 = sadd.s32 0, 1
    %s23 = smul.u32 25, %s22
  $region9: #{res_block_forward.4} parent=0 // pred_fallthru
    _
  // Predicated region
  $region10: #{res_block_forward.4} parent=0 // pred_check
    _
  $region11: #{res_block_forward.4} parent=0 // pred_check_branch
    %25 = sbr.rel (0) target = $region13
  $region12: #{res_block_forward.4} parent=0 // pred_region
    _
  $region13: #{res_block_forward.4} parent=0 // pred_fallthru
    _
  // Predicated region
  $region14: #{res_block_forward.4} parent=0 // pred_check
    _
  $region15: #{res_block_forward.4} parent=0 // pred_check_branch
    %27 = sbr.rel (0) target = $region17
  $region16: #{res_block_forward.4} parent=0 // pred_region
    _
  $region17: #{res_block_forward.4} parent=0 // pred_fallthru
    _
  // Predicated region
  $region18: #{res_block_forward.4} parent=0 // pred_check
    _
  $region19: #{res_block_forward.4} parent=0 // pred_check_branch
    %29 = sbr.rel (0) target = $region21
  $region20: #{res_block_forward.4} parent=0 // pred_region
    _
  $region21: #{res_block_forward.4} parent=0 // pred_fallthru
    _
  %s30 = sadd.s32 0, 1
  %s31 = smul.u32 25, %s30
  %p32 = scmp.lt.s32.totalorder %s31, 49
  %s33 = scalar_select %p32, %s31, 49
  %s34 = smul.addr %s33, 4
  %s35 = scalar_lea.vmem %s1, %s34
  %s36 = sadd.s32 0, 1
  %s37 = smul.u32 25, %s36
  %p38 = scmp.lt.s32.totalorder %s37, 49
  %s39 = scalar_select %p38, %s37, 49
  %s40 = smul.addr %s39, 4
  %s41 = scalar_lea.vmem %s1, %s40
  %s42 = sadd.s32 0, 1
  %s43 = smul.u32 25, %s42
  %v45 = vld [vmem:[%s0] sm:$0xf]
  %v46 = vld [vmem:[%s0 + $0x4] sm:$0xf]
  %v47 = vld [vmem:[%s0 + $0x8] sm:$0xf]
  %v48 = vld [vmem:[%s0 + $0xc] sm:$0xf]
  %v49 = vld [vmem:[%s0 + $0x10] sm:$0xf]
  %v50 = vld [vmem:[%s0 + $0x14] sm:$0xf]
  %v51 = vld [vmem:[%s0 + $0x18] sm:$0xf]
  %v52 = vld [vmem:[%s0 + $0x1c] sm:$0xf]
  %v53 = vld [vmem:[%s0 + $0x20] sm:$0xf]
  %v54 = vld [vmem:[%s0 + $0x24] sm:$0xf]
  %v55 = vld [vmem:[%s0 + $0x28] sm:$0xf]
  %v56 = vld [vmem:[%s0 + $0x2c] sm:$0xf]
  %v57 = vld [vmem:[%s0 + $0x30] sm:$0xf]
  %v58 = vld [vmem:[%s0 + $0x34] sm:$0xf]
  %v59 = vld [vmem:[%s0 + $0x38] sm:$0xf]
  %v60 = vld [vmem:[%s0 + $0x3c] sm:$0xf]
  %v61 = vld [vmem:[%s0 + $0x40] sm:$0xf]
  %v62 = vld [vmem:[%s0 + $0x44] sm:$0xf]
  %v63 = vld [vmem:[%s0 + $0x48] sm:$0xf]
  %v64 = vld [vmem:[%s0 + $0x4c] sm:$0xf]
  %v65 = vld [vmem:[%s0 + $0x50] sm:$0xf]
  %v66 = vld [vmem:[%s0 + $0x54] sm:$0xf]
  %v67 = vld [vmem:[%s0 + $0x58] sm:$0xf]
  %v68 = vld [vmem:[%s0 + $0x5c] sm:$0xf]
  %v69 = vld [vmem:[%s0 + $0x60] sm:$0xf]
  %v70 = vunpack.c.l.bf16 %v45
  %v71 = vunpack.c.l.bf16 %v46
  %v72 = vunpack.c.l.bf16 %v47
  %v73 = vunpack.c.l.bf16 %v48
  %v74 = vunpack.c.l.bf16 %v49
  %v75 = vunpack.c.l.bf16 %v50
  %v76 = vunpack.c.l.bf16 %v51
  %v77 = vunpack.c.l.bf16 %v52
  %v78 = vunpack.c.l.bf16 %v53
  %v79 = vunpack.c.l.bf16 %v54
  %v80 = vunpack.c.l.bf16 %v55
  %v81 = vunpack.c.l.bf16 %v56
  %v82 = vunpack.c.l.bf16 %v57
  %v83 = vunpack.c.l.bf16 %v58
  %v84 = vunpack.c.l.bf16 %v59
  %v85 = vunpack.c.l.bf16 %v60
  %v86 = vunpack.c.l.bf16 %v61
  %v87 = vunpack.c.l.bf16 %v62
  %v88 = vunpack.c.l.bf16 %v63
  %v89 = vunpack.c.l.bf16 %v64
  %v90 = vunpack.c.l.bf16 %v65
  %v91 = vunpack.c.l.bf16 %v66
  %v92 = vunpack.c.l.bf16 %v67
  %v93 = vunpack.c.l.bf16 %v68
  %v94 = vunpack.c.l.bf16 %v69
  %v95 = vld [vmem:[%s41] sm:$0xf]
  %v96 = vld [vmem:[%s41 + $0x4] sm:$0xf]
  %v97 = vld [vmem:[%s41 + $0x8] sm:$0xf]
  %v98 = vunpack.c.l.bf16 %v95
  %v99 = vunpack.c.l.bf16 %v96
  %v100 = vunpack.c.l.bf16 %v97
  %v101 = vpack.c.bf16 %v71, %v70
  %v102 = vpack.c.bf16 %v73, %v72
  %v103 = vpack.c.bf16 %v75, %v74
  %v104 = vpack.c.bf16 %v77, %v76
  %v105 = vpack.c.bf16 %v79, %v78
  %v106 = vpack.c.bf16 %v81, %v80
  %v107 = vpack.c.bf16 %v83, %v82
  %v108 = vpack.c.bf16 %v85, %v84
  %v109 = vpack.c.bf16 %v87, %v86
  %v110 = vpack.c.bf16 %v89, %v88
  %v111 = vpack.c.bf16 %v91, %v90
  %v112 = vpack.c.bf16 %v93, %v92
  %v113 = vpack.c.bf16 %v94, %v94
  %v114 = vld [vmem:[%s3] sm:$0xf]
  %v115 = vld [vmem:[%s3 + $0x4] sm:$0xf]
  %v116 = vld [vmem:[%s3 + $0x8] sm:$0xf]
  %v117 = vld [vmem:[%s3 + $0xc] sm:$0xf]
  %v118 = vld [vmem:[%s3 + $0x10] sm:$0xf]
  %v119 = vld [vmem:[%s3 + $0x14] sm:$0xf]
  %v120 = vld [vmem:[%s3 + $0x18] sm:$0xf]
  %v121 = vld [vmem:[%s3 + $0x1c] sm:$0xf]
  %v122 = vld [vmem:[%s3 + $0x20] sm:$0xf]
  %v123 = vld [vmem:[%s3 + $0x24] sm:$0xf]
  %v124 = vld [vmem:[%s3 + $0x28] sm:$0xf]
  %v125 = vld [vmem:[%s3 + $0x2c] sm:$0xf]
  %v126 = vld [vmem:[%s3 + $0x30] sm:$0xf]
  %v127 = vld [vmem:[%s3 + $0x34] sm:$0xf]
  %v128 = vld [vmem:[%s3 + $0x38] sm:$0xf]
  %v129 = vld [vmem:[%s3 + $0x3c] sm:$0xf]
  %v130 = vpack.c.bf16 %v98, %v94
  %s131 = scalar_lea.vmem %s3, 64
  %v132 = vld [vmem:[%s131] sm:$0xf]
  %v133 = vld [vmem:[%s131 + $0x4] sm:$0xf]
  %v134 = vld [vmem:[%s131 + $0x8] sm:$0xf]
  %v135 = vld [vmem:[%s131 + $0xc] sm:$0xf]
  %v136 = vld [vmem:[%s131 + $0x10] sm:$0xf]
  %v137 = vld [vmem:[%s131 + $0x14] sm:$0xf]
  %v138 = vld [vmem:[%s131 + $0x18] sm:$0xf]
  %v139 = vld [vmem:[%s131 + $0x1c] sm:$0xf]
  %v140 = vld [vmem:[%s131 + $0x20] sm:$0xf]
  %v141 = vld [vmem:[%s131 + $0x24] sm:$0xf]
  %v142 = vld [vmem:[%s131 + $0x28] sm:$0xf]
  %v143 = vld [vmem:[%s131 + $0x2c] sm:$0xf]
  %v144 = vld [vmem:[%s131 + $0x30] sm:$0xf]
  %v145 = vld [vmem:[%s131 + $0x34] sm:$0xf]
  %v146 = vld [vmem:[%s131 + $0x38] sm:$0xf]
  %v147 = vld [vmem:[%s131 + $0x3c] sm:$0xf]
  %vm148 = vsmask.f32 7424
  %v150 = vshrl.u32 %v101, 16
  %v152 = vshll.u32 %v101, 16
  %v154 = vrot.slane %v152, 1
  %v155 = vor.u32 %v150, %v154
  %v157 = vshll.u32 %v102, 16
  %v159 = vrot.slane %v157, 1
  %v160 = vsel %vm148, %v155, %v159
  %v161 = vshrl.u32 %v102, 16
  %v163 = vor.u32 %v161, %v159
  %v165 = vshll.u32 %v103, 16
  %v167 = vrot.slane %v165, 1
  %v168 = vsel %vm148, %v163, %v167
  %v169 = vshrl.u32 %v103, 16
  %v171 = vor.u32 %v169, %v167
  %v173 = vshll.u32 %v104, 16
  %v175 = vrot.slane %v173, 1
  %v176 = vsel %vm148, %v171, %v175
  %v177 = vshrl.u32 %v104, 16
  %v179 = vor.u32 %v177, %v175
  %v181 = vshll.u32 %v105, 16
  %v183 = vrot.slane %v181, 1
  %v184 = vsel %vm148, %v179, %v183
  %v185 = vshrl.u32 %v105, 16
  %v187 = vor.u32 %v185, %v183
  %v189 = vshll.u32 %v106, 16
  %v191 = vrot.slane %v189, 1
  %v192 = vsel %vm148, %v187, %v191
  %v193 = vshrl.u32 %v106, 16
  %v195 = vor.u32 %v193, %v191
  %v197 = vshll.u32 %v107, 16
  %v199 = vrot.slane %v197, 1
  %v200 = vsel %vm148, %v195, %v199
  %v201 = vshrl.u32 %v107, 16
  %v203 = vor.u32 %v201, %v199
  %v205 = vshll.u32 %v108, 16
  %v207 = vrot.slane %v205, 1
  %v208 = vsel %vm148, %v203, %v207
  %v209 = vshrl.u32 %v108, 16
  %v211 = vor.u32 %v209, %v207
  %v213 = vshll.u32 %v109, 16
  %v215 = vrot.slane %v213, 1
  %v216 = vsel %vm148, %v211, %v215
  %v217 = vshrl.u32 %v109, 16
  %v219 = vor.u32 %v217, %v215
  %v221 = vshll.u32 %v110, 16
  %v223 = vrot.slane %v221, 1
  %v224 = vsel %vm148, %v219, %v223
  %v225 = vshrl.u32 %v110, 16
  %v227 = vor.u32 %v225, %v223
  %v229 = vshll.u32 %v111, 16
  %v231 = vrot.slane %v229, 1
  %v232 = vsel %vm148, %v227, %v231
  %v233 = vshrl.u32 %v111, 16
  %v235 = vor.u32 %v233, %v231
  %v237 = vshll.u32 %v112, 16
  %v239 = vrot.slane %v237, 1
  %v240 = vsel %vm148, %v235, %v239
  %v241 = vshrl.u32 %v112, 16
  %v243 = vor.u32 %v241, %v239
  %v245 = vshll.u32 %v130, 16
  %v247 = vrot.slane %v245, 1
  %v248 = vsel %vm148, %v243, %v247
  %v249 = vshrl.u32 %v130, 16
  %v251 = vor.u32 %v249, %v247
  %v281 = vunpack.c.l.b16 %v132
  %v282 = vunpack.c.l.b16 %v133
  %v283 = vunpack.c.l.b16 %v134
  %v284 = vunpack.c.l.b16 %v135
  %v285 = vunpack.c.l.b16 %v136
  %v286 = vunpack.c.l.b16 %v137
  %v287 = vunpack.c.l.b16 %v138
  %v288 = vunpack.c.l.b16 %v139
  %v289 = vunpack.c.l.b16 %v140
  %v290 = vunpack.c.l.b16 %v141
  %v291 = vunpack.c.l.b16 %v142
  %v292 = vunpack.c.l.b16 %v143
  %v293 = vunpack.c.l.b16 %v144
  %v294 = vunpack.c.l.b16 %v145
  %v295 = vunpack.c.l.b16 %v146
  %v296 = vunpack.c.l.b16 %v147
  %v297 = vpack.c.b16 %v282, %v281
  %v298 = vpack.c.b16 %v284, %v283
  %v299 = vpack.c.b16 %v286, %v285
  %v300 = vpack.c.b16 %v288, %v287
  %v301 = vpack.c.b16 %v290, %v289
  %v302 = vpack.c.b16 %v292, %v291
  %v303 = vpack.c.b16 %v294, %v293
  %v304 = vpack.c.b16 %v296, %v295
  %313 = vmatprep.subr.bf16.mxu0 0
  %314 = vmatpush1.bf16.msra.mxu0 %v304
  %315 = vmatprep.subr.bf16.mxu0 0
  %316 = vmatpush1.bf16.msra.mxu0 %v303
  %317 = vmatprep.subr.bf16.mxu0 0
  %318 = vmatpush1.bf16.msra.mxu0 %v302
  %319 = vmatprep.subr.bf16.mxu0 0
  %320 = vmatpush1.bf16.msra.mxu0 %v301
  %321 = vmatprep.subr.bf16.mxu0 0
  %322 = vmatpush1.bf16.msra.mxu0 %v300
  %323 = vmatprep.subr.bf16.mxu0 0
  %324 = vmatpush1.bf16.msra.mxu0 %v299
  %325 = vmatprep.subr.bf16.mxu0 0
  %326 = vmatpush1.bf16.msra.mxu0 %v298
  %327 = vmatprep.subr.bf16.mxu0 0
  %328 = vmatpush1.bf16.msra.mxu0 %v297
  %329 = vmatprep.subr.bf16.mxu0 0
  %330 = vmatpush2.bf16.msra.mxu0 0
  %331 = vmatprep.subr.bf16.mxu0 0
  %332 = vmatpush2.bf16.msra.mxu0 0
  %333 = vmatprep.subr.bf16.mxu0 0
  %334 = vmatpush2.bf16.msra.mxu0 0
  %335 = vmatprep.subr.bf16.mxu0 0
  %336 = vmatpush2.bf16.msra.mxu0 0
  %337 = vmatprep.subr.bf16.mxu0 0
  %338 = vmatpush2.bf16.msra.mxu0 0
  %339 = vmatprep.subr.bf16.mxu0 0
  %340 = vmatpush2.bf16.msra.mxu0 0
  %341 = vmatprep.subr.bf16.mxu0 0
  %342 = vmatpush2.bf16.msra.mxu0 0
  %343 = vmatprep.subr.bf16.mxu0 0
  %344 = vmatpush2.bf16.msra.mxu0 0
  %345 = vmatprep.mubr.bf16.mxu0 0
  %346 = vmatmul.mubr.bf16.gmra.mxu0 %v160
  %v347 = vpop.f32.mrf.mxu0
  %v348 = vadd.f32 0.0, %v347
  %v349 = vpop.f32.mrf.mxu0
  %v350 = vpop.f32.mrf.mxu0
  %v351 = vadd.f32 0.0, %v350
  %v352 = vpop.f32.mrf.mxu0
  %353 = vmatprep.mubr.bf16.mxu0 0
  %354 = vmatmul.mubr.bf16.gmra.mxu0 %v168
  %v355 = vpop.f32.mrf.mxu0
  %v356 = vadd.f32 0.0, %v355
  %v357 = vpop.f32.mrf.mxu0
  %v358 = vpop.f32.mrf.mxu0
  %v359 = vadd.f32 0.0, %v358
  %v360 = vpop.f32.mrf.mxu0
  %361 = vmatprep.mubr.bf16.mxu0 0
  %362 = vmatmul.mubr.bf16.gmra.mxu0 %v176
  %v363 = vpop.f32.mrf.mxu0
  %v364 = vadd.f32 0.0, %v363
  %v365 = vpop.f32.mrf.mxu0
  %v366 = vpop.f32.mrf.mxu0
  %v367 = vadd.f32 0.0, %v366
  %v368 = vpop.f32.mrf.mxu0
  %369 = vmatprep.mubr.bf16.mxu0 0
  %370 = vmatmul.mubr.bf16.gmra.mxu0 %v184
  %v371 = vpop.f32.mrf.mxu0
  %v372 = vadd.f32 0.0, %v371
  %v373 = vpop.f32.mrf.mxu0
  %v374 = vpop.f32.mrf.mxu0
  %v375 = vadd.f32 0.0, %v374
  %v376 = vpop.f32.mrf.mxu0
  %377 = vmatprep.mubr.bf16.mxu0 0
  %378 = vmatmul.mubr.bf16.gmra.mxu0 %v192
  %v379 = vpop.f32.mrf.mxu0
  %v380 = vadd.f32 0.0, %v379
  %v381 = vpop.f32.mrf.mxu0
  %v382 = vpop.f32.mrf.mxu0
  %v383 = vadd.f32 0.0, %v382
  %v384 = vpop.f32.mrf.mxu0
  %385 = vmatprep.mubr.bf16.mxu0 0
  %386 = vmatmul.mubr.bf16.gmra.mxu0 %v200
  %v387 = vpop.f32.mrf.mxu0
  %v388 = vadd.f32 0.0, %v387
  %v389 = vpop.f32.mrf.mxu0
  %v390 = vpop.f32.mrf.mxu0
  %v391 = vadd.f32 0.0, %v390
  %v392 = vpop.f32.mrf.mxu0
  %393 = vmatprep.mubr.bf16.mxu0 0
  %394 = vmatmul.mubr.bf16.gmra.mxu0 %v208
  %v395 = vpop.f32.mrf.mxu0
  %v396 = vadd.f32 0.0, %v395
  %v397 = vpop.f32.mrf.mxu0
  %v398 = vpop.f32.mrf.mxu0
  %v399 = vadd.f32 0.0, %v398
  %v400 = vpop.f32.mrf.mxu0
  %401 = vmatprep.mubr.bf16.mxu0 0
  %402 = vmatmul.mubr.bf16.gmra.mxu0 %v216
  %v403 = vpop.f32.mrf.mxu0
  %v404 = vadd.f32 0.0, %v403
  %v405 = vpop.f32.mrf.mxu0
  %v406 = vpop.f32.mrf.mxu0
  %v407 = vadd.f32 0.0, %v406
  %v408 = vpop.f32.mrf.mxu0
  %409 = vmatprep.mubr.bf16.mxu0 0
  %410 = vmatmul.mubr.bf16.gmra.mxu0 %v224
  %v411 = vpop.f32.mrf.mxu0
  %v412 = vadd.f32 0.0, %v411
  %v413 = vpop.f32.mrf.mxu0
  %v414 = vpop.f32.mrf.mxu0
  %v415 = vadd.f32 0.0, %v414
  %v416 = vpop.f32.mrf.mxu0
  %417 = vmatprep.mubr.bf16.mxu0 0
  %418 = vmatmul.mubr.bf16.gmra.mxu0 %v232
  %v419 = vpop.f32.mrf.mxu0
  %v420 = vadd.f32 0.0, %v419
  %v421 = vpop.f32.mrf.mxu0
  %v422 = vpop.f32.mrf.mxu0
  %v423 = vadd.f32 0.0, %v422
  %v424 = vpop.f32.mrf.mxu0
  %425 = vmatprep.mubr.bf16.mxu0 0
  %426 = vmatmul.mubr.bf16.gmra.mxu0 %v240
  %v427 = vpop.f32.mrf.mxu0
  %v428 = vadd.f32 0.0, %v427
  %v429 = vpop.f32.mrf.mxu0
  %v430 = vpop.f32.mrf.mxu0
  %v431 = vadd.f32 0.0, %v430
  %v432 = vpop.f32.mrf.mxu0
  %433 = vmatprep.mubr.bf16.mxu0 0
  %434 = vmatmul.mubr.bf16.gmra.mxu0 %v248
  %v435 = vpop.f32.mrf.mxu0
  %v436 = vadd.f32 0.0, %v435
  %v437 = vpop.f32.mrf.mxu0
  %v438 = vpop.f32.mrf.mxu0
  %v439 = vadd.f32 0.0, %v438
  %v440 = vpop.f32.mrf.mxu0
  %441 = vmatprep.mubr.bf16.mxu0 0
  %442 = vmatmul.mubr.bf16.gmra.mxu0 %v251
  %v443 = vpop.f32.mrf.mxu0
  %v444 = vadd.f32 0.0, %v443
  %v445 = vpop.f32.mrf.mxu0
  %v446 = vpop.f32.mrf.mxu0
  %v447 = vpop.f32.mrf.mxu0
  %448 = vdwg.mxu0
  %v465 = vunpack.c.l.b16 %v114
  %v466 = vunpack.c.l.b16 %v115
  %v467 = vunpack.c.l.b16 %v116
  %v468 = vunpack.c.l.b16 %v117
  %v469 = vunpack.c.l.b16 %v118
  %v470 = vunpack.c.l.b16 %v119
  %v471 = vunpack.c.l.b16 %v120
  %v472 = vunpack.c.l.b16 %v121
  %v473 = vunpack.c.l.b16 %v122
  %v474 = vunpack.c.l.b16 %v123
  %v475 = vunpack.c.l.b16 %v124
  %v476 = vunpack.c.l.b16 %v125
  %v477 = vunpack.c.l.b16 %v126
  %v478 = vunpack.c.l.b16 %v127
  %v479 = vunpack.c.l.b16 %v128
  %v480 = vunpack.c.l.b16 %v129
  %v481 = vpack.c.b16 %v466, %v465
  %v482 = vpack.c.b16 %v468, %v467
  %v483 = vpack.c.b16 %v470, %v469
  %v484 = vpack.c.b16 %v472, %v471
  %v485 = vpack.c.b16 %v474, %v473
  %v486 = vpack.c.b16 %v476, %v475
  %v487 = vpack.c.b16 %v478, %v477
  %v488 = vpack.c.b16 %v480, %v479
  %497 = vmatprep.subr.bf16.mxu0 0
  %498 = vmatpush1.bf16.msra.mxu0 %v488
  %499 = vmatprep.subr.bf16.mxu0 0
  %500 = vmatpush1.bf16.msra.mxu0 %v487
  %501 = vmatprep.subr.bf16.mxu0 0
  %502 = vmatpush1.bf16.msra.mxu0 %v486
  %503 = vmatprep.subr.bf16.mxu0 0
  %504 = vmatpush1.bf16.msra.mxu0 %v485
  %505 = vmatprep.subr.bf16.mxu0 0
  %506 = vmatpush1.bf16.msra.mxu0 %v484
  %507 = vmatprep.subr.bf16.mxu0 0
  %508 = vmatpush1.bf16.msra.mxu0 %v483
  %509 = vmatprep.subr.bf16.mxu0 0
  %510 = vmatpush1.bf16.msra.mxu0 %v482
  %511 = vmatprep.subr.bf16.mxu0 0
  %512 = vmatpush1.bf16.msra.mxu0 %v481
  %513 = vmatprep.subr.bf16.mxu0 0
  %514 = vmatpush2.bf16.msra.mxu0 0
  %515 = vmatprep.subr.bf16.mxu0 0
  %516 = vmatpush2.bf16.msra.mxu0 0
  %517 = vmatprep.subr.bf16.mxu0 0
  %518 = vmatpush2.bf16.msra.mxu0 0
  %519 = vmatprep.subr.bf16.mxu0 0
  %520 = vmatpush2.bf16.msra.mxu0 0
  %521 = vmatprep.subr.bf16.mxu0 0
  %522 = vmatpush2.bf16.msra.mxu0 0
  %523 = vmatprep.subr.bf16.mxu0 0
  %524 = vmatpush2.bf16.msra.mxu0 0
  %525 = vmatprep.subr.bf16.mxu0 0
  %526 = vmatpush2.bf16.msra.mxu0 0
  %527 = vmatprep.subr.bf16.mxu0 0
  %528 = vmatpush2.bf16.msra.mxu0 0
  %529 = vmatprep.mubr.bf16.mxu0 0
  %530 = vmatmul.mubr.bf16.gmra.mxu0 %v101
  %v531 = vpop.f32.mrf.mxu0
  %v532 = vadd.f32 %v348, %v531
  %v533 = vpop.f32.mrf.mxu0
  %v534 = vpop.f32.mrf.mxu0
  %v535 = vadd.f32 %v351, %v534
  %v536 = vpop.f32.mrf.mxu0
  %537 = vmatprep.mubr.bf16.mxu0 0
  %538 = vmatmul.mubr.bf16.gmra.mxu0 %v102
  %v539 = vpop.f32.mrf.mxu0
  %v540 = vadd.f32 %v356, %v539
  %v541 = vpop.f32.mrf.mxu0
  %v542 = vpop.f32.mrf.mxu0
  %v543 = vadd.f32 %v359, %v542
  %v544 = vpop.f32.mrf.mxu0
  %545 = vmatprep.mubr.bf16.mxu0 0
  %546 = vmatmul.mubr.bf16.gmra.mxu0 %v103
  %v547 = vpop.f32.mrf.mxu0
  %v548 = vadd.f32 %v364, %v547
  %v549 = vpop.f32.mrf.mxu0
  %v550 = vpop.f32.mrf.mxu0
  %v551 = vadd.f32 %v367, %v550
  %v552 = vpop.f32.mrf.mxu0
  %553 = vmatprep.mubr.bf16.mxu0 0
  %554 = vmatmul.mubr.bf16.gmra.mxu0 %v104
  %v555 = vpop.f32.mrf.mxu0
  %v556 = vadd.f32 %v372, %v555
  %v557 = vpop.f32.mrf.mxu0
  %v558 = vpop.f32.mrf.mxu0
  %v559 = vadd.f32 %v375, %v558
  %v560 = vpop.f32.mrf.mxu0
  %561 = vmatprep.mubr.bf16.mxu0 0
  %562 = vmatmul.mubr.bf16.gmra.mxu0 %v105
  %v563 = vpop.f32.mrf.mxu0
  %v564 = vadd.f32 %v380, %v563
  %v565 = vpop.f32.mrf.mxu0
  %v566 = vpop.f32.mrf.mxu0
  %v567 = vadd.f32 %v383, %v566
  %v568 = vpop.f32.mrf.mxu0
  %569 = vmatprep.mubr.bf16.mxu0 0
  %570 = vmatmul.mubr.bf16.gmra.mxu0 %v106
  %v571 = vpop.f32.mrf.mxu0
  %v572 = vadd.f32 %v388, %v571
  %v573 = vpop.f32.mrf.mxu0
  %v574 = vpop.f32.mrf.mxu0
  %v575 = vadd.f32 %v391, %v574
  %v576 = vpop.f32.mrf.mxu0
  %577 = vmatprep.mubr.bf16.mxu0 0
  %578 = vmatmul.mubr.bf16.gmra.mxu0 %v107
  %v579 = vpop.f32.mrf.mxu0
  %v580 = vadd.f32 %v396, %v579
  %v581 = vpop.f32.mrf.mxu0
  %v582 = vpop.f32.mrf.mxu0
  %v583 = vadd.f32 %v399, %v582
  %v584 = vpop.f32.mrf.mxu0
  %585 = vmatprep.mubr.bf16.mxu0 0
  %586 = vmatmul.mubr.bf16.gmra.mxu0 %v108
  %v587 = vpop.f32.mrf.mxu0
  %v588 = vadd.f32 %v404, %v587
  %v589 = vpop.f32.mrf.mxu0
  %v590 = vpop.f32.mrf.mxu0
  %v591 = vadd.f32 %v407, %v590
  %v592 = vpop.f32.mrf.mxu0
  %593 = vmatprep.mubr.bf16.mxu0 0
  %594 = vmatmul.mubr.bf16.gmra.mxu0 %v109
  %v595 = vpop.f32.mrf.mxu0
  %v596 = vadd.f32 %v412, %v595
  %v597 = vpop.f32.mrf.mxu0
  %v598 = vpop.f32.mrf.mxu0
  %v599 = vadd.f32 %v415, %v598
  %v600 = vpop.f32.mrf.mxu0
  %601 = vmatprep.mubr.bf16.mxu0 0
  %602 = vmatmul.mubr.bf16.gmra.mxu0 %v110
  %v603 = vpop.f32.mrf.mxu0
  %v604 = vadd.f32 %v420, %v603
  %v605 = vpop.f32.mrf.mxu0
  %v606 = vpop.f32.mrf.mxu0
  %v607 = vadd.f32 %v423, %v606
  %v608 = vpop.f32.mrf.mxu0
  %609 = vmatprep.mubr.bf16.mxu0 0
  %610 = vmatmul.mubr.bf16.gmra.mxu0 %v111
  %v611 = vpop.f32.mrf.mxu0
  %v612 = vadd.f32 %v428, %v611
  %v613 = vpop.f32.mrf.mxu0
  %v614 = vpop.f32.mrf.mxu0
  %v615 = vadd.f32 %v431, %v614
  %v616 = vpop.f32.mrf.mxu0
  %617 = vmatprep.mubr.bf16.mxu0 0
  %618 = vmatmul.mubr.bf16.gmra.mxu0 %v112
  %v619 = vpop.f32.mrf.mxu0
  %v620 = vadd.f32 %v436, %v619
  %v621 = vpop.f32.mrf.mxu0
  %v622 = vpop.f32.mrf.mxu0
  %v623 = vadd.f32 %v439, %v622
  %v624 = vpop.f32.mrf.mxu0
  %625 = vmatprep.mubr.bf16.mxu0 0
  %626 = vmatmul.mubr.bf16.gmra.mxu0 %v113
  %v627 = vpop.f32.mrf.mxu0
  %v628 = vadd.f32 %v444, %v627
  %v629 = vpop.f32.mrf.mxu0
  %v630 = vpop.f32.mrf.mxu0
  %v631 = vpop.f32.mrf.mxu0
  %632 = vdwg.mxu0
  %s633 = scalar_lea.vmem %s3, 128
  %v634 = vld [vmem:[%s633] sm:$0xf]
  %v635 = vld [vmem:[%s633 + $0x4] sm:$0xf]
  %v636 = vld [vmem:[%s633 + $0x8] sm:$0xf]
  %v637 = vld [vmem:[%s633 + $0xc] sm:$0xf]
  %v638 = vld [vmem:[%s633 + $0x10] sm:$0xf]
  %v639 = vld [vmem:[%s633 + $0x14] sm:$0xf]
  %v640 = vld [vmem:[%s633 + $0x18] sm:$0xf]
  %v641 = vld [vmem:[%s633 + $0x1c] sm:$0xf]
  %v642 = vld [vmem:[%s633 + $0x20] sm:$0xf]
  %v643 = vld [vmem:[%s633 + $0x24] sm:$0xf]
  %v644 = vld [vmem:[%s633 + $0x28] sm:$0xf]
  %v645 = vld [vmem:[%s633 + $0x2c] sm:$0xf]
  %v646 = vld [vmem:[%s633 + $0x30] sm:$0xf]
  %v647 = vld [vmem:[%s633 + $0x34] sm:$0xf]
  %v648 = vld [vmem:[%s633 + $0x38] sm:$0xf]
  %v649 = vld [vmem:[%s633 + $0x3c] sm:$0xf]
  %vm663 = vcmask 1046528
  %v664 = vrot.slane %v101, 1
  %v665 = vrot.slane %v102, 1
  %v666 = vsel %vm663, %v664, %v665
  %v667 = vrot.slane %v103, 1
  %v668 = vsel %vm663, %v665, %v667
  %v669 = vrot.slane %v104, 1
  %v670 = vsel %vm663, %v667, %v669
  %v671 = vrot.slane %v105, 1
  %v672 = vsel %vm663, %v669, %v671
  %v673 = vrot.slane %v106, 1
  %v674 = vsel %vm663, %v671, %v673
  %v675 = vrot.slane %v107, 1
  %v676 = vsel %vm663, %v673, %v675
  %v677 = vrot.slane %v108, 1
  %v678 = vsel %vm663, %v675, %v677
  %v679 = vrot.slane %v109, 1
  %v680 = vsel %vm663, %v677, %v679
  %v681 = vrot.slane %v110, 1
  %v682 = vsel %vm663, %v679, %v681
  %v683 = vrot.slane %v111, 1
  %v684 = vsel %vm663, %v681, %v683
  %v685 = vrot.slane %v112, 1
  %v686 = vsel %vm663, %v683, %v685
  %v687 = vrot.slane %v130, 1
  %v688 = vsel %vm663, %v685, %v687
  %v718 = vunpack.c.l.b16 %v634
  %v719 = vunpack.c.l.b16 %v635
  %v720 = vunpack.c.l.b16 %v636
  %v721 = vunpack.c.l.b16 %v637
  %v722 = vunpack.c.l.b16 %v638
  %v723 = vunpack.c.l.b16 %v639
  %v724 = vunpack.c.l.b16 %v640
  %v725 = vunpack.c.l.b16 %v641
  %v726 = vunpack.c.l.b16 %v642
  %v727 = vunpack.c.l.b16 %v643
  %v728 = vunpack.c.l.b16 %v644
  %v729 = vunpack.c.l.b16 %v645
  %v730 = vunpack.c.l.b16 %v646
  %v731 = vunpack.c.l.b16 %v647
  %v732 = vunpack.c.l.b16 %v648
  %v733 = vunpack.c.l.b16 %v649
  %v734 = vpack.c.b16 %v719, %v718
  %v735 = vpack.c.b16 %v721, %v720
  %v736 = vpack.c.b16 %v723, %v722
  %v737 = vpack.c.b16 %v725, %v724
  %v738 = vpack.c.b16 %v727, %v726
  %v739 = vpack.c.b16 %v729, %v728
  %v740 = vpack.c.b16 %v731, %v730
  %v741 = vpack.c.b16 %v733, %v732
  %750 = vmatprep.subr.bf16.mxu0 0
  %751 = vmatpush1.bf16.msra.mxu0 %v741
  %752 = vmatprep.subr.bf16.mxu0 0
  %753 = vmatpush1.bf16.msra.mxu0 %v740
  %754 = vmatprep.subr.bf16.mxu0 0
  %755 = vmatpush1.bf16.msra.mxu0 %v739
  %756 = vmatprep.subr.bf16.mxu0 0
  %757 = vmatpush1.bf16.msra.mxu0 %v738
  %758 = vmatprep.subr.bf16.mxu0 0
  %759 = vmatpush1.bf16.msra.mxu0 %v737
  %760 = vmatprep.subr.bf16.mxu0 0
  %761 = vmatpush1.bf16.msra.mxu0 %v736
  %762 = vmatprep.subr.bf16.mxu0 0
  %763 = vmatpush1.bf16.msra.mxu0 %v735
  %764 = vmatprep.subr.bf16.mxu0 0
  %765 = vmatpush1.bf16.msra.mxu0 %v734
  %766 = vmatprep.subr.bf16.mxu0 0
  %767 = vmatpush2.bf16.msra.mxu0 0
  %768 = vmatprep.subr.bf16.mxu0 0
  %769 = vmatpush2.bf16.msra.mxu0 0
  %770 = vmatprep.subr.bf16.mxu0 0
  %771 = vmatpush2.bf16.msra.mxu0 0
  %772 = vmatprep.subr.bf16.mxu0 0
  %773 = vmatpush2.bf16.msra.mxu0 0
  %774 = vmatprep.subr.bf16.mxu0 0
  %775 = vmatpush2.bf16.msra.mxu0 0
  %776 = vmatprep.subr.bf16.mxu0 0
  %777 = vmatpush2.bf16.msra.mxu0 0
  %778 = vmatprep.subr.bf16.mxu0 0
  %779 = vmatpush2.bf16.msra.mxu0 0
  %780 = vmatprep.subr.bf16.mxu0 0
  %781 = vmatpush2.bf16.msra.mxu0 0
  %782 = vmatprep.mubr.bf16.mxu0 0
  %783 = vmatmul.mubr.bf16.gmra.mxu0 %v666
  %v784 = vpop.f32.mrf.mxu0
  %v785 = vadd.f32 0.0, %v784
  %v786 = vpop.f32.mrf.mxu0
  %v787 = vpop.f32.mrf.mxu0
  %v788 = vadd.f32 0.0, %v787
  %v789 = vpop.f32.mrf.mxu0
  %790 = vmatprep.mubr.bf16.mxu0 0
  %791 = vmatmul.mubr.bf16.gmra.mxu0 %v668
  %v792 = vpop.f32.mrf.mxu0
  %v793 = vadd.f32 0.0, %v792
  %v794 = vpop.f32.mrf.mxu0
  %v795 = vpop.f32.mrf.mxu0
  %v796 = vadd.f32 0.0, %v795
  %v797 = vpop.f32.mrf.mxu0
  %798 = vmatprep.mubr.bf16.mxu0 0
  %799 = vmatmul.mubr.bf16.gmra.mxu0 %v670
  %v800 = vpop.f32.mrf.mxu0
  %v801 = vadd.f32 0.0, %v800
  %v802 = vpop.f32.mrf.mxu0
  %v803 = vpop.f32.mrf.mxu0
  %v804 = vadd.f32 0.0, %v803
  %v805 = vpop.f32.mrf.mxu0
  %806 = vmatprep.mubr.bf16.mxu0 0
  %807 = vmatmul.mubr.bf16.gmra.mxu0 %v672
  %v808 = vpop.f32.mrf.mxu0
  %v809 = vadd.f32 0.0, %v808
  %v810 = vpop.f32.mrf.mxu0
  %v811 = vpop.f32.mrf.mxu0
  %v812 = vadd.f32 0.0, %v811
  %v813 = vpop.f32.mrf.mxu0
  %814 = vmatprep.mubr.bf16.mxu0 0
  %815 = vmatmul.mubr.bf16.gmra.mxu0 %v674
  %v816 = vpop.f32.mrf.mxu0
  %v817 = vadd.f32 0.0, %v816
  %v818 = vpop.f32.mrf.mxu0
  %v819 = vpop.f32.mrf.mxu0
  %v820 = vadd.f32 0.0, %v819
  %v821 = vpop.f32.mrf.mxu0
  %822 = vmatprep.mubr.bf16.mxu0 0
  %823 = vmatmul.mubr.bf16.gmra.mxu0 %v676
  %v824 = vpop.f32.mrf.mxu0
  %v825 = vadd.f32 0.0, %v824
  %v826 = vpop.f32.mrf.mxu0
  %v827 = vpop.f32.mrf.mxu0
  %v828 = vadd.f32 0.0, %v827
  %v829 = vpop.f32.mrf.mxu0
  %830 = vmatprep.mubr.bf16.mxu0 0
  %831 = vmatmul.mubr.bf16.gmra.mxu0 %v678
  %v832 = vpop.f32.mrf.mxu0
  %v833 = vadd.f32 0.0, %v832
  %v834 = vpop.f32.mrf.mxu0
  %v835 = vpop.f32.mrf.mxu0
  %v836 = vadd.f32 0.0, %v835
  %v837 = vpop.f32.mrf.mxu0
  %838 = vmatprep.mubr.bf16.mxu0 0
  %839 = vmatmul.mubr.bf16.gmra.mxu0 %v680
  %v840 = vpop.f32.mrf.mxu0
  %v841 = vadd.f32 0.0, %v840
  %v842 = vpop.f32.mrf.mxu0
  %v843 = vpop.f32.mrf.mxu0
  %v844 = vadd.f32 0.0, %v843
  %v845 = vpop.f32.mrf.mxu0
  %846 = vmatprep.mubr.bf16.mxu0 0
  %847 = vmatmul.mubr.bf16.gmra.mxu0 %v682
  %v848 = vpop.f32.mrf.mxu0
  %v849 = vadd.f32 0.0, %v848
  %v850 = vpop.f32.mrf.mxu0
  %v851 = vpop.f32.mrf.mxu0
  %v852 = vadd.f32 0.0, %v851
  %v853 = vpop.f32.mrf.mxu0
  %854 = vmatprep.mubr.bf16.mxu0 0
  %855 = vmatmul.mubr.bf16.gmra.mxu0 %v684
  %v856 = vpop.f32.mrf.mxu0
  %v857 = vadd.f32 0.0, %v856
  %v858 = vpop.f32.mrf.mxu0
  %v859 = vpop.f32.mrf.mxu0
  %v860 = vadd.f32 0.0, %v859
  %v861 = vpop.f32.mrf.mxu0
  %862 = vmatprep.mubr.bf16.mxu0 0
  %863 = vmatmul.mubr.bf16.gmra.mxu0 %v686
  %v864 = vpop.f32.mrf.mxu0
  %v865 = vadd.f32 0.0, %v864
  %v866 = vpop.f32.mrf.mxu0
  %v867 = vpop.f32.mrf.mxu0
  %v868 = vadd.f32 0.0, %v867
  %v869 = vpop.f32.mrf.mxu0
  %870 = vmatprep.mubr.bf16.mxu0 0
  %871 = vmatmul.mubr.bf16.gmra.mxu0 %v688
  %v872 = vpop.f32.mrf.mxu0
  %v873 = vadd.f32 0.0, %v872
  %v874 = vpop.f32.mrf.mxu0
  %v875 = vpop.f32.mrf.mxu0
  %v876 = vadd.f32 0.0, %v875
  %v877 = vpop.f32.mrf.mxu0
  %878 = vmatprep.mubr.bf16.mxu0 0
  %879 = vmatmul.mubr.bf16.gmra.mxu0 %v687
  %v880 = vpop.f32.mrf.mxu0
  %v881 = vadd.f32 0.0, %v880
  %v882 = vpop.f32.mrf.mxu0
  %v883 = vpop.f32.mrf.mxu0
  %v884 = vpop.f32.mrf.mxu0
  %885 = vdwg.mxu0
  %v886 = vadd.f32 %v532, %v785
  %v887 = vadd.f32 %v535, %v788
  %v888 = vadd.f32 %v540, %v793
  %v889 = vadd.f32 %v543, %v796
  %v890 = vadd.f32 %v548, %v801
  %v891 = vadd.f32 %v551, %v804
  %v892 = vadd.f32 %v556, %v809
  %v893 = vadd.f32 %v559, %v812
  %v894 = vadd.f32 %v564, %v817
  %v895 = vadd.f32 %v567, %v820
  %v896 = vadd.f32 %v572, %v825
  %v897 = vadd.f32 %v575, %v828
  %v898 = vadd.f32 %v580, %v833
  %v899 = vadd.f32 %v583, %v836
  %v900 = vadd.f32 %v588, %v841
  %v901 = vadd.f32 %v591, %v844
  %v902 = vadd.f32 %v596, %v849
  %v903 = vadd.f32 %v599, %v852
  %v904 = vadd.f32 %v604, %v857
  %v905 = vadd.f32 %v607, %v860
  %v906 = vadd.f32 %v612, %v865
  %v907 = vadd.f32 %v615, %v868
  %v908 = vadd.f32 %v620, %v873
  %v909 = vadd.f32 %v623, %v876
  %v910 = vadd.f32 %v628, %v881
  %v911 = vpack.c.bf16 %v72, %v71
  %v912 = vpack.c.bf16 %v74, %v73
  %v913 = vpack.c.bf16 %v76, %v75
  %v914 = vpack.c.bf16 %v78, %v77
  %v915 = vpack.c.bf16 %v80, %v79
  %v916 = vpack.c.bf16 %v82, %v81
  %v917 = vpack.c.bf16 %v84, %v83
  %v918 = vpack.c.bf16 %v86, %v85
  %v919 = vpack.c.bf16 %v88, %v87
  %v920 = vpack.c.bf16 %v90, %v89
  %v921 = vpack.c.bf16 %v92, %v91
  %v922 = vpack.c.bf16 %v94, %v93
  %v923 = vpack.c.bf16 %v99, %v98
  %s924 = scalar_lea.vmem %s3, 192
  %v925 = vld [vmem:[%s924] sm:$0xf]
  %v926 = vld [vmem:[%s924 + $0x4] sm:$0xf]
  %v927 = vld [vmem:[%s924 + $0x8] sm:$0xf]
  %v928 = vld [vmem:[%s924 + $0xc] sm:$0xf]
  %v929 = vld [vmem:[%s924 + $0x10] sm:$0xf]
  %v930 = vld [vmem:[%s924 + $0x14] sm:$0xf]
  %v931 = vld [vmem:[%s924 + $0x18] sm:$0xf]
  %v932 = vld [vmem:[%s924 + $0x1c] sm:$0xf]
  %v933 = vld [vmem:[%s924 + $0x20] sm:$0xf]
  %v934 = vld [vmem:[%s924 + $0x24] sm:$0xf]
  %v935 = vld [vmem:[%s924 + $0x28] sm:$0xf]
  %v936 = vld [vmem:[%s924 + $0x2c] sm:$0xf]
  %v937 = vld [vmem:[%s924 + $0x30] sm:$0xf]
  %v938 = vld [vmem:[%s924 + $0x34] sm:$0xf]
  %v939 = vld [vmem:[%s924 + $0x38] sm:$0xf]
  %v940 = vld [vmem:[%s924 + $0x3c] sm:$0xf]
  %v954 = vrot.slane %v911, 1
  %v955 = vrot.slane %v912, 1
  %v956 = vsel %vm663, %v954, %v955
  %v957 = vrot.slane %v913, 1
  %v958 = vsel %vm663, %v955, %v957
  %v959 = vrot.slane %v914, 1
  %v960 = vsel %vm663, %v957, %v959
  %v961 = vrot.slane %v915, 1
  %v962 = vsel %vm663, %v959, %v961
  %v963 = vrot.slane %v916, 1
  %v964 = vsel %vm663, %v961, %v963
  %v965 = vrot.slane %v917, 1
  %v966 = vsel %vm663, %v963, %v965
  %v967 = vrot.slane %v918, 1
  %v968 = vsel %vm663, %v965, %v967
  %v969 = vrot.slane %v919, 1
  %v970 = vsel %vm663, %v967, %v969
  %v971 = vrot.slane %v920, 1
  %v972 = vsel %vm663, %v969, %v971
  %v973 = vrot.slane %v921, 1
  %v974 = vsel %vm663, %v971, %v973
  %v975 = vrot.slane %v922, 1
  %v976 = vsel %vm663, %v973, %v975
  %v977 = vrot.slane %v923, 1
  %v978 = vsel %vm663, %v975, %v977
  %v1008 = vunpack.c.l.b16 %v925
  %v1009 = vunpack.c.l.b16 %v926
  %v1010 = vunpack.c.l.b16 %v927
  %v1011 = vunpack.c.l.b16 %v928
  %v1012 = vunpack.c.l.b16 %v929
  %v1013 = vunpack.c.l.b16 %v930
  %v1014 = vunpack.c.l.b16 %v931
  %v1015 = vunpack.c.l.b16 %v932
  %v1016 = vunpack.c.l.b16 %v933
  %v1017 = vunpack.c.l.b16 %v934
  %v1018 = vunpack.c.l.b16 %v935
  %v1019 = vunpack.c.l.b16 %v936
  %v1020 = vunpack.c.l.b16 %v937
  %v1021 = vunpack.c.l.b16 %v938
  %v1022 = vunpack.c.l.b16 %v939
  %v1023 = vunpack.c.l.b16 %v940
  %v1024 = vpack.c.b16 %v1009, %v1008
  %v1025 = vpack.c.b16 %v1011, %v1010
  %v1026 = vpack.c.b16 %v1013, %v1012
  %v1027 = vpack.c.b16 %v1015, %v1014
  %v1028 = vpack.c.b16 %v1017, %v1016
  %v1029 = vpack.c.b16 %v1019, %v1018
  %v1030 = vpack.c.b16 %v1021, %v1020
  %v1031 = vpack.c.b16 %v1023, %v1022
  %1040 = vmatprep.subr.bf16.mxu0 0
  %1041 = vmatpush1.bf16.msra.mxu0 %v1031
  %1042 = vmatprep.subr.bf16.mxu0 0
  %1043 = vmatpush1.bf16.msra.mxu0 %v1030
  %1044 = vmatprep.subr.bf16.mxu0 0
  %1045 = vmatpush1.bf16.msra.mxu0 %v1029
  %1046 = vmatprep.subr.bf16.mxu0 0
  %1047 = vmatpush1.bf16.msra.mxu0 %v1028
  %1048 = vmatprep.subr.bf16.mxu0 0
  %1049 = vmatpush1.bf16.msra.mxu0 %v1027
  %1050 = vmatprep.subr.bf16.mxu0 0
  %1051 = vmatpush1.bf16.msra.mxu0 %v1026
  %1052 = vmatprep.subr.bf16.mxu0 0
  %1053 = vmatpush1.bf16.msra.mxu0 %v1025
  %1054 = vmatprep.subr.bf16.mxu0 0
  %1055 = vmatpush1.bf16.msra.mxu0 %v1024
  %1056 = vmatprep.subr.bf16.mxu0 0
  %1057 = vmatpush2.bf16.msra.mxu0 0
  %1058 = vmatprep.subr.bf16.mxu0 0
  %1059 = vmatpush2.bf16.msra.mxu0 0
  %1060 = vmatprep.subr.bf16.mxu0 0
  %1061 = vmatpush2.bf16.msra.mxu0 0
  %1062 = vmatprep.subr.bf16.mxu0 0
  %1063 = vmatpush2.bf16.msra.mxu0 0
  %1064 = vmatprep.subr.bf16.mxu0 0
  %1065 = vmatpush2.bf16.msra.mxu0 0
  %1066 = vmatprep.subr.bf16.mxu0 0
  %1067 = vmatpush2.bf16.msra.mxu0 0
  %1068 = vmatprep.subr.bf16.mxu0 0
  %1069 = vmatpush2.bf16.msra.mxu0 0
  %1070 = vmatprep.subr.bf16.mxu0 0
  %1071 = vmatpush2.bf16.msra.mxu0 0
  %1072 = vmatprep.mubr.bf16.mxu0 0
  %1073 = vmatmul.mubr.bf16.gmra.mxu0 %v956
  %v1074 = vpop.f32.mrf.mxu0
  %v1075 = vadd.f32 0.0, %v1074
  %v1076 = vpop.f32.mrf.mxu0
  %v1077 = vpop.f32.mrf.mxu0
  %v1078 = vadd.f32 0.0, %v1077
  %v1079 = vpop.f32.mrf.mxu0
  %1080 = vmatprep.mubr.bf16.mxu0 0
  %1081 = vmatmul.mubr.bf16.gmra.mxu0 %v958
  %v1082 = vpop.f32.mrf.mxu0
  %v1083 = vadd.f32 0.0, %v1082
  %v1084 = vpop.f32.mrf.mxu0
  %v1085 = vpop.f32.mrf.mxu0
  %v1086 = vadd.f32 0.0, %v1085
  %v1087 = vpop.f32.mrf.mxu0
  %1088 = vmatprep.mubr.bf16.mxu0 0
  %1089 = vmatmul.mubr.bf16.gmra.mxu0 %v960
  %v1090 = vpop.f32.mrf.mxu0
  %v1091 = vadd.f32 0.0, %v1090
  %v1092 = vpop.f32.mrf.mxu0
  %v1093 = vpop.f32.mrf.mxu0
  %v1094 = vadd.f32 0.0, %v1093
  %v1095 = vpop.f32.mrf.mxu0
  %1096 = vmatprep.mubr.bf16.mxu0 0
  %1097 = vmatmul.mubr.bf16.gmra.mxu0 %v962
  %v1098 = vpop.f32.mrf.mxu0
  %v1099 = vadd.f32 0.0, %v1098
  %v1100 = vpop.f32.mrf.mxu0
  %v1101 = vpop.f32.mrf.mxu0
  %v1102 = vadd.f32 0.0, %v1101
  %v1103 = vpop.f32.mrf.mxu0
  %1104 = vmatprep.mubr.bf16.mxu0 0
  %1105 = vmatmul.mubr.bf16.gmra.mxu0 %v964
  %v1106 = vpop.f32.mrf.mxu0
  %v1107 = vadd.f32 0.0, %v1106
  %v1108 = vpop.f32.mrf.mxu0
  %v1109 = vpop.f32.mrf.mxu0
  %v1110 = vadd.f32 0.0, %v1109
  %v1111 = vpop.f32.mrf.mxu0
  %1112 = vmatprep.mubr.bf16.mxu0 0
  %1113 = vmatmul.mubr.bf16.gmra.mxu0 %v966
  %v1114 = vpop.f32.mrf.mxu0
  %v1115 = vadd.f32 0.0, %v1114
  %v1116 = vpop.f32.mrf.mxu0
  %v1117 = vpop.f32.mrf.mxu0
  %v1118 = vadd.f32 0.0, %v1117
  %v1119 = vpop.f32.mrf.mxu0
  %1120 = vmatprep.mubr.bf16.mxu0 0
  %1121 = vmatmul.mubr.bf16.gmra.mxu0 %v968
  %v1122 = vpop.f32.mrf.mxu0
  %v1123 = vadd.f32 0.0, %v1122
  %v1124 = vpop.f32.mrf.mxu0
  %v1125 = vpop.f32.mrf.mxu0
  %v1126 = vadd.f32 0.0, %v1125
  %v1127 = vpop.f32.mrf.mxu0
  %1128 = vmatprep.mubr.bf16.mxu0 0
  %1129 = vmatmul.mubr.bf16.gmra.mxu0 %v970
  %v1130 = vpop.f32.mrf.mxu0
  %v1131 = vadd.f32 0.0, %v1130
  %v1132 = vpop.f32.mrf.mxu0
  %v1133 = vpop.f32.mrf.mxu0
  %v1134 = vadd.f32 0.0, %v1133
  %v1135 = vpop.f32.mrf.mxu0
  %1136 = vmatprep.mubr.bf16.mxu0 0
  %1137 = vmatmul.mubr.bf16.gmra.mxu0 %v972
  %v1138 = vpop.f32.mrf.mxu0
  %v1139 = vadd.f32 0.0, %v1138
  %v1140 = vpop.f32.mrf.mxu0
  %v1141 = vpop.f32.mrf.mxu0
  %v1142 = vadd.f32 0.0, %v1141
  %v1143 = vpop.f32.mrf.mxu0
  %1144 = vmatprep.mubr.bf16.mxu0 0
  %1145 = vmatmul.mubr.bf16.gmra.mxu0 %v974
  %v1146 = vpop.f32.mrf.mxu0
  %v1147 = vadd.f32 0.0, %v1146
  %v1148 = vpop.f32.mrf.mxu0
  %v1149 = vpop.f32.mrf.mxu0
  %v1150 = vadd.f32 0.0, %v1149
  %v1151 = vpop.f32.mrf.mxu0
  %1152 = vmatprep.mubr.bf16.mxu0 0
  %1153 = vmatmul.mubr.bf16.gmra.mxu0 %v976
  %v1154 = vpop.f32.mrf.mxu0
  %v1155 = vadd.f32 0.0, %v1154
  %v1156 = vpop.f32.mrf.mxu0
  %v1157 = vpop.f32.mrf.mxu0
  %v1158 = vadd.f32 0.0, %v1157
  %v1159 = vpop.f32.mrf.mxu0
  %1160 = vmatprep.mubr.bf16.mxu0 0
  %1161 = vmatmul.mubr.bf16.gmra.mxu0 %v978
  %v1162 = vpop.f32.mrf.mxu0
  %v1163 = vadd.f32 0.0, %v1162
  %v1164 = vpop.f32.mrf.mxu0
  %v1165 = vpop.f32.mrf.mxu0
  %v1166 = vadd.f32 0.0, %v1165
  %v1167 = vpop.f32.mrf.mxu0
  %1168 = vmatprep.mubr.bf16.mxu0 0
  %1169 = vmatmul.mubr.bf16.gmra.mxu0 %v977
  %v1170 = vpop.f32.mrf.mxu0
  %v1171 = vadd.f32 0.0, %v1170
  %v1172 = vpop.f32.mrf.mxu0
  %v1173 = vpop.f32.mrf.mxu0
  %v1174 = vpop.f32.mrf.mxu0
  %1175 = vdwg.mxu0
  %v1176 = vadd.f32 %v886, %v1075
  %v1177 = vadd.f32 %v887, %v1078
  %v1178 = vadd.f32 %v888, %v1083
  %v1179 = vadd.f32 %v889, %v1086
  %v1180 = vadd.f32 %v890, %v1091
  %v1181 = vadd.f32 %v891, %v1094
  %v1182 = vadd.f32 %v892, %v1099
  %v1183 = vadd.f32 %v893, %v1102
  %v1184 = vadd.f32 %v894, %v1107
  %v1185 = vadd.f32 %v895, %v1110
  %v1186 = vadd.f32 %v896, %v1115
  %v1187 = vadd.f32 %v897, %v1118
  %v1188 = vadd.f32 %v898, %v1123
  %v1189 = vadd.f32 %v899, %v1126
  %v1190 = vadd.f32 %v900, %v1131
  %v1191 = vadd.f32 %v901, %v1134
  %v1192 = vadd.f32 %v902, %v1139
  %v1193 = vadd.f32 %v903, %v1142
  %v1194 = vadd.f32 %v904, %v1147
  %v1195 = vadd.f32 %v905, %v1150
  %v1196 = vadd.f32 %v906, %v1155
  %v1197 = vadd.f32 %v907, %v1158
  %v1198 = vadd.f32 %v908, %v1163
  %v1199 = vadd.f32 %v909, %v1166
  %v1200 = vadd.f32 %v910, %v1171
  %s1201 = scalar_lea.vmem %s3, 256
  %v1202 = vld [vmem:[%s1201] sm:$0xf]
  %v1203 = vld [vmem:[%s1201 + $0x4] sm:$0xf]
  %v1204 = vld [vmem:[%s1201 + $0x8] sm:$0xf]
  %v1205 = vld [vmem:[%s1201 + $0xc] sm:$0xf]
  %v1206 = vld [vmem:[%s1201 + $0x10] sm:$0xf]
  %v1207 = vld [vmem:[%s1201 + $0x14] sm:$0xf]
  %v1208 = vld [vmem:[%s1201 + $0x18] sm:$0xf]
  %v1209 = vld [vmem:[%s1201 + $0x1c] sm:$0xf]
  %v1210 = vld [vmem:[%s1201 + $0x20] sm:$0xf]
  %v1211 = vld [vmem:[%s1201 + $0x24] sm:$0xf]
  %v1212 = vld [vmem:[%s1201 + $0x28] sm:$0xf]
  %v1213 = vld [vmem:[%s1201 + $0x2c] sm:$0xf]
  %v1214 = vld [vmem:[%s1201 + $0x30] sm:$0xf]
  %v1215 = vld [vmem:[%s1201 + $0x34] sm:$0xf]
  %v1216 = vld [vmem:[%s1201 + $0x38] sm:$0xf]
  %v1217 = vld [vmem:[%s1201 + $0x3c] sm:$0xf]
  %vm1218 = vsmask.f32 6400
  %v1220 = vshrl.u32 %v911, 16
  %v1222 = vrot.slane %v1220, 1
  %v1223 = vshll.u32 %v911, 16
  %v1225 = vrot.slane %v1223, 2
  %v1226 = vor.u32 %v1222, %v1225
  %v1228 = vshrl.u32 %v912, 16
  %v1230 = vrot.slane %v1228, 1
  %v1231 = vshll.u32 %v912, 16
  %v1233 = vrot.slane %v1231, 2
  %v1234 = vor.u32 %v1230, %v1233
  %v1235 = vsel %vm1218, %v1226, %v1234
  %v1237 = vshrl.u32 %v913, 16
  %v1239 = vrot.slane %v1237, 1
  %v1240 = vshll.u32 %v913, 16
  %v1242 = vrot.slane %v1240, 2
  %v1243 = vor.u32 %v1239, %v1242
  %v1244 = vsel %vm1218, %v1234, %v1243
  %v1246 = vshrl.u32 %v914, 16
  %v1248 = vrot.slane %v1246, 1
  %v1249 = vshll.u32 %v914, 16
  %v1251 = vrot.slane %v1249, 2
  %v1252 = vor.u32 %v1248, %v1251
  %v1253 = vsel %vm1218, %v1243, %v1252
  %v1255 = vshrl.u32 %v915, 16
  %v1257 = vrot.slane %v1255, 1
  %v1258 = vshll.u32 %v915, 16
  %v1260 = vrot.slane %v1258, 2
  %v1261 = vor.u32 %v1257, %v1260
  %v1262 = vsel %vm1218, %v1252, %v1261
  %v1264 = vshrl.u32 %v916, 16
  %v1266 = vrot.slane %v1264, 1
  %v1267 = vshll.u32 %v916, 16
  %v1269 = vrot.slane %v1267, 2
  %v1270 = vor.u32 %v1266, %v1269
  %v1271 = vsel %vm1218, %v1261, %v1270
  %v1273 = vshrl.u32 %v917, 16
  %v1275 = vrot.slane %v1273, 1
  %v1276 = vshll.u32 %v917, 16
  %v1278 = vrot.slane %v1276, 2
  %v1279 = vor.u32 %v1275, %v1278
  %v1280 = vsel %vm1218, %v1270, %v1279
  %v1282 = vshrl.u32 %v918, 16
  %v1284 = vrot.slane %v1282, 1
  %v1285 = vshll.u32 %v918, 16
  %v1287 = vrot.slane %v1285, 2
  %v1288 = vor.u32 %v1284, %v1287
  %v1289 = vsel %vm1218, %v1279, %v1288
  %v1291 = vshrl.u32 %v919, 16
  %v1293 = vrot.slane %v1291, 1
  %v1294 = vshll.u32 %v919, 16
  %v1296 = vrot.slane %v1294, 2
  %v1297 = vor.u32 %v1293, %v1296
  %v1298 = vsel %vm1218, %v1288, %v1297
  %v1300 = vshrl.u32 %v920, 16
  %v1302 = vrot.slane %v1300, 1
  %v1303 = vshll.u32 %v920, 16
  %v1305 = vrot.slane %v1303, 2
  %v1306 = vor.u32 %v1302, %v1305
  %v1307 = vsel %vm1218, %v1297, %v1306
  %v1309 = vshrl.u32 %v921, 16
  %v1311 = vrot.slane %v1309, 1
  %v1312 = vshll.u32 %v921, 16
  %v1314 = vrot.slane %v1312, 2
  %v1315 = vor.u32 %v1311, %v1314
  %v1316 = vsel %vm1218, %v1306, %v1315
  %v1318 = vshrl.u32 %v922, 16
  %v1320 = vrot.slane %v1318, 1
  %v1321 = vshll.u32 %v922, 16
  %v1323 = vrot.slane %v1321, 2
  %v1324 = vor.u32 %v1320, %v1323
  %v1325 = vsel %vm1218, %v1315, %v1324
  %v1327 = vshrl.u32 %v923, 16
  %v1329 = vrot.slane %v1327, 1
  %v1330 = vshll.u32 %v923, 16
  %v1332 = vrot.slane %v1330, 2
  %v1333 = vor.u32 %v1329, %v1332
  %v1334 = vsel %vm1218, %v1324, %v1333
  %v1364 = vunpack.c.l.b16 %v1202
  %v1365 = vunpack.c.l.b16 %v1203
  %v1366 = vunpack.c.l.b16 %v1204
  %v1367 = vunpack.c.l.b16 %v1205
  %v1368 = vunpack.c.l.b16 %v1206
  %v1369 = vunpack.c.l.b16 %v1207
  %v1370 = vunpack.c.l.b16 %v1208
  %v1371 = vunpack.c.l.b16 %v1209
  %v1372 = vunpack.c.l.b16 %v1210
  %v1373 = vunpack.c.l.b16 %v1211
  %v1374 = vunpack.c.l.b16 %v1212
  %v1375 = vunpack.c.l.b16 %v1213
  %v1376 = vunpack.c.l.b16 %v1214
  %v1377 = vunpack.c.l.b16 %v1215
  %v1378 = vunpack.c.l.b16 %v1216
  %v1379 = vunpack.c.l.b16 %v1217
  %v1380 = vpack.c.b16 %v1365, %v1364
  %v1381 = vpack.c.b16 %v1367, %v1366
  %v1382 = vpack.c.b16 %v1369, %v1368
  %v1383 = vpack.c.b16 %v1371, %v1370
  %v1384 = vpack.c.b16 %v1373, %v1372
  %v1385 = vpack.c.b16 %v1375, %v1374
  %v1386 = vpack.c.b16 %v1377, %v1376
  %v1387 = vpack.c.b16 %v1379, %v1378
  %1396 = vmatprep.subr.bf16.mxu0 0
  %1397 = vmatpush1.bf16.msra.mxu0 %v1387
  %1398 = vmatprep.subr.bf16.mxu0 0
  %1399 = vmatpush1.bf16.msra.mxu0 %v1386
  %1400 = vmatprep.subr.bf16.mxu0 0
  %1401 = vmatpush1.bf16.msra.mxu0 %v1385
  %1402 = vmatprep.subr.bf16.mxu0 0
  %1403 = vmatpush1.bf16.msra.mxu0 %v1384
  %1404 = vmatprep.subr.bf16.mxu0 0
  %1405 = vmatpush1.bf16.msra.mxu0 %v1383
  %1406 = vmatprep.subr.bf16.mxu0 0
  %1407 = vmatpush1.bf16.msra.mxu0 %v1382
  %1408 = vmatprep.subr.bf16.mxu0 0
  %1409 = vmatpush1.bf16.msra.mxu0 %v1381
  %1410 = vmatprep.subr.bf16.mxu0 0
  %1411 = vmatpush1.bf16.msra.mxu0 %v1380
  %1412 = vmatprep.subr.bf16.mxu0 0
  %1413 = vmatpush2.bf16.msra.mxu0 0
  %1414 = vmatprep.subr.bf16.mxu0 0
  %1415 = vmatpush2.bf16.msra.mxu0 0
  %1416 = vmatprep.subr.bf16.mxu0 0
  %1417 = vmatpush2.bf16.msra.mxu0 0
  %1418 = vmatprep.subr.bf16.mxu0 0
  %1419 = vmatpush2.bf16.msra.mxu0 0
  %1420 = vmatprep.subr.bf16.mxu0 0
  %1421 = vmatpush2.bf16.msra.mxu0 0
  %1422 = vmatprep.subr.bf16.mxu0 0
  %1423 = vmatpush2.bf16.msra.mxu0 0
  %1424 = vmatprep.subr.bf16.mxu0 0
  %1425 = vmatpush2.bf16.msra.mxu0 0
  %1426 = vmatprep.subr.bf16.mxu0 0
  %1427 = vmatpush2.bf16.msra.mxu0 0
  %1428 = vmatprep.mubr.bf16.mxu0 0
  %1429 = vmatmul.mubr.bf16.gmra.mxu0 %v1235
  %v1430 = vpop.f32.mrf.mxu0
  %v1431 = vadd.f32 0.0, %v1430
  %v1432 = vpop.f32.mrf.mxu0
  %v1433 = vpop.f32.mrf.mxu0
  %v1434 = vadd.f32 0.0, %v1433
  %v1435 = vpop.f32.mrf.mxu0
  %1436 = vmatprep.mubr.bf16.mxu0 0
  %1437 = vmatmul.mubr.bf16.gmra.mxu0 %v1244
  %v1438 = vpop.f32.mrf.mxu0
  %v1439 = vadd.f32 0.0, %v1438
  %v1440 = vpop.f32.mrf.mxu0
  %v1441 = vpop.f32.mrf.mxu0
  %v1442 = vadd.f32 0.0, %v1441
  %v1443 = vpop.f32.mrf.mxu0
  %1444 = vmatprep.mubr.bf16.mxu0 0
  %1445 = vmatmul.mubr.bf16.gmra.mxu0 %v1253
  %v1446 = vpop.f32.mrf.mxu0
  %v1447 = vadd.f32 0.0, %v1446
  %v1448 = vpop.f32.mrf.mxu0
  %v1449 = vpop.f32.mrf.mxu0
  %v1450 = vadd.f32 0.0, %v1449
  %v1451 = vpop.f32.mrf.mxu0
  %1452 = vmatprep.mubr.bf16.mxu0 0
  %1453 = vmatmul.mubr.bf16.gmra.mxu0 %v1262
  %v1454 = vpop.f32.mrf.mxu0
  %v1455 = vadd.f32 0.0, %v1454
  %v1456 = vpop.f32.mrf.mxu0
  %v1457 = vpop.f32.mrf.mxu0
  %v1458 = vadd.f32 0.0, %v1457
  %v1459 = vpop.f32.mrf.mxu0
  %1460 = vmatprep.mubr.bf16.mxu0 0
  %1461 = vmatmul.mubr.bf16.gmra.mxu0 %v1271
  %v1462 = vpop.f32.mrf.mxu0
  %v1463 = vadd.f32 0.0, %v1462
  %v1464 = vpop.f32.mrf.mxu0
  %v1465 = vpop.f32.mrf.mxu0
  %v1466 = vadd.f32 0.0, %v1465
  %v1467 = vpop.f32.mrf.mxu0
  %1468 = vmatprep.mubr.bf16.mxu0 0
  %1469 = vmatmul.mubr.bf16.gmra.mxu0 %v1280
  %v1470 = vpop.f32.mrf.mxu0
  %v1471 = vadd.f32 0.0, %v1470
  %v1472 = vpop.f32.mrf.mxu0
  %v1473 = vpop.f32.mrf.mxu0
  %v1474 = vadd.f32 0.0, %v1473
  %v1475 = vpop.f32.mrf.mxu0
  %1476 = vmatprep.mubr.bf16.mxu0 0
  %1477 = vmatmul.mubr.bf16.gmra.mxu0 %v1289
  %v1478 = vpop.f32.mrf.mxu0
  %v1479 = vadd.f32 0.0, %v1478
  %v1480 = vpop.f32.mrf.mxu0
  %v1481 = vpop.f32.mrf.mxu0
  %v1482 = vadd.f32 0.0, %v1481
  %v1483 = vpop.f32.mrf.mxu0
  %1484 = vmatprep.mubr.bf16.mxu0 0
  %1485 = vmatmul.mubr.bf16.gmra.mxu0 %v1298
  %v1486 = vpop.f32.mrf.mxu0
  %v1487 = vadd.f32 0.0, %v1486
  %v1488 = vpop.f32.mrf.mxu0
  %v1489 = vpop.f32.mrf.mxu0
  %v1490 = vadd.f32 0.0, %v1489
  %v1491 = vpop.f32.mrf.mxu0
  %1492 = vmatprep.mubr.bf16.mxu0 0
  %1493 = vmatmul.mubr.bf16.gmra.mxu0 %v1307
  %v1494 = vpop.f32.mrf.mxu0
  %v1495 = vadd.f32 0.0, %v1494
  %v1496 = vpop.f32.mrf.mxu0
  %v1497 = vpop.f32.mrf.mxu0
  %v1498 = vadd.f32 0.0, %v1497
  %v1499 = vpop.f32.mrf.mxu0
  %1500 = vmatprep.mubr.bf16.mxu0 0
  %1501 = vmatmul.mubr.bf16.gmra.mxu0 %v1316
  %v1502 = vpop.f32.mrf.mxu0
  %v1503 = vadd.f32 0.0, %v1502
  %v1504 = vpop.f32.mrf.mxu0
  %v1505 = vpop.f32.mrf.mxu0
  %v1506 = vadd.f32 0.0, %v1505
  %v1507 = vpop.f32.mrf.mxu0
  %1508 = vmatprep.mubr.bf16.mxu0 0
  %1509 = vmatmul.mubr.bf16.gmra.mxu0 %v1325
  %v1510 = vpop.f32.mrf.mxu0
  %v1511 = vadd.f32 0.0, %v1510
  %v1512 = vpop.f32.mrf.mxu0
  %v1513 = vpop.f32.mrf.mxu0
  %v1514 = vadd.f32 0.0, %v1513
  %v1515 = vpop.f32.mrf.mxu0
  %1516 = vmatprep.mubr.bf16.mxu0 0
  %1517 = vmatmul.mubr.bf16.gmra.mxu0 %v1334
  %v1518 = vpop.f32.mrf.mxu0
  %v1519 = vadd.f32 0.0, %v1518
  %v1520 = vpop.f32.mrf.mxu0
  %v1521 = vpop.f32.mrf.mxu0
  %v1522 = vadd.f32 0.0, %v1521
  %v1523 = vpop.f32.mrf.mxu0
  %1524 = vmatprep.mubr.bf16.mxu0 0
  %1525 = vmatmul.mubr.bf16.gmra.mxu0 %v1333
  %v1526 = vpop.f32.mrf.mxu0
  %v1527 = vadd.f32 0.0, %v1526
  %v1528 = vpop.f32.mrf.mxu0
  %v1529 = vpop.f32.mrf.mxu0
  %v1530 = vpop.f32.mrf.mxu0
  %1531 = vdwg.mxu0
  %v1532 = vadd.f32 %v1176, %v1431
  %v1533 = vadd.f32 %v1177, %v1434
  %v1534 = vadd.f32 %v1178, %v1439
  %v1535 = vadd.f32 %v1179, %v1442
  %v1536 = vadd.f32 %v1180, %v1447
  %v1537 = vadd.f32 %v1181, %v1450
  %v1538 = vadd.f32 %v1182, %v1455
  %v1539 = vadd.f32 %v1183, %v1458
  %v1540 = vadd.f32 %v1184, %v1463
  %v1541 = vadd.f32 %v1185, %v1466
  %v1542 = vadd.f32 %v1186, %v1471
  %v1543 = vadd.f32 %v1187, %v1474
  %v1544 = vadd.f32 %v1188, %v1479
  %v1545 = vadd.f32 %v1189, %v1482
  %v1546 = vadd.f32 %v1190, %v1487
  %v1547 = vadd.f32 %v1191, %v1490
  %v1548 = vadd.f32 %v1192, %v1495
  %v1549 = vadd.f32 %v1193, %v1498
  %v1550 = vadd.f32 %v1194, %v1503
  %v1551 = vadd.f32 %v1195, %v1506
  %v1552 = vadd.f32 %v1196, %v1511
  %v1553 = vadd.f32 %v1197, %v1514
  %v1554 = vadd.f32 %v1198, %v1519
  %v1555 = vadd.f32 %v1199, %v1522
  %v1556 = vadd.f32 %v1200, %v1527
  %s1557 = scalar_lea.vmem %s3, 320
  %v1558 = vld [vmem:[%s1557] sm:$0xf]
  %v1559 = vld [vmem:[%s1557 + $0x4] sm:$0xf]
  %v1560 = vld [vmem:[%s1557 + $0x8] sm:$0xf]
  %v1561 = vld [vmem:[%s1557 + $0xc] sm:$0xf]
  %v1562 = vld [vmem:[%s1557 + $0x10] sm:$0xf]
  %v1563 = vld [vmem:[%s1557 + $0x14] sm:$0xf]
  %v1564 = vld [vmem:[%s1557 + $0x18] sm:$0xf]
  %v1565 = vld [vmem:[%s1557 + $0x1c] sm:$0xf]
  %v1566 = vld [vmem:[%s1557 + $0x20] sm:$0xf]
  %v1567 = vld [vmem:[%s1557 + $0x24] sm:$0xf]
  %v1568 = vld [vmem:[%s1557 + $0x28] sm:$0xf]
  %v1569 = vld [vmem:[%s1557 + $0x2c] sm:$0xf]
  %v1570 = vld [vmem:[%s1557 + $0x30] sm:$0xf]
  %v1571 = vld [vmem:[%s1557 + $0x34] sm:$0xf]
  %v1572 = vld [vmem:[%s1557 + $0x38] sm:$0xf]
  %v1573 = vld [vmem:[%s1557 + $0x3c] sm:$0xf]
  %vm1574 = vcmask 1045504
  %v1575 = vrot.slane %v911, 2
  %v1576 = vrot.slane %v912, 2
  %v1577 = vsel %vm1574, %v1575, %v1576
  %v1578 = vrot.slane %v913, 2
  %v1579 = vsel %vm1574, %v1576, %v1578
  %v1580 = vrot.slane %v914, 2
  %v1581 = vsel %vm1574, %v1578, %v1580
  %v1582 = vrot.slane %v915, 2
  %v1583 = vsel %vm1574, %v1580, %v1582
  %v1584 = vrot.slane %v916, 2
  %v1585 = vsel %vm1574, %v1582, %v1584
  %v1586 = vrot.slane %v917, 2
  %v1587 = vsel %vm1574, %v1584, %v1586
  %v1588 = vrot.slane %v918, 2
  %v1589 = vsel %vm1574, %v1586, %v1588
  %v1590 = vrot.slane %v919, 2
  %v1591 = vsel %vm1574, %v1588, %v1590
  %v1592 = vrot.slane %v920, 2
  %v1593 = vsel %vm1574, %v1590, %v1592
  %v1594 = vrot.slane %v921, 2
  %v1595 = vsel %vm1574, %v1592, %v1594
  %v1596 = vrot.slane %v922, 2
  %v1597 = vsel %vm1574, %v1594, %v1596
  %v1598 = vrot.slane %v923, 2
  %v1599 = vsel %vm1574, %v1596, %v1598
  %v1629 = vunpack.c.l.b16 %v1558
  %v1630 = vunpack.c.l.b16 %v1559
  %v1631 = vunpack.c.l.b16 %v1560
  %v1632 = vunpack.c.l.b16 %v1561
  %v1633 = vunpack.c.l.b16 %v1562
  %v1634 = vunpack.c.l.b16 %v1563
  %v1635 = vunpack.c.l.b16 %v1564
  %v1636 = vunpack.c.l.b16 %v1565
  %v1637 = vunpack.c.l.b16 %v1566
  %v1638 = vunpack.c.l.b16 %v1567
  %v1639 = vunpack.c.l.b16 %v1568
  %v1640 = vunpack.c.l.b16 %v1569
  %v1641 = vunpack.c.l.b16 %v1570
  %v1642 = vunpack.c.l.b16 %v1571
  %v1643 = vunpack.c.l.b16 %v1572
  %v1644 = vunpack.c.l.b16 %v1573
  %v1645 = vpack.c.b16 %v1630, %v1629
  %v1646 = vpack.c.b16 %v1632, %v1631
  %v1647 = vpack.c.b16 %v1634, %v1633
  %v1648 = vpack.c.b16 %v1636, %v1635
  %v1649 = vpack.c.b16 %v1638, %v1637
  %v1650 = vpack.c.b16 %v1640, %v1639
  %v1651 = vpack.c.b16 %v1642, %v1641
  %v1652 = vpack.c.b16 %v1644, %v1643
  %1661 = vmatprep.subr.bf16.mxu0 0
  %1662 = vmatpush1.bf16.msra.mxu0 %v1652
  %1663 = vmatprep.subr.bf16.mxu0 0
  %1664 = vmatpush1.bf16.msra.mxu0 %v1651
  %1665 = vmatprep.subr.bf16.mxu0 0
  %1666 = vmatpush1.bf16.msra.mxu0 %v1650
  %1667 = vmatprep.subr.bf16.mxu0 0
  %1668 = vmatpush1.bf16.msra.mxu0 %v1649
  %1669 = vmatprep.subr.bf16.mxu0 0
  %1670 = vmatpush1.bf16.msra.mxu0 %v1648
  %1671 = vmatprep.subr.bf16.mxu0 0
  %1672 = vmatpush1.bf16.msra.mxu0 %v1647
  %1673 = vmatprep.subr.bf16.mxu0 0
  %1674 = vmatpush1.bf16.msra.mxu0 %v1646
  %1675 = vmatprep.subr.bf16.mxu0 0
  %1676 = vmatpush1.bf16.msra.mxu0 %v1645
  %1677 = vmatprep.subr.bf16.mxu0 0
  %1678 = vmatpush2.bf16.msra.mxu0 0
  %1679 = vmatprep.subr.bf16.mxu0 0
  %1680 = vmatpush2.bf16.msra.mxu0 0
  %1681 = vmatprep.subr.bf16.mxu0 0
  %1682 = vmatpush2.bf16.msra.mxu0 0
  %1683 = vmatprep.subr.bf16.mxu0 0
  %1684 = vmatpush2.bf16.msra.mxu0 0
  %1685 = vmatprep.subr.bf16.mxu0 0
  %1686 = vmatpush2.bf16.msra.mxu0 0
  %1687 = vmatprep.subr.bf16.mxu0 0
  %1688 = vmatpush2.bf16.msra.mxu0 0
  %1689 = vmatprep.subr.bf16.mxu0 0
  %1690 = vmatpush2.bf16.msra.mxu0 0
  %1691 = vmatprep.subr.bf16.mxu0 0
  %1692 = vmatpush2.bf16.msra.mxu0 0
  %1693 = vmatprep.mubr.bf16.mxu0 0
  %1694 = vmatmul.mubr.bf16.gmra.mxu0 %v1577
  %v1695 = vpop.f32.mrf.mxu0
  %v1696 = vadd.f32 0.0, %v1695
  %v1697 = vpop.f32.mrf.mxu0
  %v1698 = vpop.f32.mrf.mxu0
  %v1699 = vadd.f32 0.0, %v1698
  %v1700 = vpop.f32.mrf.mxu0
  %1701 = vmatprep.mubr.bf16.mxu0 0
  %1702 = vmatmul.mubr.bf16.gmra.mxu0 %v1579
  %v1703 = vpop.f32.mrf.mxu0
  %v1704 = vadd.f32 0.0, %v1703
  %v1705 = vpop.f32.mrf.mxu0
  %v1706 = vpop.f32.mrf.mxu0
  %v1707 = vadd.f32 0.0, %v1706
  %v1708 = vpop.f32.mrf.mxu0
  %1709 = vmatprep.mubr.bf16.mxu0 0
  %1710 = vmatmul.mubr.bf16.gmra.mxu0 %v1581
  %v1711 = vpop.f32.mrf.mxu0
  %v1712 = vadd.f32 0.0, %v1711
  %v1713 = vpop.f32.mrf.mxu0
  %v1714 = vpop.f32.mrf.mxu0
  %v1715 = vadd.f32 0.0, %v1714
  %v1716 = vpop.f32.mrf.mxu0
  %1717 = vmatprep.mubr.bf16.mxu0 0
  %1718 = vmatmul.mubr.bf16.gmra.mxu0 %v1583
  %v1719 = vpop.f32.mrf.mxu0
  %v1720 = vadd.f32 0.0, %v1719
  %v1721 = vpop.f32.mrf.mxu0
  %v1722 = vpop.f32.mrf.mxu0
  %v1723 = vadd.f32 0.0, %v1722
  %v1724 = vpop.f32.mrf.mxu0
  %1725 = vmatprep.mubr.bf16.mxu0 0
  %1726 = vmatmul.mubr.bf16.gmra.mxu0 %v1585
  %v1727 = vpop.f32.mrf.mxu0
  %v1728 = vadd.f32 0.0, %v1727
  %v1729 = vpop.f32.mrf.mxu0
  %v1730 = vpop.f32.mrf.mxu0
  %v1731 = vadd.f32 0.0, %v1730
  %v1732 = vpop.f32.mrf.mxu0
  %1733 = vmatprep.mubr.bf16.mxu0 0
  %1734 = vmatmul.mubr.bf16.gmra.mxu0 %v1587
  %v1735 = vpop.f32.mrf.mxu0
  %v1736 = vadd.f32 0.0, %v1735
  %v1737 = vpop.f32.mrf.mxu0
  %v1738 = vpop.f32.mrf.mxu0
  %v1739 = vadd.f32 0.0, %v1738
  %v1740 = vpop.f32.mrf.mxu0
  %1741 = vmatprep.mubr.bf16.mxu0 0
  %1742 = vmatmul.mubr.bf16.gmra.mxu0 %v1589
  %v1743 = vpop.f32.mrf.mxu0
  %v1744 = vadd.f32 0.0, %v1743
  %v1745 = vpop.f32.mrf.mxu0
  %v1746 = vpop.f32.mrf.mxu0
  %v1747 = vadd.f32 0.0, %v1746
  %v1748 = vpop.f32.mrf.mxu0
  %1749 = vmatprep.mubr.bf16.mxu0 0
  %1750 = vmatmul.mubr.bf16.gmra.mxu0 %v1591
  %v1751 = vpop.f32.mrf.mxu0
  %v1752 = vadd.f32 0.0, %v1751
  %v1753 = vpop.f32.mrf.mxu0
  %v1754 = vpop.f32.mrf.mxu0
  %v1755 = vadd.f32 0.0, %v1754
  %v1756 = vpop.f32.mrf.mxu0
  %1757 = vmatprep.mubr.bf16.mxu0 0
  %1758 = vmatmul.mubr.bf16.gmra.mxu0 %v1593
  %v1759 = vpop.f32.mrf.mxu0
  %v1760 = vadd.f32 0.0, %v1759
  %v1761 = vpop.f32.mrf.mxu0
  %v1762 = vpop.f32.mrf.mxu0
  %v1763 = vadd.f32 0.0, %v1762
  %v1764 = vpop.f32.mrf.mxu0
  %1765 = vmatprep.mubr.bf16.mxu0 0
  %1766 = vmatmul.mubr.bf16.gmra.mxu0 %v1595
  %v1767 = vpop.f32.mrf.mxu0
  %v1768 = vadd.f32 0.0, %v1767
  %v1769 = vpop.f32.mrf.mxu0
  %v1770 = vpop.f32.mrf.mxu0
  %v1771 = vadd.f32 0.0, %v1770
  %v1772 = vpop.f32.mrf.mxu0
  %1773 = vmatprep.mubr.bf16.mxu0 0
  %1774 = vmatmul.mubr.bf16.gmra.mxu0 %v1597
  %v1775 = vpop.f32.mrf.mxu0
  %v1776 = vadd.f32 0.0, %v1775
  %v1777 = vpop.f32.mrf.mxu0
  %v1778 = vpop.f32.mrf.mxu0
  %v1779 = vadd.f32 0.0, %v1778
  %v1780 = vpop.f32.mrf.mxu0
  %1781 = vmatprep.mubr.bf16.mxu0 0
  %1782 = vmatmul.mubr.bf16.gmra.mxu0 %v1599
  %v1783 = vpop.f32.mrf.mxu0
  %v1784 = vadd.f32 0.0, %v1783
  %v1785 = vpop.f32.mrf.mxu0
  %v1786 = vpop.f32.mrf.mxu0
  %v1787 = vadd.f32 0.0, %v1786
  %v1788 = vpop.f32.mrf.mxu0
  %1789 = vmatprep.mubr.bf16.mxu0 0
  %1790 = vmatmul.mubr.bf16.gmra.mxu0 %v1598
  %v1791 = vpop.f32.mrf.mxu0
  %v1792 = vadd.f32 0.0, %v1791
  %v1793 = vpop.f32.mrf.mxu0
  %v1794 = vpop.f32.mrf.mxu0
  %v1795 = vpop.f32.mrf.mxu0
  %1796 = vdwg.mxu0
  %v1797 = vadd.f32 %v1532, %v1696
  %v1798 = vadd.f32 %v1533, %v1699
  %v1799 = vadd.f32 %v1534, %v1704
  %v1800 = vadd.f32 %v1535, %v1707
  %v1801 = vadd.f32 %v1536, %v1712
  %v1802 = vadd.f32 %v1537, %v1715
  %v1803 = vadd.f32 %v1538, %v1720
  %v1804 = vadd.f32 %v1539, %v1723
  %v1805 = vadd.f32 %v1540, %v1728
  %v1806 = vadd.f32 %v1541, %v1731
  %v1807 = vadd.f32 %v1542, %v1736
  %v1808 = vadd.f32 %v1543, %v1739
  %v1809 = vadd.f32 %v1544, %v1744
  %v1810 = vadd.f32 %v1545, %v1747
  %v1811 = vadd.f32 %v1546, %v1752
  %v1812 = vadd.f32 %v1547, %v1755
  %v1813 = vadd.f32 %v1548, %v1760
  %v1814 = vadd.f32 %v1549, %v1763
  %v1815 = vadd.f32 %v1550, %v1768
  %v1816 = vadd.f32 %v1551, %v1771
  %v1817 = vadd.f32 %v1552, %v1776
  %v1818 = vadd.f32 %v1553, %v1779
  %v1819 = vadd.f32 %v1554, %v1784
  %v1820 = vadd.f32 %v1555, %v1787
  %v1821 = vadd.f32 %v1556, %v1792
  %v1822 = vpack.c.bf16 %v100, %v99
  %s1823 = scalar_lea.vmem %s3, 384
  %v1824 = vld [vmem:[%s1823] sm:$0xf]
  %v1825 = vld [vmem:[%s1823 + $0x4] sm:$0xf]
  %v1826 = vld [vmem:[%s1823 + $0x8] sm:$0xf]
  %v1827 = vld [vmem:[%s1823 + $0xc] sm:$0xf]
  %v1828 = vld [vmem:[%s1823 + $0x10] sm:$0xf]
  %v1829 = vld [vmem:[%s1823 + $0x14] sm:$0xf]
  %v1830 = vld [vmem:[%s1823 + $0x18] sm:$0xf]
  %v1831 = vld [vmem:[%s1823 + $0x1c] sm:$0xf]
  %v1832 = vld [vmem:[%s1823 + $0x20] sm:$0xf]
  %v1833 = vld [vmem:[%s1823 + $0x24] sm:$0xf]
  %v1834 = vld [vmem:[%s1823 + $0x28] sm:$0xf]
  %v1835 = vld [vmem:[%s1823 + $0x2c] sm:$0xf]
  %v1836 = vld [vmem:[%s1823 + $0x30] sm:$0xf]
  %v1837 = vld [vmem:[%s1823 + $0x34] sm:$0xf]
  %v1838 = vld [vmem:[%s1823 + $0x38] sm:$0xf]
  %v1839 = vld [vmem:[%s1823 + $0x3c] sm:$0xf]
  %v1841 = vrot.slane %v102, 2
  %v1842 = vrot.slane %v103, 2
  %v1843 = vsel %vm1574, %v1841, %v1842
  %v1844 = vrot.slane %v104, 2
  %v1845 = vsel %vm1574, %v1842, %v1844
  %v1846 = vrot.slane %v105, 2
  %v1847 = vsel %vm1574, %v1844, %v1846
  %v1848 = vrot.slane %v106, 2
  %v1849 = vsel %vm1574, %v1846, %v1848
  %v1850 = vrot.slane %v107, 2
  %v1851 = vsel %vm1574, %v1848, %v1850
  %v1852 = vrot.slane %v108, 2
  %v1853 = vsel %vm1574, %v1850, %v1852
  %v1854 = vrot.slane %v109, 2
  %v1855 = vsel %vm1574, %v1852, %v1854
  %v1856 = vrot.slane %v110, 2
  %v1857 = vsel %vm1574, %v1854, %v1856
  %v1858 = vrot.slane %v111, 2
  %v1859 = vsel %vm1574, %v1856, %v1858
  %v1860 = vrot.slane %v112, 2
  %v1861 = vsel %vm1574, %v1858, %v1860
  %v1862 = vrot.slane %v130, 2
  %v1863 = vsel %vm1574, %v1860, %v1862
  %v1864 = vrot.slane %v1822, 2
  %v1865 = vsel %vm1574, %v1862, %v1864
  %v1895 = vunpack.c.l.b16 %v1824
  %v1896 = vunpack.c.l.b16 %v1825
  %v1897 = vunpack.c.l.b16 %v1826
  %v1898 = vunpack.c.l.b16 %v1827
  %v1899 = vunpack.c.l.b16 %v1828
  %v1900 = vunpack.c.l.b16 %v1829
  %v1901 = vunpack.c.l.b16 %v1830
  %v1902 = vunpack.c.l.b16 %v1831
  %v1903 = vunpack.c.l.b16 %v1832
  %v1904 = vunpack.c.l.b16 %v1833
  %v1905 = vunpack.c.l.b16 %v1834
  %v1906 = vunpack.c.l.b16 %v1835
  %v1907 = vunpack.c.l.b16 %v1836
  %v1908 = vunpack.c.l.b16 %v1837
  %v1909 = vunpack.c.l.b16 %v1838
  %v1910 = vunpack.c.l.b16 %v1839
  %v1911 = vpack.c.b16 %v1896, %v1895
  %v1912 = vpack.c.b16 %v1898, %v1897
  %v1913 = vpack.c.b16 %v1900, %v1899
  %v1914 = vpack.c.b16 %v1902, %v1901
  %v1915 = vpack.c.b16 %v1904, %v1903
  %v1916 = vpack.c.b16 %v1906, %v1905
  %v1917 = vpack.c.b16 %v1908, %v1907
  %v1918 = vpack.c.b16 %v1910, %v1909
  %1927 = vmatprep.subr.bf16.mxu0 0
  %1928 = vmatpush1.bf16.msra.mxu0 %v1918
  %1929 = vmatprep.subr.bf16.mxu0 0
  %1930 = vmatpush1.bf16.msra.mxu0 %v1917
  %1931 = vmatprep.subr.bf16.mxu0 0
  %1932 = vmatpush1.bf16.msra.mxu0 %v1916
  %1933 = vmatprep.subr.bf16.mxu0 0
  %1934 = vmatpush1.bf16.msra.mxu0 %v1915
  %1935 = vmatprep.subr.bf16.mxu0 0
  %1936 = vmatpush1.bf16.msra.mxu0 %v1914
  %1937 = vmatprep.subr.bf16.mxu0 0
  %1938 = vmatpush1.bf16.msra.mxu0 %v1913
  %1939 = vmatprep.subr.bf16.mxu0 0
  %1940 = vmatpush1.bf16.msra.mxu0 %v1912
  %1941 = vmatprep.subr.bf16.mxu0 0
  %1942 = vmatpush1.bf16.msra.mxu0 %v1911
  %1943 = vmatprep.subr.bf16.mxu0 0
  %1944 = vmatpush2.bf16.msra.mxu0 0
  %1945 = vmatprep.subr.bf16.mxu0 0
  %1946 = vmatpush2.bf16.msra.mxu0 0
  %1947 = vmatprep.subr.bf16.mxu0 0
  %1948 = vmatpush2.bf16.msra.mxu0 0
  %1949 = vmatprep.subr.bf16.mxu0 0
  %1950 = vmatpush2.bf16.msra.mxu0 0
  %1951 = vmatprep.subr.bf16.mxu0 0
  %1952 = vmatpush2.bf16.msra.mxu0 0
  %1953 = vmatprep.subr.bf16.mxu0 0
  %1954 = vmatpush2.bf16.msra.mxu0 0
  %1955 = vmatprep.subr.bf16.mxu0 0
  %1956 = vmatpush2.bf16.msra.mxu0 0
  %1957 = vmatprep.subr.bf16.mxu0 0
  %1958 = vmatpush2.bf16.msra.mxu0 0
  %1959 = vmatprep.mubr.bf16.mxu0 0
  %1960 = vmatmul.mubr.bf16.gmra.mxu0 %v1843
  %v1961 = vpop.f32.mrf.mxu0
  %v1962 = vadd.f32 0.0, %v1961
  %v1963 = vpop.f32.mrf.mxu0
  %v1964 = vpop.f32.mrf.mxu0
  %v1965 = vadd.f32 0.0, %v1964
  %v1966 = vpop.f32.mrf.mxu0
  %1967 = vmatprep.mubr.bf16.mxu0 0
  %1968 = vmatmul.mubr.bf16.gmra.mxu0 %v1845
  %v1969 = vpop.f32.mrf.mxu0
  %v1970 = vadd.f32 0.0, %v1969
  %v1971 = vpop.f32.mrf.mxu0
  %v1972 = vpop.f32.mrf.mxu0
  %v1973 = vadd.f32 0.0, %v1972
  %v1974 = vpop.f32.mrf.mxu0
  %1975 = vmatprep.mubr.bf16.mxu0 0
  %1976 = vmatmul.mubr.bf16.gmra.mxu0 %v1847
  %v1977 = vpop.f32.mrf.mxu0
  %v1978 = vadd.f32 0.0, %v1977
  %v1979 = vpop.f32.mrf.mxu0
  %v1980 = vpop.f32.mrf.mxu0
  %v1981 = vadd.f32 0.0, %v1980
  %v1982 = vpop.f32.mrf.mxu0
  %1983 = vmatprep.mubr.bf16.mxu0 0
  %1984 = vmatmul.mubr.bf16.gmra.mxu0 %v1849
  %v1985 = vpop.f32.mrf.mxu0
  %v1986 = vadd.f32 0.0, %v1985
  %v1987 = vpop.f32.mrf.mxu0
  %v1988 = vpop.f32.mrf.mxu0
  %v1989 = vadd.f32 0.0, %v1988
  %v1990 = vpop.f32.mrf.mxu0
  %1991 = vmatprep.mubr.bf16.mxu0 0
  %1992 = vmatmul.mubr.bf16.gmra.mxu0 %v1851
  %v1993 = vpop.f32.mrf.mxu0
  %v1994 = vadd.f32 0.0, %v1993
  %v1995 = vpop.f32.mrf.mxu0
  %v1996 = vpop.f32.mrf.mxu0
  %v1997 = vadd.f32 0.0, %v1996
  %v1998 = vpop.f32.mrf.mxu0
  %1999 = vmatprep.mubr.bf16.mxu0 0
  %2000 = vmatmul.mubr.bf16.gmra.mxu0 %v1853
  %v2001 = vpop.f32.mrf.mxu0
  %v2002 = vadd.f32 0.0, %v2001
  %v2003 = vpop.f32.mrf.mxu0
  %v2004 = vpop.f32.mrf.mxu0
  %v2005 = vadd.f32 0.0, %v2004
  %v2006 = vpop.f32.mrf.mxu0
  %2007 = vmatprep.mubr.bf16.mxu0 0
  %2008 = vmatmul.mubr.bf16.gmra.mxu0 %v1855
  %v2009 = vpop.f32.mrf.mxu0
  %v2010 = vadd.f32 0.0, %v2009
  %v2011 = vpop.f32.mrf.mxu0
  %v2012 = vpop.f32.mrf.mxu0
  %v2013 = vadd.f32 0.0, %v2012
  %v2014 = vpop.f32.mrf.mxu0
  %2015 = vmatprep.mubr.bf16.mxu0 0
  %2016 = vmatmul.mubr.bf16.gmra.mxu0 %v1857
  %v2017 = vpop.f32.mrf.mxu0
  %v2018 = vadd.f32 0.0, %v2017
  %v2019 = vpop.f32.mrf.mxu0
  %v2020 = vpop.f32.mrf.mxu0
  %v2021 = vadd.f32 0.0, %v2020
  %v2022 = vpop.f32.mrf.mxu0
  %2023 = vmatprep.mubr.bf16.mxu0 0
  %2024 = vmatmul.mubr.bf16.gmra.mxu0 %v1859
  %v2025 = vpop.f32.mrf.mxu0
  %v2026 = vadd.f32 0.0, %v2025
  %v2027 = vpop.f32.mrf.mxu0
  %v2028 = vpop.f32.mrf.mxu0
  %v2029 = vadd.f32 0.0, %v2028
  %v2030 = vpop.f32.mrf.mxu0
  %2031 = vmatprep.mubr.bf16.mxu0 0
  %2032 = vmatmul.mubr.bf16.gmra.mxu0 %v1861
  %v2033 = vpop.f32.mrf.mxu0
  %v2034 = vadd.f32 0.0, %v2033
  %v2035 = vpop.f32.mrf.mxu0
  %v2036 = vpop.f32.mrf.mxu0
  %v2037 = vadd.f32 0.0, %v2036
  %v2038 = vpop.f32.mrf.mxu0
  %2039 = vmatprep.mubr.bf16.mxu0 0
  %2040 = vmatmul.mubr.bf16.gmra.mxu0 %v1863
  %v2041 = vpop.f32.mrf.mxu0
  %v2042 = vadd.f32 0.0, %v2041
  %v2043 = vpop.f32.mrf.mxu0
  %v2044 = vpop.f32.mrf.mxu0
  %v2045 = vadd.f32 0.0, %v2044
  %v2046 = vpop.f32.mrf.mxu0
  %2047 = vmatprep.mubr.bf16.mxu0 0
  %2048 = vmatmul.mubr.bf16.gmra.mxu0 %v1865
  %v2049 = vpop.f32.mrf.mxu0
  %v2050 = vadd.f32 0.0, %v2049
  %v2051 = vpop.f32.mrf.mxu0
  %v2052 = vpop.f32.mrf.mxu0
  %v2053 = vadd.f32 0.0, %v2052
  %v2054 = vpop.f32.mrf.mxu0
  %2055 = vmatprep.mubr.bf16.mxu0 0
  %2056 = vmatmul.mubr.bf16.gmra.mxu0 %v1864
  %v2057 = vpop.f32.mrf.mxu0
  %v2058 = vadd.f32 0.0, %v2057
  %v2059 = vpop.f32.mrf.mxu0
  %v2060 = vpop.f32.mrf.mxu0
  %v2061 = vpop.f32.mrf.mxu0
  %2062 = vdwg.mxu0
  %v2063 = vadd.f32 %v1797, %v1962
  %v2064 = vadd.f32 %v1798, %v1965
  %v2065 = vadd.f32 %v1799, %v1970
  %v2066 = vadd.f32 %v1800, %v1973
  %v2067 = vadd.f32 %v1801, %v1978
  %v2068 = vadd.f32 %v1802, %v1981
  %v2069 = vadd.f32 %v1803, %v1986
  %v2070 = vadd.f32 %v1804, %v1989
  %v2071 = vadd.f32 %v1805, %v1994
  %v2072 = vadd.f32 %v1806, %v1997
  %v2073 = vadd.f32 %v1807, %v2002
  %v2074 = vadd.f32 %v1808, %v2005
  %v2075 = vadd.f32 %v1809, %v2010
  %v2076 = vadd.f32 %v1810, %v2013
  %v2077 = vadd.f32 %v1811, %v2018
  %v2078 = vadd.f32 %v1812, %v2021
  %v2079 = vadd.f32 %v1813, %v2026
  %v2080 = vadd.f32 %v1814, %v2029
  %v2081 = vadd.f32 %v1815, %v2034
  %v2082 = vadd.f32 %v1816, %v2037
  %v2083 = vadd.f32 %v1817, %v2042
  %v2084 = vadd.f32 %v1818, %v2045
  %v2085 = vadd.f32 %v1819, %v2050
  %v2086 = vadd.f32 %v1820, %v2053
  %v2087 = vadd.f32 %v1821, %v2058
  %s2088 = scalar_lea.vmem %s3, 448
  %v2089 = vld [vmem:[%s2088] sm:$0xf]
  %v2090 = vld [vmem:[%s2088 + $0x4] sm:$0xf]
  %v2091 = vld [vmem:[%s2088 + $0x8] sm:$0xf]
  %v2092 = vld [vmem:[%s2088 + $0xc] sm:$0xf]
  %v2093 = vld [vmem:[%s2088 + $0x10] sm:$0xf]
  %v2094 = vld [vmem:[%s2088 + $0x14] sm:$0xf]
  %v2095 = vld [vmem:[%s2088 + $0x18] sm:$0xf]
  %v2096 = vld [vmem:[%s2088 + $0x1c] sm:$0xf]
  %v2097 = vld [vmem:[%s2088 + $0x20] sm:$0xf]
  %v2098 = vld [vmem:[%s2088 + $0x24] sm:$0xf]
  %v2099 = vld [vmem:[%s2088 + $0x28] sm:$0xf]
  %v2100 = vld [vmem:[%s2088 + $0x2c] sm:$0xf]
  %v2101 = vld [vmem:[%s2088 + $0x30] sm:$0xf]
  %v2102 = vld [vmem:[%s2088 + $0x34] sm:$0xf]
  %v2103 = vld [vmem:[%s2088 + $0x38] sm:$0xf]
  %v2104 = vld [vmem:[%s2088 + $0x3c] sm:$0xf]
  %vm2105 = vsmask.f32 5376
  %v2106 = vrot.slane %v161, 2
  %v2107 = vrot.slane %v157, 3
  %v2108 = vor.u32 %v2106, %v2107
  %v2109 = vrot.slane %v169, 2
  %v2110 = vrot.slane %v165, 3
  %v2111 = vor.u32 %v2109, %v2110
  %v2112 = vsel %vm2105, %v2108, %v2111
  %v2113 = vrot.slane %v177, 2
  %v2114 = vrot.slane %v173, 3
  %v2115 = vor.u32 %v2113, %v2114
  %v2116 = vsel %vm2105, %v2111, %v2115
  %v2117 = vrot.slane %v185, 2
  %v2118 = vrot.slane %v181, 3
  %v2119 = vor.u32 %v2117, %v2118
  %v2120 = vsel %vm2105, %v2115, %v2119
  %v2121 = vrot.slane %v193, 2
  %v2122 = vrot.slane %v189, 3
  %v2123 = vor.u32 %v2121, %v2122
  %v2124 = vsel %vm2105, %v2119, %v2123
  %v2125 = vrot.slane %v201, 2
  %v2126 = vrot.slane %v197, 3
  %v2127 = vor.u32 %v2125, %v2126
  %v2128 = vsel %vm2105, %v2123, %v2127
  %v2129 = vrot.slane %v209, 2
  %v2130 = vrot.slane %v205, 3
  %v2131 = vor.u32 %v2129, %v2130
  %v2132 = vsel %vm2105, %v2127, %v2131
  %v2133 = vrot.slane %v217, 2
  %v2134 = vrot.slane %v213, 3
  %v2135 = vor.u32 %v2133, %v2134
  %v2136 = vsel %vm2105, %v2131, %v2135
  %v2137 = vrot.slane %v225, 2
  %v2138 = vrot.slane %v221, 3
  %v2139 = vor.u32 %v2137, %v2138
  %v2140 = vsel %vm2105, %v2135, %v2139
  %v2141 = vrot.slane %v233, 2
  %v2142 = vrot.slane %v229, 3
  %v2143 = vor.u32 %v2141, %v2142
  %v2144 = vsel %vm2105, %v2139, %v2143
  %v2145 = vrot.slane %v241, 2
  %v2146 = vrot.slane %v237, 3
  %v2147 = vor.u32 %v2145, %v2146
  %v2148 = vsel %vm2105, %v2143, %v2147
  %v2149 = vrot.slane %v249, 2
  %v2150 = vrot.slane %v245, 3
  %v2151 = vor.u32 %v2149, %v2150
  %v2152 = vsel %vm2105, %v2147, %v2151
  %v2154 = vshrl.u32 %v1822, 16
  %v2156 = vrot.slane %v2154, 2
  %v2157 = vshll.u32 %v1822, 16
  %v2159 = vrot.slane %v2157, 3
  %v2160 = vor.u32 %v2156, %v2159
  %v2161 = vsel %vm2105, %v2151, %v2160
  %v2191 = vunpack.c.l.b16 %v2089
  %v2192 = vunpack.c.l.b16 %v2090
  %v2193 = vunpack.c.l.b16 %v2091
  %v2194 = vunpack.c.l.b16 %v2092
  %v2195 = vunpack.c.l.b16 %v2093
  %v2196 = vunpack.c.l.b16 %v2094
  %v2197 = vunpack.c.l.b16 %v2095
  %v2198 = vunpack.c.l.b16 %v2096
  %v2199 = vunpack.c.l.b16 %v2097
  %v2200 = vunpack.c.l.b16 %v2098
  %v2201 = vunpack.c.l.b16 %v2099
  %v2202 = vunpack.c.l.b16 %v2100
  %v2203 = vunpack.c.l.b16 %v2101
  %v2204 = vunpack.c.l.b16 %v2102
  %v2205 = vunpack.c.l.b16 %v2103
  %v2206 = vunpack.c.l.b16 %v2104
  %v2207 = vpack.c.b16 %v2192, %v2191
  %v2208 = vpack.c.b16 %v2194, %v2193
  %v2209 = vpack.c.b16 %v2196, %v2195
  %v2210 = vpack.c.b16 %v2198, %v2197
  %v2211 = vpack.c.b16 %v2200, %v2199
  %v2212 = vpack.c.b16 %v2202, %v2201
  %v2213 = vpack.c.b16 %v2204, %v2203
  %v2214 = vpack.c.b16 %v2206, %v2205
  %2223 = vmatprep.subr.bf16.mxu0 0
  %2224 = vmatpush1.bf16.msra.mxu0 %v2214
  %2225 = vmatprep.subr.bf16.mxu0 0
  %2226 = vmatpush1.bf16.msra.mxu0 %v2213
  %2227 = vmatprep.subr.bf16.mxu0 0
  %2228 = vmatpush1.bf16.msra.mxu0 %v2212
  %2229 = vmatprep.subr.bf16.mxu0 0
  %2230 = vmatpush1.bf16.msra.mxu0 %v2211
  %2231 = vmatprep.subr.bf16.mxu0 0
  %2232 = vmatpush1.bf16.msra.mxu0 %v2210
  %2233 = vmatprep.subr.bf16.mxu0 0
  %2234 = vmatpush1.bf16.msra.mxu0 %v2209
  %2235 = vmatprep.subr.bf16.mxu0 0
  %2236 = vmatpush1.bf16.msra.mxu0 %v2208
  %2237 = vmatprep.subr.bf16.mxu0 0
  %2238 = vmatpush1.bf16.msra.mxu0 %v2207
  %2239 = vmatprep.subr.bf16.mxu0 0
  %2240 = vmatpush2.bf16.msra.mxu0 0
  %2241 = vmatprep.subr.bf16.mxu0 0
  %2242 = vmatpush2.bf16.msra.mxu0 0
  %2243 = vmatprep.subr.bf16.mxu0 0
  %2244 = vmatpush2.bf16.msra.mxu0 0
  %2245 = vmatprep.subr.bf16.mxu0 0
  %2246 = vmatpush2.bf16.msra.mxu0 0
  %2247 = vmatprep.subr.bf16.mxu0 0
  %2248 = vmatpush2.bf16.msra.mxu0 0
  %2249 = vmatprep.subr.bf16.mxu0 0
  %2250 = vmatpush2.bf16.msra.mxu0 0
  %2251 = vmatprep.subr.bf16.mxu0 0
  %2252 = vmatpush2.bf16.msra.mxu0 0
  %2253 = vmatprep.subr.bf16.mxu0 0
  %2254 = vmatpush2.bf16.msra.mxu0 0
  %2255 = vmatprep.mubr.bf16.mxu0 0
  %2256 = vmatmul.mubr.bf16.gmra.mxu0 %v2112
  %v2257 = vpop.f32.mrf.mxu0
  %v2258 = vadd.f32 0.0, %v2257
  %v2259 = vpop.f32.mrf.mxu0
  %v2260 = vpop.f32.mrf.mxu0
  %v2261 = vadd.f32 0.0, %v2260
  %v2262 = vpop.f32.mrf.mxu0
  %2263 = vmatprep.mubr.bf16.mxu0 0
  %2264 = vmatmul.mubr.bf16.gmra.mxu0 %v2116
  %v2265 = vpop.f32.mrf.mxu0
  %v2266 = vadd.f32 0.0, %v2265
  %v2267 = vpop.f32.mrf.mxu0
  %v2268 = vpop.f32.mrf.mxu0
  %v2269 = vadd.f32 0.0, %v2268
  %v2270 = vpop.f32.mrf.mxu0
  %2271 = vmatprep.mubr.bf16.mxu0 0
  %2272 = vmatmul.mubr.bf16.gmra.mxu0 %v2120
  %v2273 = vpop.f32.mrf.mxu0
  %v2274 = vadd.f32 0.0, %v2273
  %v2275 = vpop.f32.mrf.mxu0
  %v2276 = vpop.f32.mrf.mxu0
  %v2277 = vadd.f32 0.0, %v2276
  %v2278 = vpop.f32.mrf.mxu0
  %2279 = vmatprep.mubr.bf16.mxu0 0
  %2280 = vmatmul.mubr.bf16.gmra.mxu0 %v2124
  %v2281 = vpop.f32.mrf.mxu0
  %v2282 = vadd.f32 0.0, %v2281
  %v2283 = vpop.f32.mrf.mxu0
  %v2284 = vpop.f32.mrf.mxu0
  %v2285 = vadd.f32 0.0, %v2284
  %v2286 = vpop.f32.mrf.mxu0
  %2287 = vmatprep.mubr.bf16.mxu0 0
  %2288 = vmatmul.mubr.bf16.gmra.mxu0 %v2128
  %v2289 = vpop.f32.mrf.mxu0
  %v2290 = vadd.f32 0.0, %v2289
  %v2291 = vpop.f32.mrf.mxu0
  %v2292 = vpop.f32.mrf.mxu0
  %v2293 = vadd.f32 0.0, %v2292
  %v2294 = vpop.f32.mrf.mxu0
  %2295 = vmatprep.mubr.bf16.mxu0 0
  %2296 = vmatmul.mubr.bf16.gmra.mxu0 %v2132
  %v2297 = vpop.f32.mrf.mxu0
  %v2298 = vadd.f32 0.0, %v2297
  %v2299 = vpop.f32.mrf.mxu0
  %v2300 = vpop.f32.mrf.mxu0
  %v2301 = vadd.f32 0.0, %v2300
  %v2302 = vpop.f32.mrf.mxu0
  %2303 = vmatprep.mubr.bf16.mxu0 0
  %2304 = vmatmul.mubr.bf16.gmra.mxu0 %v2136
  %v2305 = vpop.f32.mrf.mxu0
  %v2306 = vadd.f32 0.0, %v2305
  %v2307 = vpop.f32.mrf.mxu0
  %v2308 = vpop.f32.mrf.mxu0
  %v2309 = vadd.f32 0.0, %v2308
  %v2310 = vpop.f32.mrf.mxu0
  %2311 = vmatprep.mubr.bf16.mxu0 0
  %2312 = vmatmul.mubr.bf16.gmra.mxu0 %v2140
  %v2313 = vpop.f32.mrf.mxu0
  %v2314 = vadd.f32 0.0, %v2313
  %v2315 = vpop.f32.mrf.mxu0
  %v2316 = vpop.f32.mrf.mxu0
  %v2317 = vadd.f32 0.0, %v2316
  %v2318 = vpop.f32.mrf.mxu0
  %2319 = vmatprep.mubr.bf16.mxu0 0
  %2320 = vmatmul.mubr.bf16.gmra.mxu0 %v2144
  %v2321 = vpop.f32.mrf.mxu0
  %v2322 = vadd.f32 0.0, %v2321
  %v2323 = vpop.f32.mrf.mxu0
  %v2324 = vpop.f32.mrf.mxu0
  %v2325 = vadd.f32 0.0, %v2324
  %v2326 = vpop.f32.mrf.mxu0
  %2327 = vmatprep.mubr.bf16.mxu0 0
  %2328 = vmatmul.mubr.bf16.gmra.mxu0 %v2148
  %v2329 = vpop.f32.mrf.mxu0
  %v2330 = vadd.f32 0.0, %v2329
  %v2331 = vpop.f32.mrf.mxu0
  %v2332 = vpop.f32.mrf.mxu0
  %v2333 = vadd.f32 0.0, %v2332
  %v2334 = vpop.f32.mrf.mxu0
  %2335 = vmatprep.mubr.bf16.mxu0 0
  %2336 = vmatmul.mubr.bf16.gmra.mxu0 %v2152
  %v2337 = vpop.f32.mrf.mxu0
  %v2338 = vadd.f32 0.0, %v2337
  %v2339 = vpop.f32.mrf.mxu0
  %v2340 = vpop.f32.mrf.mxu0
  %v2341 = vadd.f32 0.0, %v2340
  %v2342 = vpop.f32.mrf.mxu0
  %2343 = vmatprep.mubr.bf16.mxu0 0
  %2344 = vmatmul.mubr.bf16.gmra.mxu0 %v2161
  %v2345 = vpop.f32.mrf.mxu0
  %v2346 = vadd.f32 0.0, %v2345
  %v2347 = vpop.f32.mrf.mxu0
  %v2348 = vpop.f32.mrf.mxu0
  %v2349 = vadd.f32 0.0, %v2348
  %v2350 = vpop.f32.mrf.mxu0
  %2351 = vmatprep.mubr.bf16.mxu0 0
  %2352 = vmatmul.mubr.bf16.gmra.mxu0 %v2160
  %v2353 = vpop.f32.mrf.mxu0
  %v2354 = vadd.f32 0.0, %v2353
  %v2355 = vpop.f32.mrf.mxu0
  %v2356 = vpop.f32.mrf.mxu0
  %v2357 = vpop.f32.mrf.mxu0
  %2358 = vdwg.mxu0
  %v2359 = vadd.f32 %v2063, %v2258
  %v2360 = vadd.f32 %v2064, %v2261
  %v2361 = vadd.f32 %v2065, %v2266
  %v2362 = vadd.f32 %v2066, %v2269
  %v2363 = vadd.f32 %v2067, %v2274
  %v2364 = vadd.f32 %v2068, %v2277
  %v2365 = vadd.f32 %v2069, %v2282
  %v2366 = vadd.f32 %v2070, %v2285
  %v2367 = vadd.f32 %v2071, %v2290
  %v2368 = vadd.f32 %v2072, %v2293
  %v2369 = vadd.f32 %v2073, %v2298
  %v2370 = vadd.f32 %v2074, %v2301
  %v2371 = vadd.f32 %v2075, %v2306
  %v2372 = vadd.f32 %v2076, %v2309
  %v2373 = vadd.f32 %v2077, %v2314
  %v2374 = vadd.f32 %v2078, %v2317
  %v2375 = vadd.f32 %v2079, %v2322
  %v2376 = vadd.f32 %v2080, %v2325
  %v2377 = vadd.f32 %v2081, %v2330
  %v2378 = vadd.f32 %v2082, %v2333
  %v2379 = vadd.f32 %v2083, %v2338
  %v2380 = vadd.f32 %v2084, %v2341
  %v2381 = vadd.f32 %v2085, %v2346
  %v2382 = vadd.f32 %v2086, %v2349
  %v2383 = vadd.f32 %v2087, %v2354
  %s2384 = scalar_lea.vmem %s3, 512
  %v2385 = vld [vmem:[%s2384] sm:$0xf]
  %v2386 = vld [vmem:[%s2384 + $0x4] sm:$0xf]
  %v2387 = vld [vmem:[%s2384 + $0x8] sm:$0xf]
  %v2388 = vld [vmem:[%s2384 + $0xc] sm:$0xf]
  %v2389 = vld [vmem:[%s2384 + $0x10] sm:$0xf]
  %v2390 = vld [vmem:[%s2384 + $0x14] sm:$0xf]
  %v2391 = vld [vmem:[%s2384 + $0x18] sm:$0xf]
  %v2392 = vld [vmem:[%s2384 + $0x1c] sm:$0xf]
  %v2393 = vld [vmem:[%s2384 + $0x20] sm:$0xf]
  %v2394 = vld [vmem:[%s2384 + $0x24] sm:$0xf]
  %v2395 = vld [vmem:[%s2384 + $0x28] sm:$0xf]
  %v2396 = vld [vmem:[%s2384 + $0x2c] sm:$0xf]
  %v2397 = vld [vmem:[%s2384 + $0x30] sm:$0xf]
  %v2398 = vld [vmem:[%s2384 + $0x34] sm:$0xf]
  %v2399 = vld [vmem:[%s2384 + $0x38] sm:$0xf]
  %v2400 = vld [vmem:[%s2384 + $0x3c] sm:$0xf]
  %vm2401 = vcmask 1044480
  %v2402 = vrot.slane %v102, 3
  %v2403 = vrot.slane %v103, 3
  %v2404 = vsel %vm2401, %v2402, %v2403
  %v2405 = vrot.slane %v104, 3
  %v2406 = vsel %vm2401, %v2403, %v2405
  %v2407 = vrot.slane %v105, 3
  %v2408 = vsel %vm2401, %v2405, %v2407
  %v2409 = vrot.slane %v106, 3
  %v2410 = vsel %vm2401, %v2407, %v2409
  %v2411 = vrot.slane %v107, 3
  %v2412 = vsel %vm2401, %v2409, %v2411
  %v2413 = vrot.slane %v108, 3
  %v2414 = vsel %vm2401, %v2411, %v2413
  %v2415 = vrot.slane %v109, 3
  %v2416 = vsel %vm2401, %v2413, %v2415
  %v2417 = vrot.slane %v110, 3
  %v2418 = vsel %vm2401, %v2415, %v2417
  %v2419 = vrot.slane %v111, 3
  %v2420 = vsel %vm2401, %v2417, %v2419
  %v2421 = vrot.slane %v112, 3
  %v2422 = vsel %vm2401, %v2419, %v2421
  %v2423 = vrot.slane %v130, 3
  %v2424 = vsel %vm2401, %v2421, %v2423
  %v2425 = vrot.slane %v1822, 3
  %v2426 = vsel %vm2401, %v2423, %v2425
  %v2456 = vunpack.c.l.b16 %v2385
  %v2457 = vunpack.c.l.b16 %v2386
  %v2458 = vunpack.c.l.b16 %v2387
  %v2459 = vunpack.c.l.b16 %v2388
  %v2460 = vunpack.c.l.b16 %v2389
  %v2461 = vunpack.c.l.b16 %v2390
  %v2462 = vunpack.c.l.b16 %v2391
  %v2463 = vunpack.c.l.b16 %v2392
  %v2464 = vunpack.c.l.b16 %v2393
  %v2465 = vunpack.c.l.b16 %v2394
  %v2466 = vunpack.c.l.b16 %v2395
  %v2467 = vunpack.c.l.b16 %v2396
  %v2468 = vunpack.c.l.b16 %v2397
  %v2469 = vunpack.c.l.b16 %v2398
  %v2470 = vunpack.c.l.b16 %v2399
  %v2471 = vunpack.c.l.b16 %v2400
  %v2472 = vpack.c.b16 %v2457, %v2456
  %v2473 = vpack.c.b16 %v2459, %v2458
  %v2474 = vpack.c.b16 %v2461, %v2460
  %v2475 = vpack.c.b16 %v2463, %v2462
  %v2476 = vpack.c.b16 %v2465, %v2464
  %v2477 = vpack.c.b16 %v2467, %v2466
  %v2478 = vpack.c.b16 %v2469, %v2468
  %v2479 = vpack.c.b16 %v2471, %v2470
  %2488 = vmatprep.subr.bf16.mxu0 0
  %2489 = vmatpush1.bf16.msra.mxu0 %v2479
  %2490 = vmatprep.subr.bf16.mxu0 0
  %2491 = vmatpush1.bf16.msra.mxu0 %v2478
  %2492 = vmatprep.subr.bf16.mxu0 0
  %2493 = vmatpush1.bf16.msra.mxu0 %v2477
  %2494 = vmatprep.subr.bf16.mxu0 0
  %2495 = vmatpush1.bf16.msra.mxu0 %v2476
  %2496 = vmatprep.subr.bf16.mxu0 0
  %2497 = vmatpush1.bf16.msra.mxu0 %v2475
  %2498 = vmatprep.subr.bf16.mxu0 0
  %2499 = vmatpush1.bf16.msra.mxu0 %v2474
  %2500 = vmatprep.subr.bf16.mxu0 0
  %2501 = vmatpush1.bf16.msra.mxu0 %v2473
  %2502 = vmatprep.subr.bf16.mxu0 0
  %2503 = vmatpush1.bf16.msra.mxu0 %v2472
  %2504 = vmatprep.subr.bf16.mxu0 0
  %2505 = vmatpush2.bf16.msra.mxu0 0
  %2506 = vmatprep.subr.bf16.mxu0 0
  %2507 = vmatpush2.bf16.msra.mxu0 0
  %2508 = vmatprep.subr.bf16.mxu0 0
  %2509 = vmatpush2.bf16.msra.mxu0 0
  %2510 = vmatprep.subr.bf16.mxu0 0
  %2511 = vmatpush2.bf16.msra.mxu0 0
  %2512 = vmatprep.subr.bf16.mxu0 0
  %2513 = vmatpush2.bf16.msra.mxu0 0
  %2514 = vmatprep.subr.bf16.mxu0 0
  %2515 = vmatpush2.bf16.msra.mxu0 0
  %2516 = vmatprep.subr.bf16.mxu0 0
  %2517 = vmatpush2.bf16.msra.mxu0 0
  %2518 = vmatprep.subr.bf16.mxu0 0
  %2519 = vmatpush2.bf16.msra.mxu0 0
  %2520 = vmatprep.mubr.bf16.mxu0 0
  %2521 = vmatmul.mubr.bf16.gmra.mxu0 %v2404
  %v2522 = vpop.f32.mrf.mxu0
  %v2523 = vadd.f32 0.0, %v2522
  %v2524 = vpop.f32.mrf.mxu0
  %v2525 = vpop.f32.mrf.mxu0
  %v2526 = vadd.f32 0.0, %v2525
  %v2527 = vpop.f32.mrf.mxu0
  %2528 = vmatprep.mubr.bf16.mxu0 0
  %2529 = vmatmul.mubr.bf16.gmra.mxu0 %v2406
  %v2530 = vpop.f32.mrf.mxu0
  %v2531 = vadd.f32 0.0, %v2530
  %v2532 = vpop.f32.mrf.mxu0
  %v2533 = vpop.f32.mrf.mxu0
  %v2534 = vadd.f32 0.0, %v2533
  %v2535 = vpop.f32.mrf.mxu0
  %2536 = vmatprep.mubr.bf16.mxu0 0
  %2537 = vmatmul.mubr.bf16.gmra.mxu0 %v2408
  %v2538 = vpop.f32.mrf.mxu0
  %v2539 = vadd.f32 0.0, %v2538
  %v2540 = vpop.f32.mrf.mxu0
  %v2541 = vpop.f32.mrf.mxu0
  %v2542 = vadd.f32 0.0, %v2541
  %v2543 = vpop.f32.mrf.mxu0
  %2544 = vmatprep.mubr.bf16.mxu0 0
  %2545 = vmatmul.mubr.bf16.gmra.mxu0 %v2410
  %v2546 = vpop.f32.mrf.mxu0
  %v2547 = vadd.f32 0.0, %v2546
  %v2548 = vpop.f32.mrf.mxu0
  %v2549 = vpop.f32.mrf.mxu0
  %v2550 = vadd.f32 0.0, %v2549
  %v2551 = vpop.f32.mrf.mxu0
  %2552 = vmatprep.mubr.bf16.mxu0 0
  %2553 = vmatmul.mubr.bf16.gmra.mxu0 %v2412
  %v2554 = vpop.f32.mrf.mxu0
  %v2555 = vadd.f32 0.0, %v2554
  %v2556 = vpop.f32.mrf.mxu0
  %v2557 = vpop.f32.mrf.mxu0
  %v2558 = vadd.f32 0.0, %v2557
  %v2559 = vpop.f32.mrf.mxu0
  %2560 = vmatprep.mubr.bf16.mxu0 0
  %2561 = vmatmul.mubr.bf16.gmra.mxu0 %v2414
  %v2562 = vpop.f32.mrf.mxu0
  %v2563 = vadd.f32 0.0, %v2562
  %v2564 = vpop.f32.mrf.mxu0
  %v2565 = vpop.f32.mrf.mxu0
  %v2566 = vadd.f32 0.0, %v2565
  %v2567 = vpop.f32.mrf.mxu0
  %2568 = vmatprep.mubr.bf16.mxu0 0
  %2569 = vmatmul.mubr.bf16.gmra.mxu0 %v2416
  %v2570 = vpop.f32.mrf.mxu0
  %v2571 = vadd.f32 0.0, %v2570
  %v2572 = vpop.f32.mrf.mxu0
  %v2573 = vpop.f32.mrf.mxu0
  %v2574 = vadd.f32 0.0, %v2573
  %v2575 = vpop.f32.mrf.mxu0
  %2576 = vmatprep.mubr.bf16.mxu0 0
  %2577 = vmatmul.mubr.bf16.gmra.mxu0 %v2418
  %v2578 = vpop.f32.mrf.mxu0
  %v2579 = vadd.f32 0.0, %v2578
  %v2580 = vpop.f32.mrf.mxu0
  %v2581 = vpop.f32.mrf.mxu0
  %v2582 = vadd.f32 0.0, %v2581
  %v2583 = vpop.f32.mrf.mxu0
  %2584 = vmatprep.mubr.bf16.mxu0 0
  %2585 = vmatmul.mubr.bf16.gmra.mxu0 %v2420
  %v2586 = vpop.f32.mrf.mxu0
  %v2587 = vadd.f32 0.0, %v2586
  %v2588 = vpop.f32.mrf.mxu0
  %v2589 = vpop.f32.mrf.mxu0
  %v2590 = vadd.f32 0.0, %v2589
  %v2591 = vpop.f32.mrf.mxu0
  %2592 = vmatprep.mubr.bf16.mxu0 0
  %2593 = vmatmul.mubr.bf16.gmra.mxu0 %v2422
  %v2594 = vpop.f32.mrf.mxu0
  %v2595 = vadd.f32 0.0, %v2594
  %v2596 = vpop.f32.mrf.mxu0
  %v2597 = vpop.f32.mrf.mxu0
  %v2598 = vadd.f32 0.0, %v2597
  %v2599 = vpop.f32.mrf.mxu0
  %2600 = vmatprep.mubr.bf16.mxu0 0
  %2601 = vmatmul.mubr.bf16.gmra.mxu0 %v2424
  %v2602 = vpop.f32.mrf.mxu0
  %v2603 = vadd.f32 0.0, %v2602
  %v2604 = vpop.f32.mrf.mxu0
  %v2605 = vpop.f32.mrf.mxu0
  %v2606 = vadd.f32 0.0, %v2605
  %v2607 = vpop.f32.mrf.mxu0
  %2608 = vmatprep.mubr.bf16.mxu0 0
  %2609 = vmatmul.mubr.bf16.gmra.mxu0 %v2426
  %v2610 = vpop.f32.mrf.mxu0
  %v2611 = vadd.f32 0.0, %v2610
  %v2612 = vpop.f32.mrf.mxu0
  %v2613 = vpop.f32.mrf.mxu0
  %v2614 = vadd.f32 0.0, %v2613
  %v2615 = vpop.f32.mrf.mxu0
  %2616 = vmatprep.mubr.bf16.mxu0 0
  %2617 = vmatmul.mubr.bf16.gmra.mxu0 %v2425
  %v2618 = vpop.f32.mrf.mxu0
  %v2619 = vadd.f32 0.0, %v2618
  %v2620 = vpop.f32.mrf.mxu0
  %v2621 = vpop.f32.mrf.mxu0
  %v2622 = vpop.f32.mrf.mxu0
  %2623 = vdwg.mxu0
  %v2624 = vadd.f32 %v2359, %v2523
  %v2625 = vadd.f32 %v2360, %v2526
  %v2626 = vadd.f32 %v2361, %v2531
  %v2627 = vadd.f32 %v2362, %v2534
  %v2628 = vadd.f32 %v2363, %v2539
  %v2629 = vadd.f32 %v2364, %v2542
  %v2630 = vadd.f32 %v2365, %v2547
  %v2631 = vadd.f32 %v2366, %v2550
  %v2632 = vadd.f32 %v2367, %v2555
  %v2633 = vadd.f32 %v2368, %v2558
  %v2634 = vadd.f32 %v2369, %v2563
  %v2635 = vadd.f32 %v2370, %v2566
  %v2636 = vadd.f32 %v2371, %v2571
  %v2637 = vadd.f32 %v2372, %v2574
  %v2638 = vadd.f32 %v2373, %v2579
  %v2639 = vadd.f32 %v2374, %v2582
  %v2640 = vadd.f32 %v2375, %v2587
  %v2641 = vadd.f32 %v2376, %v2590
  %v2642 = vadd.f32 %v2377, %v2595
  %v2643 = vadd.f32 %v2378, %v2598
  %v2644 = vadd.f32 %v2379, %v2603
  %v2645 = vadd.f32 %v2380, %v2606
  %v2646 = vadd.f32 %v2381, %v2611
  %v2647 = vadd.f32 %v2382, %v2614
  %v2648 = vadd.f32 %v2383, %v2619
  %v2649 = vld [vmem:[%s4] sm:$0x1]
  %v2651 = vlaneseq
  %v2652 = vshrl.u32 %v2651, 7
  %v2653 = vsub.s32 0, %v2652
  %v2654 = vrot.slane %v2649, %v2653
  %v2656 = vadd.f32 %v2624, %v2654
  %v2657 = vadd.f32 %v2625, %v2654
  %v2658 = vadd.f32 %v2626, %v2654
  %v2659 = vadd.f32 %v2627, %v2654
  %v2660 = vadd.f32 %v2628, %v2654
  %v2661 = vadd.f32 %v2629, %v2654
  %v2662 = vadd.f32 %v2630, %v2654
  %v2663 = vadd.f32 %v2631, %v2654
  %v2664 = vadd.f32 %v2632, %v2654
  %v2665 = vadd.f32 %v2633, %v2654
  %v2666 = vadd.f32 %v2634, %v2654
  %v2667 = vadd.f32 %v2635, %v2654
  %v2668 = vadd.f32 %v2636, %v2654
  %v2669 = vadd.f32 %v2637, %v2654
  %v2670 = vadd.f32 %v2638, %v2654
  %v2671 = vadd.f32 %v2639, %v2654
  %v2672 = vadd.f32 %v2640, %v2654
  %v2673 = vadd.f32 %v2641, %v2654
  %v2674 = vadd.f32 %v2642, %v2654
  %v2675 = vadd.f32 %v2643, %v2654
  %v2676 = vadd.f32 %v2644, %v2654
  %v2677 = vadd.f32 %v2645, %v2654
  %v2678 = vadd.f32 %v2646, %v2654
  %v2679 = vadd.f32 %v2647, %v2654
  %v2680 = vadd.f32 %v2648, %v2654
  %v2681 = vpack.c.bf16 %v2657, %v2656
  %v2682 = vpack.c.bf16 %v2659, %v2658
  %v2683 = vpack.c.bf16 %v2661, %v2660
  %v2684 = vpack.c.bf16 %v2663, %v2662
  %v2685 = vpack.c.bf16 %v2665, %v2664
  %v2686 = vpack.c.bf16 %v2667, %v2666
  %v2687 = vpack.c.bf16 %v2669, %v2668
  %v2688 = vpack.c.bf16 %v2671, %v2670
  %v2689 = vpack.c.bf16 %v2673, %v2672
  %v2690 = vpack.c.bf16 %v2675, %v2674
  %v2691 = vpack.c.bf16 %v2677, %v2676
  %v2692 = vpack.c.bf16 %v2679, %v2678
  %v2693 = vpack.c.bf16 %v2680, %v2680
  %v2707 = vunpack.c.l.b16 %v2681
  %v2708 = vunpack.c.h.b16 %v2681
  %v2709 = vunpack.c.l.b16 %v2682
  %v2710 = vunpack.c.h.b16 %v2682
  %v2711 = vunpack.c.l.b16 %v2683
  %v2712 = vunpack.c.h.b16 %v2683
  %v2713 = vunpack.c.l.b16 %v2684
  %v2714 = vunpack.c.h.b16 %v2684
  %v2715 = vunpack.c.l.b16 %v2685
  %v2716 = vunpack.c.h.b16 %v2685
  %v2717 = vunpack.c.l.b16 %v2686
  %v2718 = vunpack.c.h.b16 %v2686
  %v2719 = vunpack.c.l.b16 %v2687
  %v2720 = vunpack.c.h.b16 %v2687
  %v2721 = vunpack.c.l.b16 %v2688
  %v2722 = vunpack.c.h.b16 %v2688
  %v2723 = vunpack.c.l.b16 %v2689
  %v2724 = vunpack.c.h.b16 %v2689
  %v2725 = vunpack.c.l.b16 %v2690
  %v2726 = vunpack.c.h.b16 %v2690
  %v2727 = vunpack.c.l.b16 %v2691
  %v2728 = vunpack.c.h.b16 %v2691
  %v2729 = vunpack.c.l.b16 %v2692
  %v2730 = vunpack.c.h.b16 %v2692
  %v2731 = vunpack.c.l.b16 %v2693
  %v2732 = vpack.c.b16 %v2707, %v2707
  %v2733 = vpack.c.b16 %v2708, %v2708
  %v2734 = vpack.c.b16 %v2709, %v2709
  %v2735 = vpack.c.b16 %v2710, %v2710
  %v2736 = vpack.c.b16 %v2711, %v2711
  %v2737 = vpack.c.b16 %v2712, %v2712
  %v2738 = vpack.c.b16 %v2713, %v2713
  %v2739 = vpack.c.b16 %v2714, %v2714
  %v2740 = vpack.c.b16 %v2715, %v2715
  %v2741 = vpack.c.b16 %v2716, %v2716
  %v2742 = vpack.c.b16 %v2717, %v2717
  %v2743 = vpack.c.b16 %v2718, %v2718
  %v2744 = vpack.c.b16 %v2719, %v2719
  %v2745 = vpack.c.b16 %v2720, %v2720
  %v2746 = vpack.c.b16 %v2721, %v2721
  %v2747 = vpack.c.b16 %v2722, %v2722
  %v2748 = vpack.c.b16 %v2723, %v2723
  %v2749 = vpack.c.b16 %v2724, %v2724
  %v2750 = vpack.c.b16 %v2725, %v2725
  %v2751 = vpack.c.b16 %v2726, %v2726
  %v2752 = vpack.c.b16 %v2727, %v2727
  %v2753 = vpack.c.b16 %v2728, %v2728
  %v2754 = vpack.c.b16 %v2729, %v2729
  %v2755 = vpack.c.b16 %v2730, %v2730
  %v2756 = vpack.c.b16 %v2731, %v2731
  %2782 = vst [vmem:[%s5] sm:$0xf] %v2732
  %2783 = vst [vmem:[%s5 + $0x4] sm:$0xf] %v2733
  %2784 = vst [vmem:[%s5 + $0x8] sm:$0xf] %v2734
  %2785 = vst [vmem:[%s5 + $0xc] sm:$0xf] %v2735
  %2786 = vst [vmem:[%s5 + $0x10] sm:$0xf] %v2736
  %2787 = vst [vmem:[%s5 + $0x14] sm:$0xf] %v2737
  %2788 = vst [vmem:[%s5 + $0x18] sm:$0xf] %v2738
  %2789 = vst [vmem:[%s5 + $0x1c] sm:$0xf] %v2739
  %2790 = vst [vmem:[%s5 + $0x20] sm:$0xf] %v2740
  %2791 = vst [vmem:[%s5 + $0x24] sm:$0xf] %v2741
  %2792 = vst [vmem:[%s5 + $0x28] sm:$0xf] %v2742
  %2793 = vst [vmem:[%s5 + $0x2c] sm:$0xf] %v2743
  %2794 = vst [vmem:[%s5 + $0x30] sm:$0xf] %v2744
  %2795 = vst [vmem:[%s5 + $0x34] sm:$0xf] %v2745
  %2796 = vst [vmem:[%s5 + $0x38] sm:$0xf] %v2746
  %2797 = vst [vmem:[%s5 + $0x3c] sm:$0xf] %v2747
  %2798 = vst [vmem:[%s5 + $0x40] sm:$0xf] %v2748
  %2799 = vst [vmem:[%s5 + $0x44] sm:$0xf] %v2749
  %2800 = vst [vmem:[%s5 + $0x48] sm:$0xf] %v2750
  %2801 = vst [vmem:[%s5 + $0x4c] sm:$0xf] %v2751
  %2802 = vst [vmem:[%s5 + $0x50] sm:$0xf] %v2752
  %2803 = vst [vmem:[%s5 + $0x54] sm:$0xf] %v2753
  %2804 = vst [vmem:[%s5 + $0x58] sm:$0xf] %v2754
  %2805 = vst [vmem:[%s5 + $0x5c] sm:$0xf] %v2755
  %2806 = vst [vmem:[%s5 + $0x60] sm:$0xf] %v2756
  %v2807 = vld [vmem:[%s2] sm:$0xff]
  %v2808 = vld [vmem:[%s2 + $0x8] sm:$0xff]
  %v2809 = vld [vmem:[%s2 + $0x10] sm:$0xff]
  %v2810 = vld [vmem:[%s2 + $0x18] sm:$0xff]
  %v2811 = vld [vmem:[%s2 + $0x20] sm:$0xff]
  %v2812 = vld [vmem:[%s2 + $0x28] sm:$0xff]
  %v2813 = vld [vmem:[%s2 + $0x30] sm:$0xff]
  %v2814 = vld [vmem:[%s2 + $0x38] sm:$0xff]
  %v2815 = vld [vmem:[%s2 + $0x40] sm:$0xff]
  %v2816 = vld [vmem:[%s2 + $0x48] sm:$0xff]
  %v2817 = vld [vmem:[%s2 + $0x50] sm:$0xff]
  %v2818 = vld [vmem:[%s2 + $0x58] sm:$0xff]
  %v2819 = vld [vmem:[%s2 + $0x60] sm:$0xff]
  %v2820 = vld [vmem:[%s2 + $0x68] sm:$0xff]
  %v2821 = vld [vmem:[%s2 + $0x70] sm:$0xff]
  %v2822 = vld [vmem:[%s2 + $0x78] sm:$0xff]
  %v2823 = vld [vmem:[%s2 + $0x80] sm:$0xff]
  %v2824 = vld [vmem:[%s2 + $0x88] sm:$0xff]
  %v2825 = vld [vmem:[%s2 + $0x90] sm:$0xff]
  %v2826 = vld [vmem:[%s2 + $0x98] sm:$0xff]
  %v2827 = vld [vmem:[%s2 + $0xa0] sm:$0xff]
  %v2828 = vld [vmem:[%s2 + $0xa8] sm:$0xff]
  %v2829 = vld [vmem:[%s2 + $0xb0] sm:$0xff]
  %v2830 = vld [vmem:[%s2 + $0xb8] sm:$0xff]
  %v2831 = vld [vmem:[%s2 + $0xc0] sm:$0xff]
  %2833 = vset.pattern.permute.xlu0 0
  %2834 = vperm.xlu0 %2833, %v2807
  %v2835 = vpop.permute.xlu0 %2834
  %2838 = vset.pattern.permute.xlu0 0
  %2839 = vperm.xlu0 %2838, %v2808
  %v2840 = vpop.permute.xlu0 %2839
  %2843 = vset.pattern.permute.xlu0 0
  %2844 = vperm.xlu0 %2843, %v2809
  %v2845 = vpop.permute.xlu0 %2844
  %2848 = vset.pattern.permute.xlu0 0
  %2849 = vperm.xlu0 %2848, %v2810
  %v2850 = vpop.permute.xlu0 %2849
  %2853 = vset.pattern.permute.xlu0 0
  %2854 = vperm.xlu0 %2853, %v2811
  %v2855 = vpop.permute.xlu0 %2854
  %2858 = vset.pattern.permute.xlu0 0
  %2859 = vperm.xlu0 %2858, %v2812
  %v2860 = vpop.permute.xlu0 %2859
  %2863 = vset.pattern.permute.xlu0 0
  %2864 = vperm.xlu0 %2863, %v2813
  %v2865 = vpop.permute.xlu0 %2864
  %2868 = vset.pattern.permute.xlu0 0
  %2869 = vperm.xlu0 %2868, %v2814
  %v2870 = vpop.permute.xlu0 %2869
  %2873 = vset.pattern.permute.xlu0 0
  %2874 = vperm.xlu0 %2873, %v2815
  %v2875 = vpop.permute.xlu0 %2874
  %2878 = vset.pattern.permute.xlu0 0
  %2879 = vperm.xlu0 %2878, %v2816
  %v2880 = vpop.permute.xlu0 %2879
  %2883 = vset.pattern.permute.xlu0 0
  %2884 = vperm.xlu0 %2883, %v2817
  %v2885 = vpop.permute.xlu0 %2884
  %2888 = vset.pattern.permute.xlu0 0
  %2889 = vperm.xlu0 %2888, %v2818
  %v2890 = vpop.permute.xlu0 %2889
  %2893 = vset.pattern.permute.xlu0 0
  %2894 = vperm.xlu0 %2893, %v2819
  %v2895 = vpop.permute.xlu0 %2894
  %2898 = vset.pattern.permute.xlu0 0
  %2899 = vperm.xlu0 %2898, %v2820
  %v2900 = vpop.permute.xlu0 %2899
  %2903 = vset.pattern.permute.xlu0 0
  %2904 = vperm.xlu0 %2903, %v2821
  %v2905 = vpop.permute.xlu0 %2904
  %2908 = vset.pattern.permute.xlu0 0
  %2909 = vperm.xlu0 %2908, %v2822
  %v2910 = vpop.permute.xlu0 %2909
  %2913 = vset.pattern.permute.xlu0 0
  %2914 = vperm.xlu0 %2913, %v2823
  %v2915 = vpop.permute.xlu0 %2914
  %2918 = vset.pattern.permute.xlu0 0
  %2919 = vperm.xlu0 %2918, %v2824
  %v2920 = vpop.permute.xlu0 %2919
  %2923 = vset.pattern.permute.xlu0 0
  %2924 = vperm.xlu0 %2923, %v2825
  %v2925 = vpop.permute.xlu0 %2924
  %2928 = vset.pattern.permute.xlu0 0
  %2929 = vperm.xlu0 %2928, %v2826
  %v2930 = vpop.permute.xlu0 %2929
  %2933 = vset.pattern.permute.xlu0 0
  %2934 = vperm.xlu0 %2933, %v2827
  %v2935 = vpop.permute.xlu0 %2934
  %2938 = vset.pattern.permute.xlu0 0
  %2939 = vperm.xlu0 %2938, %v2828
  %v2940 = vpop.permute.xlu0 %2939
  %2943 = vset.pattern.permute.xlu0 0
  %2944 = vperm.xlu0 %2943, %v2829
  %v2945 = vpop.permute.xlu0 %2944
  %2948 = vset.pattern.permute.xlu0 0
  %2949 = vperm.xlu0 %2948, %v2830
  %v2950 = vpop.permute.xlu0 %2949
  %2953 = vset.pattern.permute.xlu0 0
  %2954 = vperm.xlu0 %2953, %v2831
  %v2955 = vpop.permute.xlu0 %2954
  %v2957 = vmul.f32 %v2656, %v2835
  %v2958 = vmul.f32 %v2657, %v2840
  %v2959 = vmul.f32 %v2658, %v2845
  %v2960 = vmul.f32 %v2659, %v2850
  %v2961 = vmul.f32 %v2660, %v2855
  %v2962 = vmul.f32 %v2661, %v2860
  %v2963 = vmul.f32 %v2662, %v2865
  %v2964 = vmul.f32 %v2663, %v2870
  %v2965 = vmul.f32 %v2664, %v2875
  %v2966 = vmul.f32 %v2665, %v2880
  %v2967 = vmul.f32 %v2666, %v2885
  %v2968 = vmul.f32 %v2667, %v2890
  %v2969 = vmul.f32 %v2668, %v2895
  %v2970 = vmul.f32 %v2669, %v2900
  %v2971 = vmul.f32 %v2670, %v2905
  %v2972 = vmul.f32 %v2671, %v2910
  %v2973 = vmul.f32 %v2672, %v2915
  %v2974 = vmul.f32 %v2673, %v2920
  %v2975 = vmul.f32 %v2674, %v2925
  %v2976 = vmul.f32 %v2675, %v2930
  %v2977 = vmul.f32 %v2676, %v2935
  %v2978 = vmul.f32 %v2677, %v2940
  %v2979 = vmul.f32 %v2678, %v2945
  %v2980 = vmul.f32 %v2679, %v2950
  %v2981 = vmul.f32 %v2680, %v2955
  %v2982 = vadd.f32 %v2957, %v2958
  %v2983 = vadd.f32 %v2982, %v2959
  %v2984 = vadd.f32 %v2983, %v2960
  %v2985 = vadd.f32 %v2984, %v2961
  %v2986 = vadd.f32 %v2985, %v2962
  %v2987 = vadd.f32 %v2986, %v2963
  %v2988 = vadd.f32 %v2987, %v2964
  %v2989 = vadd.f32 %v2988, %v2965
  %v2990 = vadd.f32 %v2989, %v2966
  %v2991 = vadd.f32 %v2990, %v2967
  %v2992 = vadd.f32 %v2991, %v2968
  %v2993 = vadd.f32 %v2992, %v2969
  %v2994 = vadd.f32 %v2993, %v2970
  %v2995 = vadd.f32 %v2994, %v2971
  %v2996 = vadd.f32 %v2995, %v2972
  %v2997 = vadd.f32 %v2996, %v2973
  %v2998 = vadd.f32 %v2997, %v2974
  %v2999 = vadd.f32 %v2998, %v2975
  %v3000 = vadd.f32 %v2999, %v2976
  %v3001 = vadd.f32 %v3000, %v2977
  %v3002 = vadd.f32 %v3001, %v2978
  %v3003 = vadd.f32 %v3002, %v2979
  %v3004 = vadd.f32 %v3003, %v2980
  %v3005 = vadd.f32 %v3004, %v2981
  %v3006 = vrot.slane %v3005, 4
  %v3007 = vadd.f32 %v3005, %v3006
  %v3008 = vrot.slane %v3007, 2
  %v3009 = vadd.f32 %v3007, %v3008
  %v3010 = vrot.slane %v3009, 1
  %v3011 = vadd.f32 %v3009, %v3010
  %v3012 = vmul.f32 %v2957, %v2656
  %v3013 = vmul.f32 %v2958, %v2657
  %v3014 = vmul.f32 %v2959, %v2658
  %v3015 = vmul.f32 %v2960, %v2659
  %v3016 = vmul.f32 %v2961, %v2660
  %v3017 = vmul.f32 %v2962, %v2661
  %v3018 = vmul.f32 %v2963, %v2662
  %v3019 = vmul.f32 %v2964, %v2663
  %v3020 = vmul.f32 %v2965, %v2664
  %v3021 = vmul.f32 %v2966, %v2665
  %v3022 = vmul.f32 %v2967, %v2666
  %v3023 = vmul.f32 %v2968, %v2667
  %v3024 = vmul.f32 %v2969, %v2668
  %v3025 = vmul.f32 %v2970, %v2669
  %v3026 = vmul.f32 %v2971, %v2670
  %v3027 = vmul.f32 %v2972, %v2671
  %v3028 = vmul.f32 %v2973, %v2672
  %v3029 = vmul.f32 %v2974, %v2673
  %v3030 = vmul.f32 %v2975, %v2674
  %v3031 = vmul.f32 %v2976, %v2675
  %v3032 = vmul.f32 %v2977, %v2676
  %v3033 = vmul.f32 %v2978, %v2677
  %v3034 = vmul.f32 %v2979, %v2678
  %v3035 = vmul.f32 %v2980, %v2679
  %v3036 = vmul.f32 %v2981, %v2680
  %v3037 = vadd.f32 %v3012, %v3013
  %v3038 = vadd.f32 %v3037, %v3014
  %v3039 = vadd.f32 %v3038, %v3015
  %v3040 = vadd.f32 %v3039, %v3016
  %v3041 = vadd.f32 %v3040, %v3017
  %v3042 = vadd.f32 %v3041, %v3018
  %v3043 = vadd.f32 %v3042, %v3019
  %v3044 = vadd.f32 %v3043, %v3020
  %v3045 = vadd.f32 %v3044, %v3021
  %v3046 = vadd.f32 %v3045, %v3022
  %v3047 = vadd.f32 %v3046, %v3023
  %v3048 = vadd.f32 %v3047, %v3024
  %v3049 = vadd.f32 %v3048, %v3025
  %v3050 = vadd.f32 %v3049, %v3026
  %v3051 = vadd.f32 %v3050, %v3027
  %v3052 = vadd.f32 %v3051, %v3028
  %v3053 = vadd.f32 %v3052, %v3029
  %v3054 = vadd.f32 %v3053, %v3030
  %v3055 = vadd.f32 %v3054, %v3031
  %v3056 = vadd.f32 %v3055, %v3032
  %v3057 = vadd.f32 %v3056, %v3033
  %v3058 = vadd.f32 %v3057, %v3034
  %v3059 = vadd.f32 %v3058, %v3035
  %v3060 = vadd.f32 %v3059, %v3036
  %v3061 = vrot.slane %v3060, 4
  %v3062 = vadd.f32 %v3060, %v3061
  %v3063 = vrot.slane %v3062, 2
  %v3064 = vadd.f32 %v3062, %v3063
  %v3065 = vrot.slane %v3064, 1
  %v3066 = vadd.f32 %v3064, %v3065
  %vm3067 = vcmask 1040384
  %v3068 = vsel %vm3067, %v3011, %v3066
  %3069 = vst [vmem:[%s6] sm:$0x3] %v3068
  // Predicated region
  $region22: #{res_block_forward.4} parent=0 // pred_check
    _
  $region23: #{res_block_forward.4} parent=0 // pred_check_branch
    %3071 = sbr.rel (0) target = $region25
  $region24: #{res_block_forward.4} parent=0 // pred_region
    _
  $region25: #{res_block_forward.4} parent=0 // pred_fallthru
    _
  // Predicated region
  $region26: #{res_block_forward.4} parent=0 // pred_check
    _
  $region27: #{res_block_forward.4} parent=0 // pred_check_branch
    %3073 = sbr.rel (0) target = $region29
  $region28: #{res_block_forward.4} parent=0 // pred_region
    _
  $region29: #{res_block_forward.4} parent=0 // pred_fallthru
    _
  // Predicated region
  $region30: #{res_block_forward.4} parent=0 // pred_check
    _
  $region31: #{res_block_forward.4} parent=0 // pred_check_branch
    %3075 = sbr.rel (0) target = $region33
  $region32: #{res_block_forward.4} parent=0 // pred_region
    _
  $region33: #{res_block_forward.4} parent=0 // pred_fallthru
    _
  // Predicated region
  $region34: #{res_block_forward.4} parent=0 // pred_check
    _
  $region35: #{res_block_forward.4} parent=0 // pred_check_branch
    %3077 = sbr.rel (0) target = $region37
  $region36: #{res_block_forward.4} parent=0 // pred_region
    _
  $region37: #{res_block_forward.4} parent=0 // pred_fallthru
    _

</llo_original>
